<compile_context>
chip_gen: v5e
topology: v5e:2x2
jax: 0.10.0
libtpu: 0.0.40
codegen_flags: <defaults>
</compile_context>

<pallas_src>
import jax
import jax.numpy as jnp
from jax.experimental import pallas as pl
from jax.experimental.pallas import tpu as pltpu

EPS = 1e-5          # torch.nn.InstanceNorm2d default eps
NEG_SLOPE = 0.01    # F.leaky_relu default negative_slope
LANES = 128


def _round_up(x, m):
    return ((x + m - 1) // m) * m


def _make_kernel(H, W, Cin, Cout, Cp, stride, norm_shortcut):
    Ho = (H - 1) // stride + 1
    Wo = (W - 1) // stride + 1
    P = Ho * Wo
    sH = stride * (Ho - 1) + 1      # strided-window extent (padded coords)
    sW = stride * (Wo - 1) + 1
    inv_P = 1.0 / P

    def inorm(y):  # y: (P, C) — per-channel norm over spatial positions
        # single-pass statistics: var = E[x^2] - mean^2
        s1 = jnp.sum(y, axis=0, keepdims=True)
        s2 = jnp.sum(y * y, axis=0, keepdims=True)
        mu = s1 * inv_P
        var = s2 * inv_P - mu * mu
        return (y - mu) * jax.lax.rsqrt(var + EPS)

    def lrelu(y):
        return jnp.where(y > 0, y, NEG_SLOPE * y)

    def kernel(xp_ref, w1_ref, w2_ref, ws_ref, o_ref, p1_ref, p2_ref):
        xp = xp_ref[0]                            # (H+2, W+2, Cin), zero-padded

        # ---- conv1: im2col patches -> ONE (P, 9*Cin) @ (9*Cin, Cout) matmul ----
        # (for stride==2 a row de-interleave would avoid strided sublane slices;
        #  this demo only exercises stride==1)
        for kh in range(3):
            for kw in range(3):
                t = kh * 3 + kw
                p1_ref[:, :, t * Cin:(t + 1) * Cin] = \
                    xp[kh:kh + sH:stride, kw:kw + sW:stride, :]
        acc1 = jnp.dot(p1_ref[...].reshape(P, 9 * Cin), w1_ref[...],
                       preferred_element_type=jnp.float32)          # (P, Cout)
        y1 = lrelu(inorm(acc1)).reshape(Ho, Wo, Cout)

        # ---- conv2: padded taps assembled directly into the im2col scratch ----
        # (replaces the old zero-padded VMEM round-trip buffer)
        p2_ref[...] = jnp.zeros((Ho, Wo, 9 * Cout), jnp.float32)
        for kh in range(3):
            for kw in range(3):
                t = kh * 3 + kw
                dh, dw = kh - 1, kw - 1
                h0, w0 = max(0, -dh), max(0, -dw)
                sh, sw = max(0, dh), max(0, dw)
                nh, nw = Ho - abs(dh), Wo - abs(dw)
                p2_ref[h0:h0 + nh, w0:w0 + nw, t * Cout:(t + 1) * Cout] = \
                    y1[sh:sh + nh, sw:sw + nw, :]
        acc2 = jnp.dot(p2_ref[...].reshape(P, 9 * Cout), w2_ref[...],
                       preferred_element_type=jnp.float32)          # (P, Cp)
        y2 = inorm(acc2)

        # ---- shortcut (ws_ref is either the padded 1x1 weight or a padded I) ----
        xs = xp[1:1 + sH:stride, 1:1 + sW:stride, :].reshape(P, Cin)
        sc = jnp.dot(xs, ws_ref[...], preferred_element_type=jnp.float32)
        if norm_shortcut:
            sc = inorm(sc)

        # padded channels (>= Cout) are exactly zero all the way through
        out = lrelu(y2 + sc)                                        # (P, Cp)

        # ---- lane-dense store: (Cout, Ho*Wo) puts Ho*Wo (=256 here) on lanes ----
        # native full-tile (P, Cp) transpose, then drop the zero pad channels
        o_ref[0] = jnp.transpose(out)[0:Cout, :]

    return kernel


def residual_block(x_nhwc, w1_hwio, w2_hwio, ws_io=None, stride=1):
    """x_nhwc: (N,H,W,Cin) f32; w1: (3,3,Cin,Cout) HWIO; w2: (3,3,Cout,Cout) HWIO;
    ws_io: (Cin,Cout) 1x1-projection weight, or None for the identity shortcut.
    Returns NHWC output (N, Ho, Wo, Cout)."""
    N, H, W, Cin = x_nhwc.shape
    Cout = w1_hwio.shape[-1]
    use_proj = ws_io is not None
    if not use_proj and (stride != 1 or Cin != Cout):
        raise ValueError("identity shortcut requires stride == 1 and Cin == Cout")
    Ho = (H - 1) // stride + 1
    Wo = (W - 1) // stride + 1
    P = Ho * Wo
    Cp = _round_up(Cout, LANES)     # lane-padded channel count for the final stage

    # glue (outside the kernel, plain XLA): zero-pad the image for pad=1 convs and
    # flatten / lane-pad the conv weights into im2col contraction layout.
    xp = jnp.pad(x_nhwc, ((0, 0), (1, 1), (1, 1), (0, 0)))
    w1 = w1_hwio.reshape(9 * Cin, Cout)                              # (kh,kw,ci) x co
    w2 = jnp.pad(w2_hwio.reshape(9 * Cout, Cout), ((0, 0), (0, Cp - Cout)))
    if use_proj:
        ws = jnp.pad(ws_io, ((0, 0), (0, Cp - Cout)))
    else:
        ws = jnp.eye(Cin, Cp, dtype=x_nhwc.dtype)                    # exact identity

    # NOTE: one whole image per grid step — fine for small feature maps.  For large
    # shapes (and v7x's 64 MiB VMEM / 2 TCs) add spatial-row + Cout tiling grid axes
    # and set vmem_limit_bytes; weights could also use pipeline_mode=pl.Buffered(1).
    out = pl.pallas_call(
        _make_kernel(H, W, Cin, Cout, Cp, stride, norm_shortcut=use_proj),
        out_shape=jax.ShapeDtypeStruct((N, Cout, P), jnp.float32),
        grid=(N,),
        in_specs=[
            pl.BlockSpec((1, H + 2, W + 2, Cin), lambda n: (n, 0, 0, 0)),
            pl.BlockSpec((9 * Cin, Cout), lambda n: (0, 0)),   # constant index_map
            pl.BlockSpec((9 * Cout, Cp), lambda n: (0, 0)),    # -> fetched once
            pl.BlockSpec((Cin, Cp), lambda n: (0, 0)),
        ],
        out_specs=pl.BlockSpec((1, Cout, P), lambda n: (n, 0, 0)),
        scratch_shapes=[
            pltpu.VMEM((Ho, Wo, 9 * Cin), jnp.float32),    # conv1 im2col patches
            pltpu.VMEM((Ho, Wo, 9 * Cout), jnp.float32),   # conv2 im2col patches
        ],
        compiler_params=pltpu.CompilerParams(dimension_semantics=("parallel",)),
    )(xp, w1, w2, ws)

    # layout plumbing back to NHWC happens outside the kernel (cheap in XLA)
    return out.reshape(N, Cout, Ho, Wo).transpose(0, 2, 3, 1)


# ---------------- pure-JAX reference (for correctness check) ----------------
def _ref_conv(x, w, stride, pad):
    return jax.lax.conv_general_dilated(
        x, w, (stride, stride), [(pad, pad), (pad, pad)],
        dimension_numbers=("NHWC", "HWIO", "NHWC"))


def _ref_inorm(y):
    mu = y.mean(axis=(1, 2), keepdims=True)
    var = ((y - mu) ** 2).mean(axis=(1, 2), keepdims=True)
    return (y - mu) / jnp.sqrt(var + EPS)


def _ref_lrelu(y):
    return jnp.where(y > 0, y, NEG_SLOPE * y)


def ref_residual_block(x, w1, w2, ws_hwio, stride, use_proj):
    out = _ref_lrelu(_ref_inorm(_ref_conv(x, w1, stride, 1)))
    out = _ref_inorm(_ref_conv(out, w2, 1, 1))
    sc = _ref_inorm(_ref_conv(x, ws_hwio, stride, 0)) if use_proj else x
    return _ref_lrelu(out + sc)


if __name__ == "__main__":
    # Small shapes: batch=2, in_channels=4, out_channels=8, spatial=16, stride=1
    # (in != out, so the projection shortcut path is exercised, like PyTorch).
    N, Cin, H, W = 2, 4, 16, 16
    Cout, stride = 8, 1

    key = jax.random.PRNGKey(0)
    k1, k2, k3, k4 = jax.random.split(key, 4)
    x_nchw = jax.random.normal(k1, (N, Cin, H, W), jnp.float32)
    w1 = jax.random.normal(k2, (3, 3, Cin, Cout), jnp.float32) * 0.2   # HWIO
    w2 = jax.random.normal(k3, (3, 3, Cout, Cout), jnp.float32) * 0.2  # HWIO
    ws = jax.random.normal(k4, (1, 1, Cin, Cout), jnp.float32) * 0.2   # HWIO 1x1

    x_nhwc = jnp.transpose(x_nchw, (0, 2, 3, 1))  # NCHW -> NHWC

    out = residual_block(x_nhwc, w1, w2, ws.reshape(Cin, Cout), stride=stride)
    out = jax.block_until_ready(out)

    ref = ref_residual_block(x_nhwc, w1, w2, ws, stride, use_proj=True)
    assert out.shape == (N, H, W, Cout), out.shape
    err = jnp.max(jnp.abs(out - ref))
    assert jnp.allclose(out, ref, atol=2e-4, rtol=2e-4), f"max err {err}"

    print("KERNEL_OK")
</pallas_src>

<mosaic_0001>
module attributes {stable_mosaic.version = 11 : i64} {
  func.func @kernel(%arg0: i32, %arg1: memref<1x18x18x4xf32, #tpu.memory_space<vmem>>, %arg2: memref<36x8xf32, #tpu.memory_space<vmem>>, %arg3: memref<72x128xf32, #tpu.memory_space<vmem>>, %arg4: memref<4x128xf32, #tpu.memory_space<vmem>>, %arg5: memref<1x8x256xf32, #tpu.memory_space<vmem>>, %arg6: memref<16x16x36xf32, #tpu.memory_space<vmem>>, %arg7: memref<16x16x72xf32, #tpu.memory_space<vmem>>) attributes {dimension_semantics = [#tpu.dimension_semantics<parallel>], iteration_bounds = array<i64: 2>, scalar_prefetch = 0 : i64, scratch_operands = 2 : i64, tpu.core_type = #tpu.core_type<tc>, window_params = [{transform_indices = @transform_0, window_bounds = array<i64: 1, 18, 18, 4>}, {pipeline_mode = #tpu.pipeline_mode<synchronous>, transform_indices = @transform_1, window_bounds = array<i64: 36, 8>}, {pipeline_mode = #tpu.pipeline_mode<synchronous>, transform_indices = @transform_2, window_bounds = array<i64: 72, 128>}, {pipeline_mode = #tpu.pipeline_mode<synchronous>, transform_indices = @transform_3, window_bounds = array<i64: 4, 128>}, {transform_indices = @transform_4, window_bounds = array<i64: 1, 8, 256>}]} {
    %c0 = arith.constant 0 : index
    %c0_0 = arith.constant 0 : index
    %c0_1 = arith.constant 0 : index
    %c0_2 = arith.constant 0 : index
    %0 = vector.load %arg1[%c0, %c0_0, %c0_1, %c0_2] : memref<1x18x18x4xf32, #tpu.memory_space<vmem>>, vector<1x18x18x4xf32>
    %1 = vector.shape_cast %0 : vector<1x18x18x4xf32> to vector<18x18x4xf32>
    %2 = vector.extract_strided_slice %1 {offsets = [0, 0, 0], sizes = [16, 16, 4], strides = [1, 1, 1]} : vector<18x18x4xf32> to vector<16x16x4xf32>
    %c0_3 = arith.constant 0 : index
    %c0_4 = arith.constant 0 : index
    %c0_5 = arith.constant 0 : index
    %3 = vector.load %arg6[%c0_3, %c0_4, %c0_5] : memref<16x16x36xf32, #tpu.memory_space<vmem>>, vector<16x16x4xf32>
    tpu.vector_store %arg6[%c0_3, %c0_4, %c0_5], %2 {strides = array<i32>} : memref<16x16x36xf32, #tpu.memory_space<vmem>>, vector<16x16x4xf32>,
    %4 = vector.extract_strided_slice %1 {offsets = [0, 1, 0], sizes = [16, 16, 4], strides = [1, 1, 1]} : vector<18x18x4xf32> to vector<16x16x4xf32>
    %c0_6 = arith.constant 0 : index
    %c0_7 = arith.constant 0 : index
    %c4 = arith.constant 4 : index
    %5 = vector.load %arg6[%c0_6, %c0_7, %c4] : memref<16x16x36xf32, #tpu.memory_space<vmem>>, vector<16x16x4xf32>
    tpu.vector_store %arg6[%c0_6, %c0_7, %c4], %4 {strides = array<i32>} : memref<16x16x36xf32, #tpu.memory_space<vmem>>, vector<16x16x4xf32>,
    %6 = vector.extract_strided_slice %1 {offsets = [0, 2, 0], sizes = [16, 16, 4], strides = [1, 1, 1]} : vector<18x18x4xf32> to vector<16x16x4xf32>
    %c0_8 = arith.constant 0 : index
    %c0_9 = arith.constant 0 : index
    %c8 = arith.constant 8 : index
    %7 = vector.load %arg6[%c0_8, %c0_9, %c8] : memref<16x16x36xf32, #tpu.memory_space<vmem>>, vector<16x16x4xf32>
    tpu.vector_store %arg6[%c0_8, %c0_9, %c8], %6 {strides = array<i32>} : memref<16x16x36xf32, #tpu.memory_space<vmem>>, vector<16x16x4xf32>,
    %8 = vector.extract_strided_slice %1 {offsets = [1, 0, 0], sizes = [16, 16, 4], strides = [1, 1, 1]} : vector<18x18x4xf32> to vector<16x16x4xf32>
    %c0_10 = arith.constant 0 : index
    %c0_11 = arith.constant 0 : index
    %c12 = arith.constant 12 : index
    %9 = vector.load %arg6[%c0_10, %c0_11, %c12] : memref<16x16x36xf32, #tpu.memory_space<vmem>>, vector<16x16x4xf32>
    tpu.vector_store %arg6[%c0_10, %c0_11, %c12], %8 {strides = array<i32>} : memref<16x16x36xf32, #tpu.memory_space<vmem>>, vector<16x16x4xf32>,
    %10 = vector.extract_strided_slice %1 {offsets = [1, 1, 0], sizes = [16, 16, 4], strides = [1, 1, 1]} : vector<18x18x4xf32> to vector<16x16x4xf32>
    %c0_12 = arith.constant 0 : index
    %c0_13 = arith.constant 0 : index
    %c16 = arith.constant 16 : index
    %11 = vector.load %arg6[%c0_12, %c0_13, %c16] : memref<16x16x36xf32, #tpu.memory_space<vmem>>, vector<16x16x4xf32>
    tpu.vector_store %arg6[%c0_12, %c0_13, %c16], %10 {strides = array<i32>} : memref<16x16x36xf32, #tpu.memory_space<vmem>>, vector<16x16x4xf32>,
    %12 = vector.extract_strided_slice %1 {offsets = [1, 2, 0], sizes = [16, 16, 4], strides = [1, 1, 1]} : vector<18x18x4xf32> to vector<16x16x4xf32>
    %c0_14 = arith.constant 0 : index
    %c0_15 = arith.constant 0 : index
    %c20 = arith.constant 20 : index
    %13 = vector.load %arg6[%c0_14, %c0_15, %c20] : memref<16x16x36xf32, #tpu.memory_space<vmem>>, vector<16x16x4xf32>
    tpu.vector_store %arg6[%c0_14, %c0_15, %c20], %12 {strides = array<i32>} : memref<16x16x36xf32, #tpu.memory_space<vmem>>, vector<16x16x4xf32>,
    %14 = vector.extract_strided_slice %1 {offsets = [2, 0, 0], sizes = [16, 16, 4], strides = [1, 1, 1]} : vector<18x18x4xf32> to vector<16x16x4xf32>
    %c0_16 = arith.constant 0 : index
    %c0_17 = arith.constant 0 : index
    %c24 = arith.constant 24 : index
    %15 = vector.load %arg6[%c0_16, %c0_17, %c24] : memref<16x16x36xf32, #tpu.memory_space<vmem>>, vector<16x16x4xf32>
    tpu.vector_store %arg6[%c0_16, %c0_17, %c24], %14 {strides = array<i32>} : memref<16x16x36xf32, #tpu.memory_space<vmem>>, vector<16x16x4xf32>,
    %16 = vector.extract_strided_slice %1 {offsets = [2, 1, 0], sizes = [16, 16, 4], strides = [1, 1, 1]} : vector<18x18x4xf32> to vector<16x16x4xf32>
    %c0_18 = arith.constant 0 : index
    %c0_19 = arith.constant 0 : index
    %c28 = arith.constant 28 : index
    %17 = vector.load %arg6[%c0_18, %c0_19, %c28] : memref<16x16x36xf32, #tpu.memory_space<vmem>>, vector<16x16x4xf32>
    tpu.vector_store %arg6[%c0_18, %c0_19, %c28], %16 {strides = array<i32>} : memref<16x16x36xf32, #tpu.memory_space<vmem>>, vector<16x16x4xf32>,
    %18 = vector.extract_strided_slice %1 {offsets = [2, 2, 0], sizes = [16, 16, 4], strides = [1, 1, 1]} : vector<18x18x4xf32> to vector<16x16x4xf32>
    %c0_20 = arith.constant 0 : index
    %c0_21 = arith.constant 0 : index
    %c32 = arith.constant 32 : index
    %19 = vector.load %arg6[%c0_20, %c0_21, %c32] : memref<16x16x36xf32, #tpu.memory_space<vmem>>, vector<16x16x4xf32>
    tpu.vector_store %arg6[%c0_20, %c0_21, %c32], %18 {strides = array<i32>} : memref<16x16x36xf32, #tpu.memory_space<vmem>>, vector<16x16x4xf32>,
    %c0_22 = arith.constant 0 : index
    %c0_23 = arith.constant 0 : index
    %c0_24 = arith.constant 0 : index
    %20 = vector.load %arg6[%c0_22, %c0_23, %c0_24] : memref<16x16x36xf32, #tpu.memory_space<vmem>>, vector<16x16x36xf32>
    %21 = vector.shape_cast %20 : vector<16x16x36xf32> to vector<256x36xf32>
    %c0_25 = arith.constant 0 : index
    %c0_26 = arith.constant 0 : index
    %22 = vector.load %arg2[%c0_25, %c0_26] : memref<36x8xf32, #tpu.memory_space<vmem>>, vector<36x8xf32>
    %cst = arith.constant dense<0.000000e+00> : vector<256x8xf32>
    %23 = tpu.matmul %21, %22, %cst {dimension_numbers = #tpu.dot_dimension_numbers<[1], [0], [0], [1], [0, 0, 1, 1], [], []>} : vector<256x36xf32>, vector<36x8xf32>, vector<256x8xf32> -> vector<256x8xf32>
    %cst_27 = arith.constant dense<0.000000e+00> : vector<8xf32>
    %24 = vector.multi_reduction <add>, %23, %cst_27 [0] : vector<256x8xf32> to vector<8xf32>
    %25 = vector.shape_cast %24 : vector<8xf32> to vector<1x8xf32>
    %26 = arith.mulf %23, %23 : vector<256x8xf32>
    %cst_28 = arith.constant dense<0.000000e+00> : vector<8xf32>
    %27 = vector.multi_reduction <add>, %26, %cst_28 [0] : vector<256x8xf32> to vector<8xf32>
    %28 = vector.shape_cast %27 : vector<8xf32> to vector<1x8xf32>
    %cst_29 = arith.constant 3.906250e-03 : f32
    %29 = vector.broadcast %cst_29 : f32 to vector<1x8xf32>
    %30 = arith.mulf %25, %29 : vector<1x8xf32>
    %cst_30 = arith.constant 3.906250e-03 : f32
    %31 = vector.broadcast %cst_30 : f32 to vector<1x8xf32>
    %32 = arith.mulf %28, %31 : vector<1x8xf32>
    %33 = arith.mulf %30, %30 : vector<1x8xf32>
    %34 = arith.subf %32, %33 : vector<1x8xf32>
    %35 = vector.broadcast %30 : vector<1x8xf32> to vector<256x8xf32>
    %36 = arith.subf %23, %35 : vector<256x8xf32>
    %cst_31 = arith.constant 9.99999974E-6 : f32
    %37 = vector.broadcast %cst_31 : f32 to vector<1x8xf32>
    %38 = arith.addf %34, %37 : vector<1x8xf32>
    %39 = math.rsqrt %38 : vector<1x8xf32>
    %40 = vector.broadcast %39 : vector<1x8xf32> to vector<256x8xf32>
    %41 = arith.mulf %36, %40 : vector<256x8xf32>
    %cst_32 = arith.constant 0.000000e+00 : f32
    %42 = vector.broadcast %cst_32 : f32 to vector<256x8xf32>
    %43 = arith.cmpf ogt, %41, %42 : vector<256x8xf32>
    %cst_33 = arith.constant 0.00999999977 : f32
    %44 = vector.broadcast %cst_33 : f32 to vector<256x8xf32>
    %45 = arith.mulf %44, %41 : vector<256x8xf32>
    %46 = arith.select %43, %41, %45 : vector<256x8xi1>, vector<256x8xf32>
    %47 = vector.shape_cast %46 : vector<256x8xf32> to vector<16x16x8xf32>
    %cst_34 = arith.constant 0.000000e+00 : f32
    %48 = vector.broadcast %cst_34 : f32 to vector<16x16x72xf32>
    %c0_35 = arith.constant 0 : index
    %c0_36 = arith.constant 0 : index
    %c0_37 = arith.constant 0 : index
    %49 = vector.load %arg7[%c0_35, %c0_36, %c0_37] : memref<16x16x72xf32, #tpu.memory_space<vmem>>, vector<16x16x72xf32>
    tpu.vector_store %arg7[%c0_35, %c0_36, %c0_37], %48 {strides = array<i32>} : memref<16x16x72xf32, #tpu.memory_space<vmem>>, vector<16x16x72xf32>,
    %50 = vector.extract_strided_slice %47 {offsets = [0, 0, 0], sizes = [15, 15, 8], strides = [1, 1, 1]} : vector<16x16x8xf32> to vector<15x15x8xf32>
    %c1 = arith.constant 1 : index
    %c1_38 = arith.constant 1 : index
    %c0_39 = arith.constant 0 : index
    %51 = vector.load %arg7[%c1, %c1_38, %c0_39] : memref<16x16x72xf32, #tpu.memory_space<vmem>>, vector<15x15x8xf32>
    tpu.vector_store %arg7[%c1, %c1_38, %c0_39], %50 {strides = array<i32>} : memref<16x16x72xf32, #tpu.memory_space<vmem>>, vector<15x15x8xf32>,
    %52 = vector.extract_strided_slice %47 {offsets = [0, 0, 0], sizes = [15, 16, 8], strides = [1, 1, 1]} : vector<16x16x8xf32> to vector<15x16x8xf32>
    %c1_40 = arith.constant 1 : index
    %c0_41 = arith.constant 0 : index
    %c8_42 = arith.constant 8 : index
    %53 = vector.load %arg7[%c1_40, %c0_41, %c8_42] : memref<16x16x72xf32, #tpu.memory_space<vmem>>, vector<15x16x8xf32>
    tpu.vector_store %arg7[%c1_40, %c0_41, %c8_42], %52 {strides = array<i32>} : memref<16x16x72xf32, #tpu.memory_space<vmem>>, vector<15x16x8xf32>,
    %54 = vector.extract_strided_slice %47 {offsets = [0, 1, 0], sizes = [15, 15, 8], strides = [1, 1, 1]} : vector<16x16x8xf32> to vector<15x15x8xf32>
    %c1_43 = arith.constant 1 : index
    %c0_44 = arith.constant 0 : index
    %c16_45 = arith.constant 16 : index
    %55 = vector.load %arg7[%c1_43, %c0_44, %c16_45] : memref<16x16x72xf32, #tpu.memory_space<vmem>>, vector<15x15x8xf32>
    tpu.vector_store %arg7[%c1_43, %c0_44, %c16_45], %54 {strides = array<i32>} : memref<16x16x72xf32, #tpu.memory_space<vmem>>, vector<15x15x8xf32>,
    %56 = vector.extract_strided_slice %47 {offsets = [0, 0, 0], sizes = [16, 15, 8], strides = [1, 1, 1]} : vector<16x16x8xf32> to vector<16x15x8xf32>
    %c0_46 = arith.constant 0 : index
    %c1_47 = arith.constant 1 : index
    %c24_48 = arith.constant 24 : index
    %57 = vector.load %arg7[%c0_46, %c1_47, %c24_48] : memref<16x16x72xf32, #tpu.memory_space<vmem>>, vector<16x15x8xf32>
    tpu.vector_store %arg7[%c0_46, %c1_47, %c24_48], %56 {strides = array<i32>} : memref<16x16x72xf32, #tpu.memory_space<vmem>>, vector<16x15x8xf32>,
    %c0_49 = arith.constant 0 : index
    %c0_50 = arith.constant 0 : index
    %c32_51 = arith.constant 32 : index
    %58 = vector.load %arg7[%c0_49, %c0_50, %c32_51] : memref<16x16x72xf32, #tpu.memory_space<vmem>>, vector<16x16x8xf32>
    tpu.vector_store %arg7[%c0_49, %c0_50, %c32_51], %47 {strides = array<i32>} : memref<16x16x72xf32, #tpu.memory_space<vmem>>, vector<16x16x8xf32>,
    %59 = vector.extract_strided_slice %47 {offsets = [0, 1, 0], sizes = [16, 15, 8], strides = [1, 1, 1]} : vector<16x16x8xf32> to vector<16x15x8xf32>
    %c0_52 = arith.constant 0 : index
    %c0_53 = arith.constant 0 : index
    %c40 = arith.constant 40 : index
    %60 = vector.load %arg7[%c0_52, %c0_53, %c40] : memref<16x16x72xf32, #tpu.memory_space<vmem>>, vector<16x15x8xf32>
    tpu.vector_store %arg7[%c0_52, %c0_53, %c40], %59 {strides = array<i32>} : memref<16x16x72xf32, #tpu.memory_space<vmem>>, vector<16x15x8xf32>,
    %61 = vector.extract_strided_slice %47 {offsets = [1, 0, 0], sizes = [15, 15, 8], strides = [1, 1, 1]} : vector<16x16x8xf32> to vector<15x15x8xf32>
    %c0_54 = arith.constant 0 : index
    %c1_55 = arith.constant 1 : index
    %c48 = arith.constant 48 : index
    %62 = vector.load %arg7[%c0_54, %c1_55, %c48] : memref<16x16x72xf32, #tpu.memory_space<vmem>>, vector<15x15x8xf32>
    tpu.vector_store %arg7[%c0_54, %c1_55, %c48], %61 {strides = array<i32>} : memref<16x16x72xf32, #tpu.memory_space<vmem>>, vector<15x15x8xf32>,
    %63 = vector.extract_strided_slice %47 {offsets = [1, 0, 0], sizes = [15, 16, 8], strides = [1, 1, 1]} : vector<16x16x8xf32> to vector<15x16x8xf32>
    %c0_56 = arith.constant 0 : index
    %c0_57 = arith.constant 0 : index
    %c56 = arith.constant 56 : index
    %64 = vector.load %arg7[%c0_56, %c0_57, %c56] : memref<16x16x72xf32, #tpu.memory_space<vmem>>, vector<15x16x8xf32>
    tpu.vector_store %arg7[%c0_56, %c0_57, %c56], %63 {strides = array<i32>} : memref<16x16x72xf32, #tpu.memory_space<vmem>>, vector<15x16x8xf32>,
    %65 = vector.extract_strided_slice %47 {offsets = [1, 1, 0], sizes = [15, 15, 8], strides = [1, 1, 1]} : vector<16x16x8xf32> to vector<15x15x8xf32>
    %c0_58 = arith.constant 0 : index
    %c0_59 = arith.constant 0 : index
    %c64 = arith.constant 64 : index
    %66 = vector.load %arg7[%c0_58, %c0_59, %c64] : memref<16x16x72xf32, #tpu.memory_space<vmem>>, vector<15x15x8xf32>
    tpu.vector_store %arg7[%c0_58, %c0_59, %c64], %65 {strides = array<i32>} : memref<16x16x72xf32, #tpu.memory_space<vmem>>, vector<15x15x8xf32>,
    %c0_60 = arith.constant 0 : index
    %c0_61 = arith.constant 0 : index
    %c0_62 = arith.constant 0 : index
    %67 = vector.load %arg7[%c0_60, %c0_61, %c0_62] : memref<16x16x72xf32, #tpu.memory_space<vmem>>, vector<16x16x72xf32>
    %68 = vector.shape_cast %67 : vector<16x16x72xf32> to vector<256x72xf32>
    %c0_63 = arith.constant 0 : index
    %c0_64 = arith.constant 0 : index
    %69 = vector.load %arg3[%c0_63, %c0_64] : memref<72x128xf32, #tpu.memory_space<vmem>>, vector<72x128xf32>
    %cst_65 = arith.constant dense<0.000000e+00> : vector<256x128xf32>
    %70 = tpu.matmul %68, %69, %cst_65 {dimension_numbers = #tpu.dot_dimension_numbers<[1], [0], [0], [1], [0, 0, 1, 1], [], []>} : vector<256x72xf32>, vector<72x128xf32>, vector<256x128xf32> -> vector<256x128xf32>
    %cst_66 = arith.constant dense<0.000000e+00> : vector<128xf32>
    %71 = vector.multi_reduction <add>, %70, %cst_66 [0] : vector<256x128xf32> to vector<128xf32>
    %72 = vector.shape_cast %71 : vector<128xf32> to vector<1x128xf32>
    %73 = arith.mulf %70, %70 : vector<256x128xf32>
    %cst_67 = arith.constant dense<0.000000e+00> : vector<128xf32>
    %74 = vector.multi_reduction <add>, %73, %cst_67 [0] : vector<256x128xf32> to vector<128xf32>
    %75 = vector.shape_cast %74 : vector<128xf32> to vector<1x128xf32>
    %cst_68 = arith.constant 3.906250e-03 : f32
    %76 = vector.broadcast %cst_68 : f32 to vector<1x128xf32>
    %77 = arith.mulf %72, %76 : vector<1x128xf32>
    %cst_69 = arith.constant 3.906250e-03 : f32
    %78 = vector.broadcast %cst_69 : f32 to vector<1x128xf32>
    %79 = arith.mulf %75, %78 : vector<1x128xf32>
    %80 = arith.mulf %77, %77 : vector<1x128xf32>
    %81 = arith.subf %79, %80 : vector<1x128xf32>
    %82 = vector.broadcast %77 : vector<1x128xf32> to vector<256x128xf32>
    %83 = arith.subf %70, %82 : vector<256x128xf32>
    %cst_70 = arith.constant 9.99999974E-6 : f32
    %84 = vector.broadcast %cst_70 : f32 to vector<1x128xf32>
    %85 = arith.addf %81, %84 : vector<1x128xf32>
    %86 = math.rsqrt %85 : vector<1x128xf32>
    %87 = vector.broadcast %86 : vector<1x128xf32> to vector<256x128xf32>
    %88 = arith.mulf %83, %87 : vector<256x128xf32>
    %89 = vector.extract_strided_slice %1 {offsets = [1, 1, 0], sizes = [16, 16, 4], strides = [1, 1, 1]} : vector<18x18x4xf32> to vector<16x16x4xf32>
    %90 = vector.shape_cast %89 : vector<16x16x4xf32> to vector<256x4xf32>
    %c0_71 = arith.constant 0 : index
    %c0_72 = arith.constant 0 : index
    %91 = vector.load %arg4[%c0_71, %c0_72] : memref<4x128xf32, #tpu.memory_space<vmem>>, vector<4x128xf32>
    %cst_73 = arith.constant dense<0.000000e+00> : vector<256x128xf32>
    %92 = tpu.matmul %90, %91, %cst_73 {dimension_numbers = #tpu.dot_dimension_numbers<[1], [0], [0], [1], [0, 0, 1, 1], [], []>} : vector<256x4xf32>, vector<4x128xf32>, vector<256x128xf32> -> vector<256x128xf32>
    %cst_74 = arith.constant dense<0.000000e+00> : vector<128xf32>
    %93 = vector.multi_reduction <add>, %92, %cst_74 [0] : vector<256x128xf32> to vector<128xf32>
    %94 = vector.shape_cast %93 : vector<128xf32> to vector<1x128xf32>
    %95 = arith.mulf %92, %92 : vector<256x128xf32>
    %cst_75 = arith.constant dense<0.000000e+00> : vector<128xf32>
    %96 = vector.multi_reduction <add>, %95, %cst_75 [0] : vector<256x128xf32> to vector<128xf32>
    %97 = vector.shape_cast %96 : vector<128xf32> to vector<1x128xf32>
    %cst_76 = arith.constant 3.906250e-03 : f32
    %98 = vector.broadcast %cst_76 : f32 to vector<1x128xf32>
    %99 = arith.mulf %94, %98 : vector<1x128xf32>
    %cst_77 = arith.constant 3.906250e-03 : f32
    %100 = vector.broadcast %cst_77 : f32 to vector<1x128xf32>
    %101 = arith.mulf %97, %100 : vector<1x128xf32>
    %102 = arith.mulf %99, %99 : vector<1x128xf32>
    %103 = arith.subf %101, %102 : vector<1x128xf32>
    %104 = vector.broadcast %99 : vector<1x128xf32> to vector<256x128xf32>
    %105 = arith.subf %92, %104 : vector<256x128xf32>
    %cst_78 = arith.constant 9.99999974E-6 : f32
    %106 = vector.broadcast %cst_78 : f32 to vector<1x128xf32>
    %107 = arith.addf %103, %106 : vector<1x128xf32>
    %108 = math.rsqrt %107 : vector<1x128xf32>
    %109 = vector.broadcast %108 : vector<1x128xf32> to vector<256x128xf32>
    %110 = arith.mulf %105, %109 : vector<256x128xf32>
    %111 = arith.addf %88, %110 : vector<256x128xf32>
    %cst_79 = arith.constant 0.000000e+00 : f32
    %112 = vector.broadcast %cst_79 : f32 to vector<256x128xf32>
    %113 = arith.cmpf ogt, %111, %112 : vector<256x128xf32>
    %cst_80 = arith.constant 0.00999999977 : f32
    %114 = vector.broadcast %cst_80 : f32 to vector<256x128xf32>
    %115 = arith.mulf %114, %111 : vector<256x128xf32>
    %116 = arith.select %113, %111, %115 : vector<256x128xi1>, vector<256x128xf32>
    %117 = tpu.transpose %116, [1, 0] : vector<256x128xf32> -> vector<128x256xf32>
    %118 = vector.extract_strided_slice %117 {offsets = [0, 0], sizes = [8, 256], strides = [1, 1]} : vector<128x256xf32> to vector<8x256xf32>
    %c0_81 = arith.constant 0 : index
    %c0_82 = arith.constant 0 : index
    %c0_83 = arith.constant 0 : index
    %119 = vector.load %arg5[%c0_81, %c0_82, %c0_83] : memref<1x8x256xf32, #tpu.memory_space<vmem>>, vector<1x8x256xf32>
    %120 = vector.shape_cast %119 : vector<1x8x256xf32> to vector<8x256xf32>
    %121 = vector.shape_cast %118 : vector<8x256xf32> to vector<1x8x256xf32>
    tpu.vector_store %arg5[%c0_81, %c0_82, %c0_83], %121 {strides = array<i32>} : memref<1x8x256xf32, #tpu.memory_space<vmem>>, vector<1x8x256xf32>,
    return
  }
  func.func @transform_0(%arg0: i32) -> (i32, i32, i32, i32) {
    %c0_i32 = arith.constant 0 : i32
    %c0_i32_0 = arith.constant 0 : i32
    %c0_i32_1 = arith.constant 0 : i32
    %c0_i32_2 = arith.constant 0 : i32
    return %arg0, %c0_i32, %c0_i32_0, %c0_i32_1 : i32, i32, i32, i32
  }
  func.func @transform_1(%arg0: i32) -> (i32, i32) {
    %c0_i32 = arith.constant 0 : i32
    %c0_i32_0 = arith.constant 0 : i32
    %c0_i32_1 = arith.constant 0 : i32
    return %c0_i32, %c0_i32_0 : i32, i32
  }
  func.func @transform_2(%arg0: i32) -> (i32, i32) {
    %c0_i32 = arith.constant 0 : i32
    %c0_i32_0 = arith.constant 0 : i32
    %c0_i32_1 = arith.constant 0 : i32
    return %c0_i32, %c0_i32_0 : i32, i32
  }
  func.func @transform_3(%arg0: i32) -> (i32, i32) {
    %c0_i32 = arith.constant 0 : i32
    %c0_i32_0 = arith.constant 0 : i32
    %c0_i32_1 = arith.constant 0 : i32
    return %c0_i32, %c0_i32_0 : i32, i32
  }
  func.func @transform_4(%arg0: i32) -> (i32, i32, i32) {
    %c0_i32 = arith.constant 0 : i32
    %c0_i32_0 = arith.constant 0 : i32
    %c0_i32_1 = arith.constant 0 : i32
    return %arg0, %c0_i32, %c0_i32_0 : i32, i32, i32
  }
}

</mosaic_0001>

<llo_original>
// kernel: tpu_custom_call.1
$region0: #{tpu_custom_call.1}
  #allocation0 [shape = 'u32[]', space=smem, size = 0x4, offset = 0x4, fixed_abs, tag = 'smem constant byte address 0x4 - core index']
  #allocation1 [shape = 'u32[72,128]{1,0:T(1,128)}', space=vmem, size = 0x9000, scoped, tag = 'internal scratch']
  #allocation2 [shape = 'f32[16,16,36]{2,1,0:T(8,128)}', space=vmem, size = 0x20000, scoped, tag = 'scratch operand']
  #allocation3 [shape = 'f32[16,16,72]{2,1,0:T(8,128)}', space=vmem, size = 0x20000, scoped, tag = 'scratch operand']
  %s0 = inlined_call_operand.vmem [shape: f32[2,18,18,4], index: 0, kind: input, shape index: {}]
  %s1 = inlined_call_operand.vmem [shape: f32[36,8], index: 1, kind: input, shape index: {}]
  %s2 = inlined_call_operand.vmem [shape: f32[72,128], index: 2, kind: input, shape index: {}]
  %s3 = inlined_call_operand.vmem [shape: f32[4,128], index: 3, kind: input, shape index: {}]
  %s4 = inlined_call_operand.hbm [shape: f32[2,8,256], index: 4, kind: output, shape index: {}]
  %s5 = sld [smem:[#allocation0]]
  $region49: #{tpu_custom_call.1} parent=0
    _
  %s7 = ssub.s32 1, %s5
  %s8 = scalar_select 0, %s7, %s5
  $region1: #{tpu_custom_call.1} parent=0
    #allocation4 [shape = 'u8[16384]{0}', space=vmem, size = 0x4000, scoped, tag = 'output window, operand 0']
    #allocation5 [shape = 's32[2]{0}', space=sflag, size = 0x8, scoped, tag = 'scoped memory for tpu_custom_call.1']
    %9 = vsyncpa [#allocation5], 0
    %s10 = scalar_lea.sflag [#allocation5], 1
    %11 = vsyncpa %s10, 0
    loop: start=0, step=1, limit=4
    $region2: #{tpu_custom_call.1} parent=1 // loop_pre_header
      _
    $region3: #{tpu_custom_call.1} parent=1 // loop_header
      %s13 = sphi 0, %s17
      %p14 = scmp.ge.s32.totalorder %s13, 4
      %s23 = sphi 0, %s25
      %s26 = sphi 0, %s23
      %s27 = sphi 0, %s26
      %s43 = sphi 0, %s27
      %s47 = sphi 0, %s47
      %s49 = sphi 0, %s47
      %s50 = sphi 0, %s49
      %s64 = sphi 0, %s50
      %s68 = sphi 0, %s68
      %s70 = sphi 0, %s68
      %s71 = sphi 0, %s70
      %s85 = sphi 0, %s71
      %s89 = sphi 0, %s89
      %s91 = sphi 0, %s89
      %s92 = sphi 0, %s91
      %s106 = sphi 0, %s92
      %s112 = sphi 0, %s114
      %s115 = sphi 0, %s112
      %s116 = sphi 0, %s115
      %s132 = sphi 0, %s116
    $region4: #{tpu_custom_call.1} parent=1 // loop_header_branch
      %16 = sbr.rel (%p14) target = $region8
    $region5: #{tpu_custom_call.1} parent=1 // loop_body
      %s18 = ssub.s32 %s13, 1
      %s19 = ssub.s32 %s13, 2
      %s20 = sadd.s32 %s13, 1
      %s21 = ssub.s32 %s13, %s20
      %p22 = scmp.eq.s32.totalorder %s21, 0
      %s24 = sadd.s32 %s23, 1
      %s25 = scalar_select %p22, %s23, %s24
      %p28 = pneg %p22
      %p29 = scmp.eq.s32.totalorder %s13, 1
      %p30 = por %p28, %p29
      %p31 = scmp.ne.s32.totalorder %s23, %s26
      %p32 = scmp.eq.s32.totalorder %s13, 0
      %p33 = por %p31, %p32
      %p34 = scmp.ne.s32.totalorder %s23, %s26
      %p35 = scmp.eq.s32.totalorder %s18, 1
      %p36 = por %p34, %p35
      %p37 = scmp.ne.s32.totalorder %s26, %s27
      %p38 = scmp.eq.s32.totalorder %s18, 0
      %p39 = por %p37, %p38
      %p40 = scmp.ne.s32.totalorder %s26, %s27
      %p41 = scmp.eq.s32.totalorder %s19, 1
      %p42 = por %p40, %p41
      %p44 = scmp.ne.s32.totalorder %s27, %s43
      %p45 = scmp.eq.s32.totalorder %s19, 0
      %p46 = por %p44, %p45
      %s48 = sadd.s32 %s47, 1
      %p51 = scmp.eq.s32.totalorder %s13, 1
      %p52 = scmp.ne.s32.totalorder %s47, %s49
      %p53 = scmp.eq.s32.totalorder %s13, 0
      %p54 = por %p52, %p53
      %p55 = scmp.ne.s32.totalorder %s47, %s49
      %p56 = scmp.eq.s32.totalorder %s18, 1
      %p57 = por %p55, %p56
      %p58 = scmp.ne.s32.totalorder %s49, %s50
      %p59 = scmp.eq.s32.totalorder %s18, 0
      %p60 = por %p58, %p59
      %p61 = scmp.ne.s32.totalorder %s49, %s50
      %p62 = scmp.eq.s32.totalorder %s19, 1
      %p63 = por %p61, %p62
      %p65 = scmp.ne.s32.totalorder %s50, %s64
      %p66 = scmp.eq.s32.totalorder %s19, 0
      %p67 = por %p65, %p66
      %s69 = sadd.s32 %s68, 1
      %p72 = scmp.eq.s32.totalorder %s13, 1
      %p73 = scmp.ne.s32.totalorder %s68, %s70
      %p74 = scmp.eq.s32.totalorder %s13, 0
      %p75 = por %p73, %p74
      %p76 = scmp.ne.s32.totalorder %s68, %s70
      %p77 = scmp.eq.s32.totalorder %s18, 1
      %p78 = por %p76, %p77
      %p79 = scmp.ne.s32.totalorder %s70, %s71
      %p80 = scmp.eq.s32.totalorder %s18, 0
      %p81 = por %p79, %p80
      %p82 = scmp.ne.s32.totalorder %s70, %s71
      %p83 = scmp.eq.s32.totalorder %s19, 1
      %p84 = por %p82, %p83
      %p86 = scmp.ne.s32.totalorder %s71, %s85
      %p87 = scmp.eq.s32.totalorder %s19, 0
      %p88 = por %p86, %p87
      %s90 = sadd.s32 %s89, 1
      %p93 = scmp.eq.s32.totalorder %s13, 1
      %p94 = scmp.ne.s32.totalorder %s89, %s91
      %p95 = scmp.eq.s32.totalorder %s13, 0
      %p96 = por %p94, %p95
      %p97 = scmp.ne.s32.totalorder %s89, %s91
      %p98 = scmp.eq.s32.totalorder %s18, 1
      %p99 = por %p97, %p98
      %p100 = scmp.ne.s32.totalorder %s91, %s92
      %p101 = scmp.eq.s32.totalorder %s18, 0
      %p102 = por %p100, %p101
      %p103 = scmp.ne.s32.totalorder %s91, %s92
      %p104 = scmp.eq.s32.totalorder %s19, 1
      %p105 = por %p103, %p104
      %p107 = scmp.ne.s32.totalorder %s92, %s106
      %p108 = scmp.eq.s32.totalorder %s19, 0
      %p109 = por %p107, %p108
      %s110 = ssub.s32 %s13, %s20
      %p111 = scmp.eq.s32.totalorder %s110, 0
      %s113 = sadd.s32 %s112, 1
      %s114 = scalar_select %p111, %s112, %s113
      %p117 = pneg %p111
      %p118 = scmp.eq.s32.totalorder %s13, 1
      %p119 = por %p117, %p118
      %p120 = scmp.ne.s32.totalorder %s112, %s115
      %p121 = scmp.eq.s32.totalorder %s13, 0
      %p122 = por %p120, %p121
      %p123 = scmp.ne.s32.totalorder %s112, %s115
      %p124 = scmp.eq.s32.totalorder %s18, 1
      %p125 = por %p123, %p124
      %p126 = scmp.ne.s32.totalorder %s115, %s116
      %p127 = scmp.eq.s32.totalorder %s18, 0
      %p128 = por %p126, %p127
      %p129 = scmp.ne.s32.totalorder %s115, %s116
      %p130 = scmp.eq.s32.totalorder %s19, 1
      %p131 = por %p129, %p130
      %p133 = scmp.ne.s32.totalorder %s116, %s132
      %p134 = scmp.eq.s32.totalorder %s19, 0
      %p135 = por %p133, %p134
      %p136 = scmp.le.s32.totalorder 1, %s13
      %p137 = scmp.lt.s32.totalorder %s13, 3
      %p138 = pnand %p136, %p137
      %p139 = pneg %p138
      // Predicated region
      $region9: #{tpu_custom_call.1} parent=5 // pred_check
        _
      $region10: #{tpu_custom_call.1} parent=5 // pred_check_branch
        %141 = sbr.rel (%p138) target = $region12
      $region11: #{tpu_custom_call.1} parent=5 // pred_region
        %s142 = ssub.s32 %s13, 1
        // Predicated region
        $region13: #{tpu_custom_call.1} parent=11 // pred_check
          %p143 = pneg %p60
        $region14: #{tpu_custom_call.1} parent=11 // pred_check_branch
          %145 = sbr.rel (%p143) target = $region16
        $region15: #{tpu_custom_call.1} parent=11 // pred_region
          _
        $region16: #{tpu_custom_call.1} parent=11 // pred_fallthru
          _
        // Predicated region
        $region17: #{tpu_custom_call.1} parent=11 // pred_check
          %p146 = pneg %p81
        $region18: #{tpu_custom_call.1} parent=11 // pred_check_branch
          %148 = sbr.rel (%p146) target = $region20
        $region19: #{tpu_custom_call.1} parent=11 // pred_region
          _
        $region20: #{tpu_custom_call.1} parent=11 // pred_fallthru
          _
        // Predicated region
        $region21: #{tpu_custom_call.1} parent=11 // pred_check
          %p149 = pneg %p102
        $region22: #{tpu_custom_call.1} parent=11 // pred_check_branch
          %151 = sbr.rel (%p149) target = $region24
        $region23: #{tpu_custom_call.1} parent=11 // pred_region
          _
        $region24: #{tpu_custom_call.1} parent=11 // pred_fallthru
          _
      $region12: #{tpu_custom_call.1} parent=5 // pred_fallthru
        _
      %p152 = scmp.lt.s32.totalorder %s13, 2
      // Predicated region
      $region25: #{tpu_custom_call.1} parent=5 // pred_check
        %p153 = pneg %p152
      $region26: #{tpu_custom_call.1} parent=5 // pred_check_branch
        %155 = sbr.rel (%p153) target = $region28
      $region27: #{tpu_custom_call.1} parent=5 // pred_region
        // Predicated region
        $region29: #{tpu_custom_call.1} parent=27 // pred_check
          %p156 = pneg %p33
        $region30: #{tpu_custom_call.1} parent=27 // pred_check_branch
          %158 = sbr.rel (%p156) target = $region32
        $region31: #{tpu_custom_call.1} parent=27 // pred_region
          %p159 = scmp.lt.s32.totalorder %s13, 1
          %s160 = scalar_select %p159, %s13, 1
          %s161 = smul.addr %s160, 54
          %s162 = smul.addr %s161, 8
          %s163 = scalar_lea.vmem %s0, %s162
        $region32: #{tpu_custom_call.1} parent=27 // pred_fallthru
          _
      $region28: #{tpu_custom_call.1} parent=5 // pred_fallthru
        _
      %p164 = scmp.le.s32.totalorder 1, %s13
      %p165 = scmp.lt.s32.totalorder %s13, 3
      %p166 = pnand %p164, %p165
      %p167 = pneg %p166
      // Predicated region
      $region33: #{tpu_custom_call.1} parent=5 // pred_check
        _
      $region34: #{tpu_custom_call.1} parent=5 // pred_check_branch
        %169 = sbr.rel (%p166) target = $region36
      $region35: #{tpu_custom_call.1} parent=5 // pred_region
        %s170 = ssub.s32 %s13, 1
        %p171 = scmp.lt.s32.totalorder %s18, 1
        %s172 = scalar_select %p171, %s18, 1
        %s173 = smul.addr %s172, 54
        %s174 = smul.addr %s173, 8
        %s175 = scalar_lea.vmem %s0, %s174
        %p176 = pneg %p39
        %p177 = pneg %p36
        %p178 = pneg %p60
        %p179 = pneg %p57
        %p180 = pneg %p81
        %p181 = pneg %p78
        %p182 = pneg %p102
        %p183 = pneg %p99
        %p184 = pneg %p128
        %p185 = pneg %p125
        %s186 = sand.u32 %s115, 1
        %s187 = scalar_lea.sflag [#allocation5], %s186
        %s188 = sand.u32 %s115, 1
        %s189 = smul.addr %s188, 16
        %s190 = scalar_lea.vmem [#allocation4], %s189
        %p191 = scmp.lt.s32.totalorder %s18, 1
        %s192 = scalar_select %p191, %s18, 1
        %s193 = smul.addr %s192, 54
        %s194 = smul.addr %s193, 8
        %s195 = scalar_lea.vmem %s0, %s194
        %v196 = vld [vmem:[%s195] sm:$0xff]
        %v197 = vld [vmem:[%s195 + $0x8] sm:$0xff]
        %v198 = vld [vmem:[%s195 + $0x10] sm:$0x3]
        %v199 = vld [vmem:[%s195 + $0x18] sm:$0xff]
        %v200 = vld [vmem:[%s195 + $0x20] sm:$0xff]
        %v201 = vld [vmem:[%s195 + $0x28] sm:$0x3]
        %v202 = vld [vmem:[%s195 + $0x30] sm:$0xff]
        %v203 = vld [vmem:[%s195 + $0x38] sm:$0xff]
        %v204 = vld [vmem:[%s195 + $0x40] sm:$0x3]
        %v205 = vld [vmem:[%s195 + $0x48] sm:$0xff]
        %v206 = vld [vmem:[%s195 + $0x50] sm:$0xff]
        %v207 = vld [vmem:[%s195 + $0x58] sm:$0x3]
        %v208 = vld [vmem:[%s195 + $0x60] sm:$0xff]
        %v209 = vld [vmem:[%s195 + $0x68] sm:$0xff]
        %v210 = vld [vmem:[%s195 + $0x70] sm:$0x3]
        %v211 = vld [vmem:[%s195 + $0x78] sm:$0xff]
        %v212 = vld [vmem:[%s195 + $0x80] sm:$0xff]
        %v213 = vld [vmem:[%s195 + $0x88] sm:$0x3]
        %v214 = vld [vmem:[%s195 + $0x90] sm:$0xff]
        %v215 = vld [vmem:[%s195 + $0x98] sm:$0xff]
        %v216 = vld [vmem:[%s195 + $0xa0] sm:$0x3]
        %v217 = vld [vmem:[%s195 + $0xa8] sm:$0xff]
        %v218 = vld [vmem:[%s195 + $0xb0] sm:$0xff]
        %v219 = vld [vmem:[%s195 + $0xb8] sm:$0x3]
        %v220 = vld [vmem:[%s195 + $0xc0] sm:$0xff]
        %v221 = vld [vmem:[%s195 + $0xc8] sm:$0xff]
        %v222 = vld [vmem:[%s195 + $0xd0] sm:$0x3]
        %v223 = vld [vmem:[%s195 + $0xd8] sm:$0xff]
        %v224 = vld [vmem:[%s195 + $0xe0] sm:$0xff]
        %v225 = vld [vmem:[%s195 + $0xe8] sm:$0x3]
        %v226 = vld [vmem:[%s195 + $0xf0] sm:$0xff]
        %v227 = vld [vmem:[%s195 + $0xf8] sm:$0xff]
        %v228 = vld [vmem:[%s195 + $0x100] sm:$0x3]
        %v229 = vld [vmem:[%s195 + $0x108] sm:$0xff]
        %v230 = vld [vmem:[%s195 + $0x110] sm:$0xff]
        %v231 = vld [vmem:[%s195 + $0x118] sm:$0x3]
        %v232 = vld [vmem:[%s195 + $0x120] sm:$0xff]
        %v233 = vld [vmem:[%s195 + $0x128] sm:$0xff]
        %v234 = vld [vmem:[%s195 + $0x130] sm:$0x3]
        %v235 = vld [vmem:[%s195 + $0x138] sm:$0xff]
        %v236 = vld [vmem:[%s195 + $0x140] sm:$0xff]
        %v237 = vld [vmem:[%s195 + $0x148] sm:$0x3]
        %v238 = vld [vmem:[%s195 + $0x150] sm:$0xff]
        %v239 = vld [vmem:[%s195 + $0x158] sm:$0xff]
        %v240 = vld [vmem:[%s195 + $0x160] sm:$0x3]
        %v241 = vld [vmem:[%s195 + $0x168] sm:$0xff]
        %v242 = vld [vmem:[%s195 + $0x170] sm:$0xff]
        %v243 = vld [vmem:[%s195 + $0x178] sm:$0x3]
        %v244 = vld [vmem:[%s195 + $0x180] sm:$0xff]
        %v245 = vld [vmem:[%s195 + $0x188] sm:$0xff]
        %v246 = vld [vmem:[%s195 + $0x190] sm:$0x3]
        %v247 = vld [vmem:[%s195 + $0x198] sm:$0xff]
        %v248 = vld [vmem:[%s195 + $0x1a0] sm:$0xff]
        %v249 = vld [vmem:[%s195 + $0x1a8] sm:$0x3]
        %vm250 = vcmask 31744
        %251 = vst.msk [vmem:[#allocation2] sm:$0xff] %vm250, %v196
        %252 = vst.msk [vmem:[#allocation2 + $0x8] sm:$0xff] %vm250, %v197
        %253 = vst.msk [vmem:[#allocation2 + $0x10] sm:$0xff] %vm250, %v199
        %254 = vst.msk [vmem:[#allocation2 + $0x18] sm:$0xff] %vm250, %v200
        %255 = vst.msk [vmem:[#allocation2 + $0x20] sm:$0xff] %vm250, %v202
        %256 = vst.msk [vmem:[#allocation2 + $0x28] sm:$0xff] %vm250, %v203
        %257 = vst.msk [vmem:[#allocation2 + $0x30] sm:$0xff] %vm250, %v205
        %258 = vst.msk [vmem:[#allocation2 + $0x38] sm:$0xff] %vm250, %v206
        %259 = vst.msk [vmem:[#allocation2 + $0x40] sm:$0xff] %vm250, %v208
        %260 = vst.msk [vmem:[#allocation2 + $0x48] sm:$0xff] %vm250, %v209
        %261 = vst.msk [vmem:[#allocation2 + $0x50] sm:$0xff] %vm250, %v211
        %262 = vst.msk [vmem:[#allocation2 + $0x58] sm:$0xff] %vm250, %v212
        %263 = vst.msk [vmem:[#allocation2 + $0x60] sm:$0xff] %vm250, %v214
        %264 = vst.msk [vmem:[#allocation2 + $0x68] sm:$0xff] %vm250, %v215
        %265 = vst.msk [vmem:[#allocation2 + $0x70] sm:$0xff] %vm250, %v217
        %266 = vst.msk [vmem:[#allocation2 + $0x78] sm:$0xff] %vm250, %v218
        %267 = vst.msk [vmem:[#allocation2 + $0x80] sm:$0xff] %vm250, %v220
        %268 = vst.msk [vmem:[#allocation2 + $0x88] sm:$0xff] %vm250, %v221
        %269 = vst.msk [vmem:[#allocation2 + $0x90] sm:$0xff] %vm250, %v223
        %270 = vst.msk [vmem:[#allocation2 + $0x98] sm:$0xff] %vm250, %v224
        %271 = vst.msk [vmem:[#allocation2 + $0xa0] sm:$0xff] %vm250, %v226
        %272 = vst.msk [vmem:[#allocation2 + $0xa8] sm:$0xff] %vm250, %v227
        %273 = vst.msk [vmem:[#allocation2 + $0xb0] sm:$0xff] %vm250, %v229
        %274 = vst.msk [vmem:[#allocation2 + $0xb8] sm:$0xff] %vm250, %v230
        %275 = vst.msk [vmem:[#allocation2 + $0xc0] sm:$0xff] %vm250, %v232
        %276 = vst.msk [vmem:[#allocation2 + $0xc8] sm:$0xff] %vm250, %v233
        %277 = vst.msk [vmem:[#allocation2 + $0xd0] sm:$0xff] %vm250, %v235
        %278 = vst.msk [vmem:[#allocation2 + $0xd8] sm:$0xff] %vm250, %v236
        %279 = vst.msk [vmem:[#allocation2 + $0xe0] sm:$0xff] %vm250, %v238
        %280 = vst.msk [vmem:[#allocation2 + $0xe8] sm:$0xff] %vm250, %v239
        %281 = vst.msk [vmem:[#allocation2 + $0xf0] sm:$0xff] %vm250, %v241
        %282 = vst.msk [vmem:[#allocation2 + $0xf8] sm:$0xff] %vm250, %v242
        %331 = vrot.lane.b32.xlu0 %v196, 4
        %v332 = vpop.permute.xlu0 %331
        %333 = vrot.lane.b32.xlu0 %v197, 4
        %v334 = vpop.permute.xlu0 %333
        %335 = vrot.lane.b32.xlu0 %v198, 4
        %v336 = vpop.permute.xlu0 %335
        %337 = vrot.lane.b32.xlu0 %v199, 4
        %v338 = vpop.permute.xlu0 %337
        %339 = vrot.lane.b32.xlu0 %v200, 4
        %v340 = vpop.permute.xlu0 %339
        %341 = vrot.lane.b32.xlu0 %v201, 4
        %v342 = vpop.permute.xlu0 %341
        %343 = vrot.lane.b32.xlu0 %v202, 4
        %v344 = vpop.permute.xlu0 %343
        %345 = vrot.lane.b32.xlu0 %v203, 4
        %v346 = vpop.permute.xlu0 %345
        %347 = vrot.lane.b32.xlu0 %v204, 4
        %v348 = vpop.permute.xlu0 %347
        %349 = vrot.lane.b32.xlu0 %v205, 4
        %v350 = vpop.permute.xlu0 %349
        %351 = vrot.lane.b32.xlu0 %v206, 4
        %v352 = vpop.permute.xlu0 %351
        %353 = vrot.lane.b32.xlu0 %v207, 4
        %v354 = vpop.permute.xlu0 %353
        %355 = vrot.lane.b32.xlu0 %v208, 4
        %v356 = vpop.permute.xlu0 %355
        %357 = vrot.lane.b32.xlu0 %v209, 4
        %v358 = vpop.permute.xlu0 %357
        %359 = vrot.lane.b32.xlu0 %v210, 4
        %v360 = vpop.permute.xlu0 %359
        %361 = vrot.lane.b32.xlu0 %v211, 4
        %v362 = vpop.permute.xlu0 %361
        %363 = vrot.lane.b32.xlu0 %v212, 4
        %v364 = vpop.permute.xlu0 %363
        %365 = vrot.lane.b32.xlu0 %v213, 4
        %v366 = vpop.permute.xlu0 %365
        %367 = vrot.lane.b32.xlu0 %v214, 4
        %v368 = vpop.permute.xlu0 %367
        %369 = vrot.lane.b32.xlu0 %v215, 4
        %v370 = vpop.permute.xlu0 %369
        %371 = vrot.lane.b32.xlu0 %v216, 4
        %v372 = vpop.permute.xlu0 %371
        %373 = vrot.lane.b32.xlu0 %v217, 4
        %v374 = vpop.permute.xlu0 %373
        %375 = vrot.lane.b32.xlu0 %v218, 4
        %v376 = vpop.permute.xlu0 %375
        %377 = vrot.lane.b32.xlu0 %v219, 4
        %v378 = vpop.permute.xlu0 %377
        %379 = vrot.lane.b32.xlu0 %v220, 4
        %v380 = vpop.permute.xlu0 %379
        %381 = vrot.lane.b32.xlu0 %v221, 4
        %v382 = vpop.permute.xlu0 %381
        %383 = vrot.lane.b32.xlu0 %v222, 4
        %v384 = vpop.permute.xlu0 %383
        %385 = vrot.lane.b32.xlu0 %v223, 4
        %v386 = vpop.permute.xlu0 %385
        %387 = vrot.lane.b32.xlu0 %v224, 4
        %v388 = vpop.permute.xlu0 %387
        %389 = vrot.lane.b32.xlu0 %v225, 4
        %v390 = vpop.permute.xlu0 %389
        %391 = vrot.lane.b32.xlu0 %v226, 4
        %v392 = vpop.permute.xlu0 %391
        %393 = vrot.lane.b32.xlu0 %v227, 4
        %v394 = vpop.permute.xlu0 %393
        %395 = vrot.lane.b32.xlu0 %v228, 4
        %v396 = vpop.permute.xlu0 %395
        %397 = vrot.lane.b32.xlu0 %v229, 4
        %v398 = vpop.permute.xlu0 %397
        %399 = vrot.lane.b32.xlu0 %v230, 4
        %v400 = vpop.permute.xlu0 %399
        %401 = vrot.lane.b32.xlu0 %v231, 4
        %v402 = vpop.permute.xlu0 %401
        %403 = vrot.lane.b32.xlu0 %v232, 4
        %v404 = vpop.permute.xlu0 %403
        %405 = vrot.lane.b32.xlu0 %v233, 4
        %v406 = vpop.permute.xlu0 %405
        %407 = vrot.lane.b32.xlu0 %v234, 4
        %v408 = vpop.permute.xlu0 %407
        %409 = vrot.lane.b32.xlu0 %v235, 4
        %v410 = vpop.permute.xlu0 %409
        %411 = vrot.lane.b32.xlu0 %v236, 4
        %v412 = vpop.permute.xlu0 %411
        %413 = vrot.lane.b32.xlu0 %v237, 4
        %v414 = vpop.permute.xlu0 %413
        %415 = vrot.lane.b32.xlu0 %v238, 4
        %v416 = vpop.permute.xlu0 %415
        %417 = vrot.lane.b32.xlu0 %v239, 4
        %v418 = vpop.permute.xlu0 %417
        %419 = vrot.lane.b32.xlu0 %v240, 4
        %v420 = vpop.permute.xlu0 %419
        %421 = vrot.lane.b32.xlu0 %v241, 4
        %v422 = vpop.permute.xlu0 %421
        %423 = vrot.lane.b32.xlu0 %v242, 4
        %v424 = vpop.permute.xlu0 %423
        %425 = vrot.lane.b32.xlu0 %v243, 4
        %v426 = vpop.permute.xlu0 %425
        %vm475 = vcmask 64545
        %476 = vst.msk [vmem:[#allocation2 - $0x1] sm:$0xfe] %vm475, %v332
        %vm477 = vcmask 64544
        %478 = vst.msk [vmem:[#allocation2 + $0x7] sm:$0xff] %vm477, %v334
        %vm479 = vcmask 57376
        %480 = vst.msk [vmem:[#allocation2 + $0xf] sm:$0x1] %vm479, %v336
        %481 = vst.msk [vmem:[#allocation2 + $0xf] sm:$0xfe] %vm475, %v338
        %482 = vst.msk [vmem:[#allocation2 + $0x17] sm:$0xff] %vm477, %v340
        %483 = vst.msk [vmem:[#allocation2 + $0x1f] sm:$0x1] %vm479, %v342
        %484 = vst.msk [vmem:[#allocation2 + $0x1f] sm:$0xfe] %vm475, %v344
        %485 = vst.msk [vmem:[#allocation2 + $0x27] sm:$0xff] %vm477, %v346
        %486 = vst.msk [vmem:[#allocation2 + $0x2f] sm:$0x1] %vm479, %v348
        %487 = vst.msk [vmem:[#allocation2 + $0x2f] sm:$0xfe] %vm475, %v350
        %488 = vst.msk [vmem:[#allocation2 + $0x37] sm:$0xff] %vm477, %v352
        %489 = vst.msk [vmem:[#allocation2 + $0x3f] sm:$0x1] %vm479, %v354
        %490 = vst.msk [vmem:[#allocation2 + $0x3f] sm:$0xfe] %vm475, %v356
        %491 = vst.msk [vmem:[#allocation2 + $0x47] sm:$0xff] %vm477, %v358
        %492 = vst.msk [vmem:[#allocation2 + $0x4f] sm:$0x1] %vm479, %v360
        %493 = vst.msk [vmem:[#allocation2 + $0x4f] sm:$0xfe] %vm475, %v362
        %494 = vst.msk [vmem:[#allocation2 + $0x57] sm:$0xff] %vm477, %v364
        %495 = vst.msk [vmem:[#allocation2 + $0x5f] sm:$0x1] %vm479, %v366
        %496 = vst.msk [vmem:[#allocation2 + $0x5f] sm:$0xfe] %vm475, %v368
        %497 = vst.msk [vmem:[#allocation2 + $0x67] sm:$0xff] %vm477, %v370
        %498 = vst.msk [vmem:[#allocation2 + $0x6f] sm:$0x1] %vm479, %v372
        %499 = vst.msk [vmem:[#allocation2 + $0x6f] sm:$0xfe] %vm475, %v374
        %500 = vst.msk [vmem:[#allocation2 + $0x77] sm:$0xff] %vm477, %v376
        %501 = vst.msk [vmem:[#allocation2 + $0x7f] sm:$0x1] %vm479, %v378
        %502 = vst.msk [vmem:[#allocation2 + $0x7f] sm:$0xfe] %vm475, %v380
        %503 = vst.msk [vmem:[#allocation2 + $0x87] sm:$0xff] %vm477, %v382
        %504 = vst.msk [vmem:[#allocation2 + $0x8f] sm:$0x1] %vm479, %v384
        %505 = vst.msk [vmem:[#allocation2 + $0x8f] sm:$0xfe] %vm475, %v386
        %506 = vst.msk [vmem:[#allocation2 + $0x97] sm:$0xff] %vm477, %v388
        %507 = vst.msk [vmem:[#allocation2 + $0x9f] sm:$0x1] %vm479, %v390
        %508 = vst.msk [vmem:[#allocation2 + $0x9f] sm:$0xfe] %vm475, %v392
        %509 = vst.msk [vmem:[#allocation2 + $0xa7] sm:$0xff] %vm477, %v394
        %510 = vst.msk [vmem:[#allocation2 + $0xaf] sm:$0x1] %vm479, %v396
        %511 = vst.msk [vmem:[#allocation2 + $0xaf] sm:$0xfe] %vm475, %v398
        %512 = vst.msk [vmem:[#allocation2 + $0xb7] sm:$0xff] %vm477, %v400
        %513 = vst.msk [vmem:[#allocation2 + $0xbf] sm:$0x1] %vm479, %v402
        %514 = vst.msk [vmem:[#allocation2 + $0xbf] sm:$0xfe] %vm475, %v404
        %515 = vst.msk [vmem:[#allocation2 + $0xc7] sm:$0xff] %vm477, %v406
        %516 = vst.msk [vmem:[#allocation2 + $0xcf] sm:$0x1] %vm479, %v408
        %517 = vst.msk [vmem:[#allocation2 + $0xcf] sm:$0xfe] %vm475, %v410
        %518 = vst.msk [vmem:[#allocation2 + $0xd7] sm:$0xff] %vm477, %v412
        %519 = vst.msk [vmem:[#allocation2 + $0xdf] sm:$0x1] %vm479, %v414
        %520 = vst.msk [vmem:[#allocation2 + $0xdf] sm:$0xfe] %vm475, %v416
        %521 = vst.msk [vmem:[#allocation2 + $0xe7] sm:$0xff] %vm477, %v418
        %522 = vst.msk [vmem:[#allocation2 + $0xef] sm:$0x1] %vm479, %v420
        %523 = vst.msk [vmem:[#allocation2 + $0xef] sm:$0xfe] %vm475, %v422
        %524 = vst.msk [vmem:[#allocation2 + $0xf7] sm:$0xff] %vm477, %v424
        %525 = vst.msk [vmem:[#allocation2 + $0xff] sm:$0x1] %vm479, %v426
        %526 = vrot.lane.b32.xlu0 %v196, 8
        %v527 = vpop.permute.xlu0 %526
        %528 = vrot.lane.b32.xlu0 %v197, 8
        %v529 = vpop.permute.xlu0 %528
        %530 = vrot.lane.b32.xlu0 %v198, 8
        %v531 = vpop.permute.xlu0 %530
        %532 = vrot.lane.b32.xlu0 %v199, 8
        %v533 = vpop.permute.xlu0 %532
        %534 = vrot.lane.b32.xlu0 %v200, 8
        %v535 = vpop.permute.xlu0 %534
        %536 = vrot.lane.b32.xlu0 %v201, 8
        %v537 = vpop.permute.xlu0 %536
        %538 = vrot.lane.b32.xlu0 %v202, 8
        %v539 = vpop.permute.xlu0 %538
        %540 = vrot.lane.b32.xlu0 %v203, 8
        %v541 = vpop.permute.xlu0 %540
        %542 = vrot.lane.b32.xlu0 %v204, 8
        %v543 = vpop.permute.xlu0 %542
        %544 = vrot.lane.b32.xlu0 %v205, 8
        %v545 = vpop.permute.xlu0 %544
        %546 = vrot.lane.b32.xlu0 %v206, 8
        %v547 = vpop.permute.xlu0 %546
        %548 = vrot.lane.b32.xlu0 %v207, 8
        %v549 = vpop.permute.xlu0 %548
        %550 = vrot.lane.b32.xlu0 %v208, 8
        %v551 = vpop.permute.xlu0 %550
        %552 = vrot.lane.b32.xlu0 %v209, 8
        %v553 = vpop.permute.xlu0 %552
        %554 = vrot.lane.b32.xlu0 %v210, 8
        %v555 = vpop.permute.xlu0 %554
        %556 = vrot.lane.b32.xlu0 %v211, 8
        %v557 = vpop.permute.xlu0 %556
        %558 = vrot.lane.b32.xlu0 %v212, 8
        %v559 = vpop.permute.xlu0 %558
        %560 = vrot.lane.b32.xlu0 %v213, 8
        %v561 = vpop.permute.xlu0 %560
        %562 = vrot.lane.b32.xlu0 %v214, 8
        %v563 = vpop.permute.xlu0 %562
        %564 = vrot.lane.b32.xlu0 %v215, 8
        %v565 = vpop.permute.xlu0 %564
        %566 = vrot.lane.b32.xlu0 %v216, 8
        %v567 = vpop.permute.xlu0 %566
        %568 = vrot.lane.b32.xlu0 %v217, 8
        %v569 = vpop.permute.xlu0 %568
        %570 = vrot.lane.b32.xlu0 %v218, 8
        %v571 = vpop.permute.xlu0 %570
        %572 = vrot.lane.b32.xlu0 %v219, 8
        %v573 = vpop.permute.xlu0 %572
        %574 = vrot.lane.b32.xlu0 %v220, 8
        %v575 = vpop.permute.xlu0 %574
        %576 = vrot.lane.b32.xlu0 %v221, 8
        %v577 = vpop.permute.xlu0 %576
        %578 = vrot.lane.b32.xlu0 %v222, 8
        %v579 = vpop.permute.xlu0 %578
        %580 = vrot.lane.b32.xlu0 %v223, 8
        %v581 = vpop.permute.xlu0 %580
        %582 = vrot.lane.b32.xlu0 %v224, 8
        %v583 = vpop.permute.xlu0 %582
        %584 = vrot.lane.b32.xlu0 %v225, 8
        %v585 = vpop.permute.xlu0 %584
        %586 = vrot.lane.b32.xlu0 %v226, 8
        %v587 = vpop.permute.xlu0 %586
        %588 = vrot.lane.b32.xlu0 %v227, 8
        %v589 = vpop.permute.xlu0 %588
        %590 = vrot.lane.b32.xlu0 %v228, 8
        %v591 = vpop.permute.xlu0 %590
        %592 = vrot.lane.b32.xlu0 %v229, 8
        %v593 = vpop.permute.xlu0 %592
        %594 = vrot.lane.b32.xlu0 %v230, 8
        %v595 = vpop.permute.xlu0 %594
        %596 = vrot.lane.b32.xlu0 %v231, 8
        %v597 = vpop.permute.xlu0 %596
        %598 = vrot.lane.b32.xlu0 %v232, 8
        %v599 = vpop.permute.xlu0 %598
        %600 = vrot.lane.b32.xlu0 %v233, 8
        %v601 = vpop.permute.xlu0 %600
        %602 = vrot.lane.b32.xlu0 %v234, 8
        %v603 = vpop.permute.xlu0 %602
        %604 = vrot.lane.b32.xlu0 %v235, 8
        %v605 = vpop.permute.xlu0 %604
        %606 = vrot.lane.b32.xlu0 %v236, 8
        %v607 = vpop.permute.xlu0 %606
        %608 = vrot.lane.b32.xlu0 %v237, 8
        %v609 = vpop.permute.xlu0 %608
        %610 = vrot.lane.b32.xlu0 %v238, 8
        %v611 = vpop.permute.xlu0 %610
        %612 = vrot.lane.b32.xlu0 %v239, 8
        %v613 = vpop.permute.xlu0 %612
        %614 = vrot.lane.b32.xlu0 %v240, 8
        %v615 = vpop.permute.xlu0 %614
        %616 = vrot.lane.b32.xlu0 %v241, 8
        %v617 = vpop.permute.xlu0 %616
        %618 = vrot.lane.b32.xlu0 %v242, 8
        %v619 = vpop.permute.xlu0 %618
        %620 = vrot.lane.b32.xlu0 %v243, 8
        %v621 = vpop.permute.xlu0 %620
        %vm670 = vcmask 97346
        %671 = vst.msk [vmem:[#allocation2 - $0x2] sm:$0xfc] %vm670, %v527
        %vm672 = vcmask 97344
        %673 = vst.msk [vmem:[#allocation2 + $0x6] sm:$0xff] %vm672, %v529
        %vm674 = vcmask 91200
        %675 = vst.msk [vmem:[#allocation2 + $0xe] sm:$0x3] %vm674, %v531
        %676 = vst.msk [vmem:[#allocation2 + $0xe] sm:$0xfc] %vm670, %v533
        %677 = vst.msk [vmem:[#allocation2 + $0x16] sm:$0xff] %vm672, %v535
        %678 = vst.msk [vmem:[#allocation2 + $0x1e] sm:$0x3] %vm674, %v537
        %679 = vst.msk [vmem:[#allocation2 + $0x1e] sm:$0xfc] %vm670, %v539
        %680 = vst.msk [vmem:[#allocation2 + $0x26] sm:$0xff] %vm672, %v541
        %681 = vst.msk [vmem:[#allocation2 + $0x2e] sm:$0x3] %vm674, %v543
        %682 = vst.msk [vmem:[#allocation2 + $0x2e] sm:$0xfc] %vm670, %v545
        %683 = vst.msk [vmem:[#allocation2 + $0x36] sm:$0xff] %vm672, %v547
        %684 = vst.msk [vmem:[#allocation2 + $0x3e] sm:$0x3] %vm674, %v549
        %685 = vst.msk [vmem:[#allocation2 + $0x3e] sm:$0xfc] %vm670, %v551
        %686 = vst.msk [vmem:[#allocation2 + $0x46] sm:$0xff] %vm672, %v553
        %687 = vst.msk [vmem:[#allocation2 + $0x4e] sm:$0x3] %vm674, %v555
        %688 = vst.msk [vmem:[#allocation2 + $0x4e] sm:$0xfc] %vm670, %v557
        %689 = vst.msk [vmem:[#allocation2 + $0x56] sm:$0xff] %vm672, %v559
        %690 = vst.msk [vmem:[#allocation2 + $0x5e] sm:$0x3] %vm674, %v561
        %691 = vst.msk [vmem:[#allocation2 + $0x5e] sm:$0xfc] %vm670, %v563
        %692 = vst.msk [vmem:[#allocation2 + $0x66] sm:$0xff] %vm672, %v565
        %693 = vst.msk [vmem:[#allocation2 + $0x6e] sm:$0x3] %vm674, %v567
        %694 = vst.msk [vmem:[#allocation2 + $0x6e] sm:$0xfc] %vm670, %v569
        %695 = vst.msk [vmem:[#allocation2 + $0x76] sm:$0xff] %vm672, %v571
        %696 = vst.msk [vmem:[#allocation2 + $0x7e] sm:$0x3] %vm674, %v573
        %697 = vst.msk [vmem:[#allocation2 + $0x7e] sm:$0xfc] %vm670, %v575
        %698 = vst.msk [vmem:[#allocation2 + $0x86] sm:$0xff] %vm672, %v577
        %699 = vst.msk [vmem:[#allocation2 + $0x8e] sm:$0x3] %vm674, %v579
        %700 = vst.msk [vmem:[#allocation2 + $0x8e] sm:$0xfc] %vm670, %v581
        %701 = vst.msk [vmem:[#allocation2 + $0x96] sm:$0xff] %vm672, %v583
        %702 = vst.msk [vmem:[#allocation2 + $0x9e] sm:$0x3] %vm674, %v585
        %703 = vst.msk [vmem:[#allocation2 + $0x9e] sm:$0xfc] %vm670, %v587
        %704 = vst.msk [vmem:[#allocation2 + $0xa6] sm:$0xff] %vm672, %v589
        %705 = vst.msk [vmem:[#allocation2 + $0xae] sm:$0x3] %vm674, %v591
        %706 = vst.msk [vmem:[#allocation2 + $0xae] sm:$0xfc] %vm670, %v593
        %707 = vst.msk [vmem:[#allocation2 + $0xb6] sm:$0xff] %vm672, %v595
        %708 = vst.msk [vmem:[#allocation2 + $0xbe] sm:$0x3] %vm674, %v597
        %709 = vst.msk [vmem:[#allocation2 + $0xbe] sm:$0xfc] %vm670, %v599
        %710 = vst.msk [vmem:[#allocation2 + $0xc6] sm:$0xff] %vm672, %v601
        %711 = vst.msk [vmem:[#allocation2 + $0xce] sm:$0x3] %vm674, %v603
        %712 = vst.msk [vmem:[#allocation2 + $0xce] sm:$0xfc] %vm670, %v605
        %713 = vst.msk [vmem:[#allocation2 + $0xd6] sm:$0xff] %vm672, %v607
        %714 = vst.msk [vmem:[#allocation2 + $0xde] sm:$0x3] %vm674, %v609
        %715 = vst.msk [vmem:[#allocation2 + $0xde] sm:$0xfc] %vm670, %v611
        %716 = vst.msk [vmem:[#allocation2 + $0xe6] sm:$0xff] %vm672, %v613
        %717 = vst.msk [vmem:[#allocation2 + $0xee] sm:$0x3] %vm674, %v615
        %718 = vst.msk [vmem:[#allocation2 + $0xee] sm:$0xfc] %vm670, %v617
        %719 = vst.msk [vmem:[#allocation2 + $0xf6] sm:$0xff] %vm672, %v619
        %720 = vst.msk [vmem:[#allocation2 + $0xfe] sm:$0x3] %vm674, %v621
        %723 = vrot.lane.b32.xlu0 %v199, 12
        %v724 = vpop.permute.xlu0 %723
        %725 = vrot.lane.b32.xlu0 %v200, 12
        %v726 = vpop.permute.xlu0 %725
        %727 = vrot.lane.b32.xlu0 %v202, 12
        %v728 = vpop.permute.xlu0 %727
        %729 = vrot.lane.b32.xlu0 %v203, 12
        %v730 = vpop.permute.xlu0 %729
        %731 = vrot.lane.b32.xlu0 %v205, 12
        %v732 = vpop.permute.xlu0 %731
        %733 = vrot.lane.b32.xlu0 %v206, 12
        %v734 = vpop.permute.xlu0 %733
        %735 = vrot.lane.b32.xlu0 %v208, 12
        %v736 = vpop.permute.xlu0 %735
        %737 = vrot.lane.b32.xlu0 %v209, 12
        %v738 = vpop.permute.xlu0 %737
        %739 = vrot.lane.b32.xlu0 %v211, 12
        %v740 = vpop.permute.xlu0 %739
        %741 = vrot.lane.b32.xlu0 %v212, 12
        %v742 = vpop.permute.xlu0 %741
        %743 = vrot.lane.b32.xlu0 %v214, 12
        %v744 = vpop.permute.xlu0 %743
        %745 = vrot.lane.b32.xlu0 %v215, 12
        %v746 = vpop.permute.xlu0 %745
        %747 = vrot.lane.b32.xlu0 %v217, 12
        %v748 = vpop.permute.xlu0 %747
        %749 = vrot.lane.b32.xlu0 %v218, 12
        %v750 = vpop.permute.xlu0 %749
        %751 = vrot.lane.b32.xlu0 %v220, 12
        %v752 = vpop.permute.xlu0 %751
        %753 = vrot.lane.b32.xlu0 %v221, 12
        %v754 = vpop.permute.xlu0 %753
        %755 = vrot.lane.b32.xlu0 %v223, 12
        %v756 = vpop.permute.xlu0 %755
        %757 = vrot.lane.b32.xlu0 %v224, 12
        %v758 = vpop.permute.xlu0 %757
        %759 = vrot.lane.b32.xlu0 %v226, 12
        %v760 = vpop.permute.xlu0 %759
        %761 = vrot.lane.b32.xlu0 %v227, 12
        %v762 = vpop.permute.xlu0 %761
        %763 = vrot.lane.b32.xlu0 %v229, 12
        %v764 = vpop.permute.xlu0 %763
        %765 = vrot.lane.b32.xlu0 %v230, 12
        %v766 = vpop.permute.xlu0 %765
        %767 = vrot.lane.b32.xlu0 %v232, 12
        %v768 = vpop.permute.xlu0 %767
        %769 = vrot.lane.b32.xlu0 %v233, 12
        %v770 = vpop.permute.xlu0 %769
        %771 = vrot.lane.b32.xlu0 %v235, 12
        %v772 = vpop.permute.xlu0 %771
        %773 = vrot.lane.b32.xlu0 %v236, 12
        %v774 = vpop.permute.xlu0 %773
        %775 = vrot.lane.b32.xlu0 %v238, 12
        %v776 = vpop.permute.xlu0 %775
        %777 = vrot.lane.b32.xlu0 %v239, 12
        %v778 = vpop.permute.xlu0 %777
        %779 = vrot.lane.b32.xlu0 %v241, 12
        %v780 = vpop.permute.xlu0 %779
        %781 = vrot.lane.b32.xlu0 %v242, 12
        %v782 = vpop.permute.xlu0 %781
        %783 = vrot.lane.b32.xlu0 %v244, 12
        %v784 = vpop.permute.xlu0 %783
        %785 = vrot.lane.b32.xlu0 %v245, 12
        %v786 = vpop.permute.xlu0 %785
        %vm819 = vcmask 130144
        %820 = vst.msk [vmem:[#allocation2] sm:$0xff] %vm819, %v724
        %821 = vst.msk [vmem:[#allocation2 + $0x8] sm:$0xff] %vm819, %v726
        %822 = vst.msk [vmem:[#allocation2 + $0x10] sm:$0xff] %vm819, %v728
        %823 = vst.msk [vmem:[#allocation2 + $0x18] sm:$0xff] %vm819, %v730
        %824 = vst.msk [vmem:[#allocation2 + $0x20] sm:$0xff] %vm819, %v732
        %825 = vst.msk [vmem:[#allocation2 + $0x28] sm:$0xff] %vm819, %v734
        %826 = vst.msk [vmem:[#allocation2 + $0x30] sm:$0xff] %vm819, %v736
        %827 = vst.msk [vmem:[#allocation2 + $0x38] sm:$0xff] %vm819, %v738
        %828 = vst.msk [vmem:[#allocation2 + $0x40] sm:$0xff] %vm819, %v740
        %829 = vst.msk [vmem:[#allocation2 + $0x48] sm:$0xff] %vm819, %v742
        %830 = vst.msk [vmem:[#allocation2 + $0x50] sm:$0xff] %vm819, %v744
        %831 = vst.msk [vmem:[#allocation2 + $0x58] sm:$0xff] %vm819, %v746
        %832 = vst.msk [vmem:[#allocation2 + $0x60] sm:$0xff] %vm819, %v748
        %833 = vst.msk [vmem:[#allocation2 + $0x68] sm:$0xff] %vm819, %v750
        %834 = vst.msk [vmem:[#allocation2 + $0x70] sm:$0xff] %vm819, %v752
        %835 = vst.msk [vmem:[#allocation2 + $0x78] sm:$0xff] %vm819, %v754
        %836 = vst.msk [vmem:[#allocation2 + $0x80] sm:$0xff] %vm819, %v756
        %837 = vst.msk [vmem:[#allocation2 + $0x88] sm:$0xff] %vm819, %v758
        %838 = vst.msk [vmem:[#allocation2 + $0x90] sm:$0xff] %vm819, %v760
        %839 = vst.msk [vmem:[#allocation2 + $0x98] sm:$0xff] %vm819, %v762
        %840 = vst.msk [vmem:[#allocation2 + $0xa0] sm:$0xff] %vm819, %v764
        %841 = vst.msk [vmem:[#allocation2 + $0xa8] sm:$0xff] %vm819, %v766
        %842 = vst.msk [vmem:[#allocation2 + $0xb0] sm:$0xff] %vm819, %v768
        %843 = vst.msk [vmem:[#allocation2 + $0xb8] sm:$0xff] %vm819, %v770
        %844 = vst.msk [vmem:[#allocation2 + $0xc0] sm:$0xff] %vm819, %v772
        %845 = vst.msk [vmem:[#allocation2 + $0xc8] sm:$0xff] %vm819, %v774
        %846 = vst.msk [vmem:[#allocation2 + $0xd0] sm:$0xff] %vm819, %v776
        %847 = vst.msk [vmem:[#allocation2 + $0xd8] sm:$0xff] %vm819, %v778
        %848 = vst.msk [vmem:[#allocation2 + $0xe0] sm:$0xff] %vm819, %v780
        %849 = vst.msk [vmem:[#allocation2 + $0xe8] sm:$0xff] %vm819, %v782
        %850 = vst.msk [vmem:[#allocation2 + $0xf0] sm:$0xff] %vm819, %v784
        %851 = vst.msk [vmem:[#allocation2 + $0xf8] sm:$0xff] %vm819, %v786
        %853 = vrot.lane.b32.xlu0 %v199, 16
        %v854 = vpop.permute.xlu0 %853
        %855 = vrot.lane.b32.xlu0 %v200, 16
        %v856 = vpop.permute.xlu0 %855
        %857 = vrot.lane.b32.xlu0 %v201, 16
        %v858 = vpop.permute.xlu0 %857
        %859 = vrot.lane.b32.xlu0 %v202, 16
        %v860 = vpop.permute.xlu0 %859
        %861 = vrot.lane.b32.xlu0 %v203, 16
        %v862 = vpop.permute.xlu0 %861
        %863 = vrot.lane.b32.xlu0 %v204, 16
        %v864 = vpop.permute.xlu0 %863
        %865 = vrot.lane.b32.xlu0 %v205, 16
        %v866 = vpop.permute.xlu0 %865
        %867 = vrot.lane.b32.xlu0 %v206, 16
        %v868 = vpop.permute.xlu0 %867
        %869 = vrot.lane.b32.xlu0 %v207, 16
        %v870 = vpop.permute.xlu0 %869
        %871 = vrot.lane.b32.xlu0 %v208, 16
        %v872 = vpop.permute.xlu0 %871
        %873 = vrot.lane.b32.xlu0 %v209, 16
        %v874 = vpop.permute.xlu0 %873
        %875 = vrot.lane.b32.xlu0 %v210, 16
        %v876 = vpop.permute.xlu0 %875
        %877 = vrot.lane.b32.xlu0 %v211, 16
        %v878 = vpop.permute.xlu0 %877
        %879 = vrot.lane.b32.xlu0 %v212, 16
        %v880 = vpop.permute.xlu0 %879
        %881 = vrot.lane.b32.xlu0 %v213, 16
        %v882 = vpop.permute.xlu0 %881
        %883 = vrot.lane.b32.xlu0 %v214, 16
        %v884 = vpop.permute.xlu0 %883
        %885 = vrot.lane.b32.xlu0 %v215, 16
        %v886 = vpop.permute.xlu0 %885
        %887 = vrot.lane.b32.xlu0 %v216, 16
        %v888 = vpop.permute.xlu0 %887
        %889 = vrot.lane.b32.xlu0 %v217, 16
        %v890 = vpop.permute.xlu0 %889
        %891 = vrot.lane.b32.xlu0 %v218, 16
        %v892 = vpop.permute.xlu0 %891
        %893 = vrot.lane.b32.xlu0 %v219, 16
        %v894 = vpop.permute.xlu0 %893
        %895 = vrot.lane.b32.xlu0 %v220, 16
        %v896 = vpop.permute.xlu0 %895
        %897 = vrot.lane.b32.xlu0 %v221, 16
        %v898 = vpop.permute.xlu0 %897
        %899 = vrot.lane.b32.xlu0 %v222, 16
        %v900 = vpop.permute.xlu0 %899
        %901 = vrot.lane.b32.xlu0 %v223, 16
        %v902 = vpop.permute.xlu0 %901
        %903 = vrot.lane.b32.xlu0 %v224, 16
        %v904 = vpop.permute.xlu0 %903
        %905 = vrot.lane.b32.xlu0 %v225, 16
        %v906 = vpop.permute.xlu0 %905
        %907 = vrot.lane.b32.xlu0 %v226, 16
        %v908 = vpop.permute.xlu0 %907
        %909 = vrot.lane.b32.xlu0 %v227, 16
        %v910 = vpop.permute.xlu0 %909
        %911 = vrot.lane.b32.xlu0 %v228, 16
        %v912 = vpop.permute.xlu0 %911
        %913 = vrot.lane.b32.xlu0 %v229, 16
        %v914 = vpop.permute.xlu0 %913
        %915 = vrot.lane.b32.xlu0 %v230, 16
        %v916 = vpop.permute.xlu0 %915
        %917 = vrot.lane.b32.xlu0 %v231, 16
        %v918 = vpop.permute.xlu0 %917
        %919 = vrot.lane.b32.xlu0 %v232, 16
        %v920 = vpop.permute.xlu0 %919
        %921 = vrot.lane.b32.xlu0 %v233, 16
        %v922 = vpop.permute.xlu0 %921
        %923 = vrot.lane.b32.xlu0 %v234, 16
        %v924 = vpop.permute.xlu0 %923
        %925 = vrot.lane.b32.xlu0 %v235, 16
        %v926 = vpop.permute.xlu0 %925
        %927 = vrot.lane.b32.xlu0 %v236, 16
        %v928 = vpop.permute.xlu0 %927
        %929 = vrot.lane.b32.xlu0 %v237, 16
        %v930 = vpop.permute.xlu0 %929
        %931 = vrot.lane.b32.xlu0 %v238, 16
        %v932 = vpop.permute.xlu0 %931
        %933 = vrot.lane.b32.xlu0 %v239, 16
        %v934 = vpop.permute.xlu0 %933
        %935 = vrot.lane.b32.xlu0 %v240, 16
        %v936 = vpop.permute.xlu0 %935
        %937 = vrot.lane.b32.xlu0 %v241, 16
        %v938 = vpop.permute.xlu0 %937
        %939 = vrot.lane.b32.xlu0 %v242, 16
        %v940 = vpop.permute.xlu0 %939
        %941 = vrot.lane.b32.xlu0 %v243, 16
        %v942 = vpop.permute.xlu0 %941
        %943 = vrot.lane.b32.xlu0 %v244, 16
        %v944 = vpop.permute.xlu0 %943
        %945 = vrot.lane.b32.xlu0 %v245, 16
        %v946 = vpop.permute.xlu0 %945
        %947 = vrot.lane.b32.xlu0 %v246, 16
        %v948 = vpop.permute.xlu0 %947
        %vm997 = vcmask 162945
        %998 = vst.msk [vmem:[#allocation2 - $0x1] sm:$0xfe] %vm997, %v854
        %vm999 = vcmask 162944
        %1000 = vst.msk [vmem:[#allocation2 + $0x7] sm:$0xff] %vm999, %v856
        %vm1001 = vcmask 155776
        %1002 = vst.msk [vmem:[#allocation2 + $0xf] sm:$0x1] %vm1001, %v858
        %1003 = vst.msk [vmem:[#allocation2 + $0xf] sm:$0xfe] %vm997, %v860
        %1004 = vst.msk [vmem:[#allocation2 + $0x17] sm:$0xff] %vm999, %v862
        %1005 = vst.msk [vmem:[#allocation2 + $0x1f] sm:$0x1] %vm1001, %v864
        %1006 = vst.msk [vmem:[#allocation2 + $0x1f] sm:$0xfe] %vm997, %v866
        %1007 = vst.msk [vmem:[#allocation2 + $0x27] sm:$0xff] %vm999, %v868
        %1008 = vst.msk [vmem:[#allocation2 + $0x2f] sm:$0x1] %vm1001, %v870
        %1009 = vst.msk [vmem:[#allocation2 + $0x2f] sm:$0xfe] %vm997, %v872
        %1010 = vst.msk [vmem:[#allocation2 + $0x37] sm:$0xff] %vm999, %v874
        %1011 = vst.msk [vmem:[#allocation2 + $0x3f] sm:$0x1] %vm1001, %v876
        %1012 = vst.msk [vmem:[#allocation2 + $0x3f] sm:$0xfe] %vm997, %v878
        %1013 = vst.msk [vmem:[#allocation2 + $0x47] sm:$0xff] %vm999, %v880
        %1014 = vst.msk [vmem:[#allocation2 + $0x4f] sm:$0x1] %vm1001, %v882
        %1015 = vst.msk [vmem:[#allocation2 + $0x4f] sm:$0xfe] %vm997, %v884
        %1016 = vst.msk [vmem:[#allocation2 + $0x57] sm:$0xff] %vm999, %v886
        %1017 = vst.msk [vmem:[#allocation2 + $0x5f] sm:$0x1] %vm1001, %v888
        %1018 = vst.msk [vmem:[#allocation2 + $0x5f] sm:$0xfe] %vm997, %v890
        %1019 = vst.msk [vmem:[#allocation2 + $0x67] sm:$0xff] %vm999, %v892
        %1020 = vst.msk [vmem:[#allocation2 + $0x6f] sm:$0x1] %vm1001, %v894
        %1021 = vst.msk [vmem:[#allocation2 + $0x6f] sm:$0xfe] %vm997, %v896
        %1022 = vst.msk [vmem:[#allocation2 + $0x77] sm:$0xff] %vm999, %v898
        %1023 = vst.msk [vmem:[#allocation2 + $0x7f] sm:$0x1] %vm1001, %v900
        %1024 = vst.msk [vmem:[#allocation2 + $0x7f] sm:$0xfe] %vm997, %v902
        %1025 = vst.msk [vmem:[#allocation2 + $0x87] sm:$0xff] %vm999, %v904
        %1026 = vst.msk [vmem:[#allocation2 + $0x8f] sm:$0x1] %vm1001, %v906
        %1027 = vst.msk [vmem:[#allocation2 + $0x8f] sm:$0xfe] %vm997, %v908
        %1028 = vst.msk [vmem:[#allocation2 + $0x97] sm:$0xff] %vm999, %v910
        %1029 = vst.msk [vmem:[#allocation2 + $0x9f] sm:$0x1] %vm1001, %v912
        %1030 = vst.msk [vmem:[#allocation2 + $0x9f] sm:$0xfe] %vm997, %v914
        %1031 = vst.msk [vmem:[#allocation2 + $0xa7] sm:$0xff] %vm999, %v916
        %1032 = vst.msk [vmem:[#allocation2 + $0xaf] sm:$0x1] %vm1001, %v918
        %1033 = vst.msk [vmem:[#allocation2 + $0xaf] sm:$0xfe] %vm997, %v920
        %1034 = vst.msk [vmem:[#allocation2 + $0xb7] sm:$0xff] %vm999, %v922
        %1035 = vst.msk [vmem:[#allocation2 + $0xbf] sm:$0x1] %vm1001, %v924
        %1036 = vst.msk [vmem:[#allocation2 + $0xbf] sm:$0xfe] %vm997, %v926
        %1037 = vst.msk [vmem:[#allocation2 + $0xc7] sm:$0xff] %vm999, %v928
        %1038 = vst.msk [vmem:[#allocation2 + $0xcf] sm:$0x1] %vm1001, %v930
        %1039 = vst.msk [vmem:[#allocation2 + $0xcf] sm:$0xfe] %vm997, %v932
        %1040 = vst.msk [vmem:[#allocation2 + $0xd7] sm:$0xff] %vm999, %v934
        %1041 = vst.msk [vmem:[#allocation2 + $0xdf] sm:$0x1] %vm1001, %v936
        %1042 = vst.msk [vmem:[#allocation2 + $0xdf] sm:$0xfe] %vm997, %v938
        %1043 = vst.msk [vmem:[#allocation2 + $0xe7] sm:$0xff] %vm999, %v940
        %1044 = vst.msk [vmem:[#allocation2 + $0xef] sm:$0x1] %vm1001, %v942
        %1045 = vst.msk [vmem:[#allocation2 + $0xef] sm:$0xfe] %vm997, %v944
        %1046 = vst.msk [vmem:[#allocation2 + $0xf7] sm:$0xff] %vm999, %v946
        %1047 = vst.msk [vmem:[#allocation2 + $0xff] sm:$0x1] %vm1001, %v948
        %1048 = vrot.lane.b32.xlu0 %v199, 20
        %v1049 = vpop.permute.xlu0 %1048
        %1050 = vrot.lane.b32.xlu0 %v200, 20
        %v1051 = vpop.permute.xlu0 %1050
        %1052 = vrot.lane.b32.xlu0 %v201, 20
        %v1053 = vpop.permute.xlu0 %1052
        %1054 = vrot.lane.b32.xlu0 %v202, 20
        %v1055 = vpop.permute.xlu0 %1054
        %1056 = vrot.lane.b32.xlu0 %v203, 20
        %v1057 = vpop.permute.xlu0 %1056
        %1058 = vrot.lane.b32.xlu0 %v204, 20
        %v1059 = vpop.permute.xlu0 %1058
        %1060 = vrot.lane.b32.xlu0 %v205, 20
        %v1061 = vpop.permute.xlu0 %1060
        %1062 = vrot.lane.b32.xlu0 %v206, 20
        %v1063 = vpop.permute.xlu0 %1062
        %1064 = vrot.lane.b32.xlu0 %v207, 20
        %v1065 = vpop.permute.xlu0 %1064
        %1066 = vrot.lane.b32.xlu0 %v208, 20
        %v1067 = vpop.permute.xlu0 %1066
        %1068 = vrot.lane.b32.xlu0 %v209, 20
        %v1069 = vpop.permute.xlu0 %1068
        %1070 = vrot.lane.b32.xlu0 %v210, 20
        %v1071 = vpop.permute.xlu0 %1070
        %1072 = vrot.lane.b32.xlu0 %v211, 20
        %v1073 = vpop.permute.xlu0 %1072
        %1074 = vrot.lane.b32.xlu0 %v212, 20
        %v1075 = vpop.permute.xlu0 %1074
        %1076 = vrot.lane.b32.xlu0 %v213, 20
        %v1077 = vpop.permute.xlu0 %1076
        %1078 = vrot.lane.b32.xlu0 %v214, 20
        %v1079 = vpop.permute.xlu0 %1078
        %1080 = vrot.lane.b32.xlu0 %v215, 20
        %v1081 = vpop.permute.xlu0 %1080
        %1082 = vrot.lane.b32.xlu0 %v216, 20
        %v1083 = vpop.permute.xlu0 %1082
        %1084 = vrot.lane.b32.xlu0 %v217, 20
        %v1085 = vpop.permute.xlu0 %1084
        %1086 = vrot.lane.b32.xlu0 %v218, 20
        %v1087 = vpop.permute.xlu0 %1086
        %1088 = vrot.lane.b32.xlu0 %v219, 20
        %v1089 = vpop.permute.xlu0 %1088
        %1090 = vrot.lane.b32.xlu0 %v220, 20
        %v1091 = vpop.permute.xlu0 %1090
        %1092 = vrot.lane.b32.xlu0 %v221, 20
        %v1093 = vpop.permute.xlu0 %1092
        %1094 = vrot.lane.b32.xlu0 %v222, 20
        %v1095 = vpop.permute.xlu0 %1094
        %1096 = vrot.lane.b32.xlu0 %v223, 20
        %v1097 = vpop.permute.xlu0 %1096
        %1098 = vrot.lane.b32.xlu0 %v224, 20
        %v1099 = vpop.permute.xlu0 %1098
        %1100 = vrot.lane.b32.xlu0 %v225, 20
        %v1101 = vpop.permute.xlu0 %1100
        %1102 = vrot.lane.b32.xlu0 %v226, 20
        %v1103 = vpop.permute.xlu0 %1102
        %1104 = vrot.lane.b32.xlu0 %v227, 20
        %v1105 = vpop.permute.xlu0 %1104
        %1106 = vrot.lane.b32.xlu0 %v228, 20
        %v1107 = vpop.permute.xlu0 %1106
        %1108 = vrot.lane.b32.xlu0 %v229, 20
        %v1109 = vpop.permute.xlu0 %1108
        %1110 = vrot.lane.b32.xlu0 %v230, 20
        %v1111 = vpop.permute.xlu0 %1110
        %1112 = vrot.lane.b32.xlu0 %v231, 20
        %v1113 = vpop.permute.xlu0 %1112
        %1114 = vrot.lane.b32.xlu0 %v232, 20
        %v1115 = vpop.permute.xlu0 %1114
        %1116 = vrot.lane.b32.xlu0 %v233, 20
        %v1117 = vpop.permute.xlu0 %1116
        %1118 = vrot.lane.b32.xlu0 %v234, 20
        %v1119 = vpop.permute.xlu0 %1118
        %1120 = vrot.lane.b32.xlu0 %v235, 20
        %v1121 = vpop.permute.xlu0 %1120
        %1122 = vrot.lane.b32.xlu0 %v236, 20
        %v1123 = vpop.permute.xlu0 %1122
        %1124 = vrot.lane.b32.xlu0 %v237, 20
        %v1125 = vpop.permute.xlu0 %1124
        %1126 = vrot.lane.b32.xlu0 %v238, 20
        %v1127 = vpop.permute.xlu0 %1126
        %1128 = vrot.lane.b32.xlu0 %v239, 20
        %v1129 = vpop.permute.xlu0 %1128
        %1130 = vrot.lane.b32.xlu0 %v240, 20
        %v1131 = vpop.permute.xlu0 %1130
        %1132 = vrot.lane.b32.xlu0 %v241, 20
        %v1133 = vpop.permute.xlu0 %1132
        %1134 = vrot.lane.b32.xlu0 %v242, 20
        %v1135 = vpop.permute.xlu0 %1134
        %1136 = vrot.lane.b32.xlu0 %v243, 20
        %v1137 = vpop.permute.xlu0 %1136
        %1138 = vrot.lane.b32.xlu0 %v244, 20
        %v1139 = vpop.permute.xlu0 %1138
        %1140 = vrot.lane.b32.xlu0 %v245, 20
        %v1141 = vpop.permute.xlu0 %1140
        %1142 = vrot.lane.b32.xlu0 %v246, 20
        %v1143 = vpop.permute.xlu0 %1142
        %vm1192 = vcmask 195746
        %1193 = vst.msk [vmem:[#allocation2 - $0x2] sm:$0xfc] %vm1192, %v1049
        %vm1194 = vcmask 195744
        %1195 = vst.msk [vmem:[#allocation2 + $0x6] sm:$0xff] %vm1194, %v1051
        %vm1196 = vcmask 189600
        %1197 = vst.msk [vmem:[#allocation2 + $0xe] sm:$0x3] %vm1196, %v1053
        %1198 = vst.msk [vmem:[#allocation2 + $0xe] sm:$0xfc] %vm1192, %v1055
        %1199 = vst.msk [vmem:[#allocation2 + $0x16] sm:$0xff] %vm1194, %v1057
        %1200 = vst.msk [vmem:[#allocation2 + $0x1e] sm:$0x3] %vm1196, %v1059
        %1201 = vst.msk [vmem:[#allocation2 + $0x1e] sm:$0xfc] %vm1192, %v1061
        %1202 = vst.msk [vmem:[#allocation2 + $0x26] sm:$0xff] %vm1194, %v1063
        %1203 = vst.msk [vmem:[#allocation2 + $0x2e] sm:$0x3] %vm1196, %v1065
        %1204 = vst.msk [vmem:[#allocation2 + $0x2e] sm:$0xfc] %vm1192, %v1067
        %1205 = vst.msk [vmem:[#allocation2 + $0x36] sm:$0xff] %vm1194, %v1069
        %1206 = vst.msk [vmem:[#allocation2 + $0x3e] sm:$0x3] %vm1196, %v1071
        %1207 = vst.msk [vmem:[#allocation2 + $0x3e] sm:$0xfc] %vm1192, %v1073
        %1208 = vst.msk [vmem:[#allocation2 + $0x46] sm:$0xff] %vm1194, %v1075
        %1209 = vst.msk [vmem:[#allocation2 + $0x4e] sm:$0x3] %vm1196, %v1077
        %1210 = vst.msk [vmem:[#allocation2 + $0x4e] sm:$0xfc] %vm1192, %v1079
        %1211 = vst.msk [vmem:[#allocation2 + $0x56] sm:$0xff] %vm1194, %v1081
        %1212 = vst.msk [vmem:[#allocation2 + $0x5e] sm:$0x3] %vm1196, %v1083
        %1213 = vst.msk [vmem:[#allocation2 + $0x5e] sm:$0xfc] %vm1192, %v1085
        %1214 = vst.msk [vmem:[#allocation2 + $0x66] sm:$0xff] %vm1194, %v1087
        %1215 = vst.msk [vmem:[#allocation2 + $0x6e] sm:$0x3] %vm1196, %v1089
        %1216 = vst.msk [vmem:[#allocation2 + $0x6e] sm:$0xfc] %vm1192, %v1091
        %1217 = vst.msk [vmem:[#allocation2 + $0x76] sm:$0xff] %vm1194, %v1093
        %1218 = vst.msk [vmem:[#allocation2 + $0x7e] sm:$0x3] %vm1196, %v1095
        %1219 = vst.msk [vmem:[#allocation2 + $0x7e] sm:$0xfc] %vm1192, %v1097
        %1220 = vst.msk [vmem:[#allocation2 + $0x86] sm:$0xff] %vm1194, %v1099
        %1221 = vst.msk [vmem:[#allocation2 + $0x8e] sm:$0x3] %vm1196, %v1101
        %1222 = vst.msk [vmem:[#allocation2 + $0x8e] sm:$0xfc] %vm1192, %v1103
        %1223 = vst.msk [vmem:[#allocation2 + $0x96] sm:$0xff] %vm1194, %v1105
        %1224 = vst.msk [vmem:[#allocation2 + $0x9e] sm:$0x3] %vm1196, %v1107
        %1225 = vst.msk [vmem:[#allocation2 + $0x9e] sm:$0xfc] %vm1192, %v1109
        %1226 = vst.msk [vmem:[#allocation2 + $0xa6] sm:$0xff] %vm1194, %v1111
        %1227 = vst.msk [vmem:[#allocation2 + $0xae] sm:$0x3] %vm1196, %v1113
        %1228 = vst.msk [vmem:[#allocation2 + $0xae] sm:$0xfc] %vm1192, %v1115
        %1229 = vst.msk [vmem:[#allocation2 + $0xb6] sm:$0xff] %vm1194, %v1117
        %1230 = vst.msk [vmem:[#allocation2 + $0xbe] sm:$0x3] %vm1196, %v1119
        %1231 = vst.msk [vmem:[#allocation2 + $0xbe] sm:$0xfc] %vm1192, %v1121
        %1232 = vst.msk [vmem:[#allocation2 + $0xc6] sm:$0xff] %vm1194, %v1123
        %1233 = vst.msk [vmem:[#allocation2 + $0xce] sm:$0x3] %vm1196, %v1125
        %1234 = vst.msk [vmem:[#allocation2 + $0xce] sm:$0xfc] %vm1192, %v1127
        %1235 = vst.msk [vmem:[#allocation2 + $0xd6] sm:$0xff] %vm1194, %v1129
        %1236 = vst.msk [vmem:[#allocation2 + $0xde] sm:$0x3] %vm1196, %v1131
        %1237 = vst.msk [vmem:[#allocation2 + $0xde] sm:$0xfc] %vm1192, %v1133
        %1238 = vst.msk [vmem:[#allocation2 + $0xe6] sm:$0xff] %vm1194, %v1135
        %1239 = vst.msk [vmem:[#allocation2 + $0xee] sm:$0x3] %vm1196, %v1137
        %1240 = vst.msk [vmem:[#allocation2 + $0xee] sm:$0xfc] %vm1192, %v1139
        %1241 = vst.msk [vmem:[#allocation2 + $0xf6] sm:$0xff] %vm1194, %v1141
        %1242 = vst.msk [vmem:[#allocation2 + $0xfe] sm:$0x3] %vm1196, %v1143
        %1245 = vrot.lane.b32.xlu0 %v202, 24
        %v1246 = vpop.permute.xlu0 %1245
        %1247 = vrot.lane.b32.xlu0 %v203, 24
        %v1248 = vpop.permute.xlu0 %1247
        %1249 = vrot.lane.b32.xlu0 %v205, 24
        %v1250 = vpop.permute.xlu0 %1249
        %1251 = vrot.lane.b32.xlu0 %v206, 24
        %v1252 = vpop.permute.xlu0 %1251
        %1253 = vrot.lane.b32.xlu0 %v208, 24
        %v1254 = vpop.permute.xlu0 %1253
        %1255 = vrot.lane.b32.xlu0 %v209, 24
        %v1256 = vpop.permute.xlu0 %1255
        %1257 = vrot.lane.b32.xlu0 %v211, 24
        %v1258 = vpop.permute.xlu0 %1257
        %1259 = vrot.lane.b32.xlu0 %v212, 24
        %v1260 = vpop.permute.xlu0 %1259
        %1261 = vrot.lane.b32.xlu0 %v214, 24
        %v1262 = vpop.permute.xlu0 %1261
        %1263 = vrot.lane.b32.xlu0 %v215, 24
        %v1264 = vpop.permute.xlu0 %1263
        %1265 = vrot.lane.b32.xlu0 %v217, 24
        %v1266 = vpop.permute.xlu0 %1265
        %1267 = vrot.lane.b32.xlu0 %v218, 24
        %v1268 = vpop.permute.xlu0 %1267
        %1269 = vrot.lane.b32.xlu0 %v220, 24
        %v1270 = vpop.permute.xlu0 %1269
        %1271 = vrot.lane.b32.xlu0 %v221, 24
        %v1272 = vpop.permute.xlu0 %1271
        %1273 = vrot.lane.b32.xlu0 %v223, 24
        %v1274 = vpop.permute.xlu0 %1273
        %1275 = vrot.lane.b32.xlu0 %v224, 24
        %v1276 = vpop.permute.xlu0 %1275
        %1277 = vrot.lane.b32.xlu0 %v226, 24
        %v1278 = vpop.permute.xlu0 %1277
        %1279 = vrot.lane.b32.xlu0 %v227, 24
        %v1280 = vpop.permute.xlu0 %1279
        %1281 = vrot.lane.b32.xlu0 %v229, 24
        %v1282 = vpop.permute.xlu0 %1281
        %1283 = vrot.lane.b32.xlu0 %v230, 24
        %v1284 = vpop.permute.xlu0 %1283
        %1285 = vrot.lane.b32.xlu0 %v232, 24
        %v1286 = vpop.permute.xlu0 %1285
        %1287 = vrot.lane.b32.xlu0 %v233, 24
        %v1288 = vpop.permute.xlu0 %1287
        %1289 = vrot.lane.b32.xlu0 %v235, 24
        %v1290 = vpop.permute.xlu0 %1289
        %1291 = vrot.lane.b32.xlu0 %v236, 24
        %v1292 = vpop.permute.xlu0 %1291
        %1293 = vrot.lane.b32.xlu0 %v238, 24
        %v1294 = vpop.permute.xlu0 %1293
        %1295 = vrot.lane.b32.xlu0 %v239, 24
        %v1296 = vpop.permute.xlu0 %1295
        %1297 = vrot.lane.b32.xlu0 %v241, 24
        %v1298 = vpop.permute.xlu0 %1297
        %1299 = vrot.lane.b32.xlu0 %v242, 24
        %v1300 = vpop.permute.xlu0 %1299
        %1301 = vrot.lane.b32.xlu0 %v244, 24
        %v1302 = vpop.permute.xlu0 %1301
        %1303 = vrot.lane.b32.xlu0 %v245, 24
        %v1304 = vpop.permute.xlu0 %1303
        %1305 = vrot.lane.b32.xlu0 %v247, 24
        %v1306 = vpop.permute.xlu0 %1305
        %1307 = vrot.lane.b32.xlu0 %v248, 24
        %v1308 = vpop.permute.xlu0 %1307
        %vm1341 = vcmask 228544
        %1342 = vst.msk [vmem:[#allocation2] sm:$0xff] %vm1341, %v1246
        %1343 = vst.msk [vmem:[#allocation2 + $0x8] sm:$0xff] %vm1341, %v1248
        %1344 = vst.msk [vmem:[#allocation2 + $0x10] sm:$0xff] %vm1341, %v1250
        %1345 = vst.msk [vmem:[#allocation2 + $0x18] sm:$0xff] %vm1341, %v1252
        %1346 = vst.msk [vmem:[#allocation2 + $0x20] sm:$0xff] %vm1341, %v1254
        %1347 = vst.msk [vmem:[#allocation2 + $0x28] sm:$0xff] %vm1341, %v1256
        %1348 = vst.msk [vmem:[#allocation2 + $0x30] sm:$0xff] %vm1341, %v1258
        %1349 = vst.msk [vmem:[#allocation2 + $0x38] sm:$0xff] %vm1341, %v1260
        %1350 = vst.msk [vmem:[#allocation2 + $0x40] sm:$0xff] %vm1341, %v1262
        %1351 = vst.msk [vmem:[#allocation2 + $0x48] sm:$0xff] %vm1341, %v1264
        %1352 = vst.msk [vmem:[#allocation2 + $0x50] sm:$0xff] %vm1341, %v1266
        %1353 = vst.msk [vmem:[#allocation2 + $0x58] sm:$0xff] %vm1341, %v1268
        %1354 = vst.msk [vmem:[#allocation2 + $0x60] sm:$0xff] %vm1341, %v1270
        %1355 = vst.msk [vmem:[#allocation2 + $0x68] sm:$0xff] %vm1341, %v1272
        %1356 = vst.msk [vmem:[#allocation2 + $0x70] sm:$0xff] %vm1341, %v1274
        %1357 = vst.msk [vmem:[#allocation2 + $0x78] sm:$0xff] %vm1341, %v1276
        %1358 = vst.msk [vmem:[#allocation2 + $0x80] sm:$0xff] %vm1341, %v1278
        %1359 = vst.msk [vmem:[#allocation2 + $0x88] sm:$0xff] %vm1341, %v1280
        %1360 = vst.msk [vmem:[#allocation2 + $0x90] sm:$0xff] %vm1341, %v1282
        %1361 = vst.msk [vmem:[#allocation2 + $0x98] sm:$0xff] %vm1341, %v1284
        %1362 = vst.msk [vmem:[#allocation2 + $0xa0] sm:$0xff] %vm1341, %v1286
        %1363 = vst.msk [vmem:[#allocation2 + $0xa8] sm:$0xff] %vm1341, %v1288
        %1364 = vst.msk [vmem:[#allocation2 + $0xb0] sm:$0xff] %vm1341, %v1290
        %1365 = vst.msk [vmem:[#allocation2 + $0xb8] sm:$0xff] %vm1341, %v1292
        %1366 = vst.msk [vmem:[#allocation2 + $0xc0] sm:$0xff] %vm1341, %v1294
        %1367 = vst.msk [vmem:[#allocation2 + $0xc8] sm:$0xff] %vm1341, %v1296
        %1368 = vst.msk [vmem:[#allocation2 + $0xd0] sm:$0xff] %vm1341, %v1298
        %1369 = vst.msk [vmem:[#allocation2 + $0xd8] sm:$0xff] %vm1341, %v1300
        %1370 = vst.msk [vmem:[#allocation2 + $0xe0] sm:$0xff] %vm1341, %v1302
        %1371 = vst.msk [vmem:[#allocation2 + $0xe8] sm:$0xff] %vm1341, %v1304
        %1372 = vst.msk [vmem:[#allocation2 + $0xf0] sm:$0xff] %vm1341, %v1306
        %1373 = vst.msk [vmem:[#allocation2 + $0xf8] sm:$0xff] %vm1341, %v1308
        %1375 = vrot.lane.b32.xlu0 %v202, 28
        %v1376 = vpop.permute.xlu0 %1375
        %1377 = vrot.lane.b32.xlu0 %v203, 28
        %v1378 = vpop.permute.xlu0 %1377
        %1379 = vrot.lane.b32.xlu0 %v204, 28
        %v1380 = vpop.permute.xlu0 %1379
        %1381 = vrot.lane.b32.xlu0 %v205, 28
        %v1382 = vpop.permute.xlu0 %1381
        %1383 = vrot.lane.b32.xlu0 %v206, 28
        %v1384 = vpop.permute.xlu0 %1383
        %1385 = vrot.lane.b32.xlu0 %v207, 28
        %v1386 = vpop.permute.xlu0 %1385
        %1387 = vrot.lane.b32.xlu0 %v208, 28
        %v1388 = vpop.permute.xlu0 %1387
        %1389 = vrot.lane.b32.xlu0 %v209, 28
        %v1390 = vpop.permute.xlu0 %1389
        %1391 = vrot.lane.b32.xlu0 %v210, 28
        %v1392 = vpop.permute.xlu0 %1391
        %1393 = vrot.lane.b32.xlu0 %v211, 28
        %v1394 = vpop.permute.xlu0 %1393
        %1395 = vrot.lane.b32.xlu0 %v212, 28
        %v1396 = vpop.permute.xlu0 %1395
        %1397 = vrot.lane.b32.xlu0 %v213, 28
        %v1398 = vpop.permute.xlu0 %1397
        %1399 = vrot.lane.b32.xlu0 %v214, 28
        %v1400 = vpop.permute.xlu0 %1399
        %1401 = vrot.lane.b32.xlu0 %v215, 28
        %v1402 = vpop.permute.xlu0 %1401
        %1403 = vrot.lane.b32.xlu0 %v216, 28
        %v1404 = vpop.permute.xlu0 %1403
        %1405 = vrot.lane.b32.xlu0 %v217, 28
        %v1406 = vpop.permute.xlu0 %1405
        %1407 = vrot.lane.b32.xlu0 %v218, 28
        %v1408 = vpop.permute.xlu0 %1407
        %1409 = vrot.lane.b32.xlu0 %v219, 28
        %v1410 = vpop.permute.xlu0 %1409
        %1411 = vrot.lane.b32.xlu0 %v220, 28
        %v1412 = vpop.permute.xlu0 %1411
        %1413 = vrot.lane.b32.xlu0 %v221, 28
        %v1414 = vpop.permute.xlu0 %1413
        %1415 = vrot.lane.b32.xlu0 %v222, 28
        %v1416 = vpop.permute.xlu0 %1415
        %1417 = vrot.lane.b32.xlu0 %v223, 28
        %v1418 = vpop.permute.xlu0 %1417
        %1419 = vrot.lane.b32.xlu0 %v224, 28
        %v1420 = vpop.permute.xlu0 %1419
        %1421 = vrot.lane.b32.xlu0 %v225, 28
        %v1422 = vpop.permute.xlu0 %1421
        %1423 = vrot.lane.b32.xlu0 %v226, 28
        %v1424 = vpop.permute.xlu0 %1423
        %1425 = vrot.lane.b32.xlu0 %v227, 28
        %v1426 = vpop.permute.xlu0 %1425
        %1427 = vrot.lane.b32.xlu0 %v228, 28
        %v1428 = vpop.permute.xlu0 %1427
        %1429 = vrot.lane.b32.xlu0 %v229, 28
        %v1430 = vpop.permute.xlu0 %1429
        %1431 = vrot.lane.b32.xlu0 %v230, 28
        %v1432 = vpop.permute.xlu0 %1431
        %1433 = vrot.lane.b32.xlu0 %v231, 28
        %v1434 = vpop.permute.xlu0 %1433
        %1435 = vrot.lane.b32.xlu0 %v232, 28
        %v1436 = vpop.permute.xlu0 %1435
        %1437 = vrot.lane.b32.xlu0 %v233, 28
        %v1438 = vpop.permute.xlu0 %1437
        %1439 = vrot.lane.b32.xlu0 %v234, 28
        %v1440 = vpop.permute.xlu0 %1439
        %1441 = vrot.lane.b32.xlu0 %v235, 28
        %v1442 = vpop.permute.xlu0 %1441
        %1443 = vrot.lane.b32.xlu0 %v236, 28
        %v1444 = vpop.permute.xlu0 %1443
        %1445 = vrot.lane.b32.xlu0 %v237, 28
        %v1446 = vpop.permute.xlu0 %1445
        %1447 = vrot.lane.b32.xlu0 %v238, 28
        %v1448 = vpop.permute.xlu0 %1447
        %1449 = vrot.lane.b32.xlu0 %v239, 28
        %v1450 = vpop.permute.xlu0 %1449
        %1451 = vrot.lane.b32.xlu0 %v240, 28
        %v1452 = vpop.permute.xlu0 %1451
        %1453 = vrot.lane.b32.xlu0 %v241, 28
        %v1454 = vpop.permute.xlu0 %1453
        %1455 = vrot.lane.b32.xlu0 %v242, 28
        %v1456 = vpop.permute.xlu0 %1455
        %1457 = vrot.lane.b32.xlu0 %v243, 28
        %v1458 = vpop.permute.xlu0 %1457
        %1459 = vrot.lane.b32.xlu0 %v244, 28
        %v1460 = vpop.permute.xlu0 %1459
        %1461 = vrot.lane.b32.xlu0 %v245, 28
        %v1462 = vpop.permute.xlu0 %1461
        %1463 = vrot.lane.b32.xlu0 %v246, 28
        %v1464 = vpop.permute.xlu0 %1463
        %1465 = vrot.lane.b32.xlu0 %v247, 28
        %v1466 = vpop.permute.xlu0 %1465
        %1467 = vrot.lane.b32.xlu0 %v248, 28
        %v1468 = vpop.permute.xlu0 %1467
        %1469 = vrot.lane.b32.xlu0 %v249, 28
        %v1470 = vpop.permute.xlu0 %1469
        %vm1519 = vcmask 261345
        %1520 = vst.msk [vmem:[#allocation2 - $0x1] sm:$0xfe] %vm1519, %v1376
        %vm1521 = vcmask 261344
        %1522 = vst.msk [vmem:[#allocation2 + $0x7] sm:$0xff] %vm1521, %v1378
        %vm1523 = vcmask 254176
        %1524 = vst.msk [vmem:[#allocation2 + $0xf] sm:$0x1] %vm1523, %v1380
        %1525 = vst.msk [vmem:[#allocation2 + $0xf] sm:$0xfe] %vm1519, %v1382
        %1526 = vst.msk [vmem:[#allocation2 + $0x17] sm:$0xff] %vm1521, %v1384
        %1527 = vst.msk [vmem:[#allocation2 + $0x1f] sm:$0x1] %vm1523, %v1386
        %1528 = vst.msk [vmem:[#allocation2 + $0x1f] sm:$0xfe] %vm1519, %v1388
        %1529 = vst.msk [vmem:[#allocation2 + $0x27] sm:$0xff] %vm1521, %v1390
        %1530 = vst.msk [vmem:[#allocation2 + $0x2f] sm:$0x1] %vm1523, %v1392
        %1531 = vst.msk [vmem:[#allocation2 + $0x2f] sm:$0xfe] %vm1519, %v1394
        %1532 = vst.msk [vmem:[#allocation2 + $0x37] sm:$0xff] %vm1521, %v1396
        %1533 = vst.msk [vmem:[#allocation2 + $0x3f] sm:$0x1] %vm1523, %v1398
        %1534 = vst.msk [vmem:[#allocation2 + $0x3f] sm:$0xfe] %vm1519, %v1400
        %1535 = vst.msk [vmem:[#allocation2 + $0x47] sm:$0xff] %vm1521, %v1402
        %1536 = vst.msk [vmem:[#allocation2 + $0x4f] sm:$0x1] %vm1523, %v1404
        %1537 = vst.msk [vmem:[#allocation2 + $0x4f] sm:$0xfe] %vm1519, %v1406
        %1538 = vst.msk [vmem:[#allocation2 + $0x57] sm:$0xff] %vm1521, %v1408
        %1539 = vst.msk [vmem:[#allocation2 + $0x5f] sm:$0x1] %vm1523, %v1410
        %1540 = vst.msk [vmem:[#allocation2 + $0x5f] sm:$0xfe] %vm1519, %v1412
        %1541 = vst.msk [vmem:[#allocation2 + $0x67] sm:$0xff] %vm1521, %v1414
        %1542 = vst.msk [vmem:[#allocation2 + $0x6f] sm:$0x1] %vm1523, %v1416
        %1543 = vst.msk [vmem:[#allocation2 + $0x6f] sm:$0xfe] %vm1519, %v1418
        %1544 = vst.msk [vmem:[#allocation2 + $0x77] sm:$0xff] %vm1521, %v1420
        %1545 = vst.msk [vmem:[#allocation2 + $0x7f] sm:$0x1] %vm1523, %v1422
        %1546 = vst.msk [vmem:[#allocation2 + $0x7f] sm:$0xfe] %vm1519, %v1424
        %1547 = vst.msk [vmem:[#allocation2 + $0x87] sm:$0xff] %vm1521, %v1426
        %1548 = vst.msk [vmem:[#allocation2 + $0x8f] sm:$0x1] %vm1523, %v1428
        %1549 = vst.msk [vmem:[#allocation2 + $0x8f] sm:$0xfe] %vm1519, %v1430
        %1550 = vst.msk [vmem:[#allocation2 + $0x97] sm:$0xff] %vm1521, %v1432
        %1551 = vst.msk [vmem:[#allocation2 + $0x9f] sm:$0x1] %vm1523, %v1434
        %1552 = vst.msk [vmem:[#allocation2 + $0x9f] sm:$0xfe] %vm1519, %v1436
        %1553 = vst.msk [vmem:[#allocation2 + $0xa7] sm:$0xff] %vm1521, %v1438
        %1554 = vst.msk [vmem:[#allocation2 + $0xaf] sm:$0x1] %vm1523, %v1440
        %1555 = vst.msk [vmem:[#allocation2 + $0xaf] sm:$0xfe] %vm1519, %v1442
        %1556 = vst.msk [vmem:[#allocation2 + $0xb7] sm:$0xff] %vm1521, %v1444
        %1557 = vst.msk [vmem:[#allocation2 + $0xbf] sm:$0x1] %vm1523, %v1446
        %1558 = vst.msk [vmem:[#allocation2 + $0xbf] sm:$0xfe] %vm1519, %v1448
        %1559 = vst.msk [vmem:[#allocation2 + $0xc7] sm:$0xff] %vm1521, %v1450
        %1560 = vst.msk [vmem:[#allocation2 + $0xcf] sm:$0x1] %vm1523, %v1452
        %1561 = vst.msk [vmem:[#allocation2 + $0xcf] sm:$0xfe] %vm1519, %v1454
        %1562 = vst.msk [vmem:[#allocation2 + $0xd7] sm:$0xff] %vm1521, %v1456
        %1563 = vst.msk [vmem:[#allocation2 + $0xdf] sm:$0x1] %vm1523, %v1458
        %1564 = vst.msk [vmem:[#allocation2 + $0xdf] sm:$0xfe] %vm1519, %v1460
        %1565 = vst.msk [vmem:[#allocation2 + $0xe7] sm:$0xff] %vm1521, %v1462
        %1566 = vst.msk [vmem:[#allocation2 + $0xef] sm:$0x1] %vm1523, %v1464
        %1567 = vst.msk [vmem:[#allocation2 + $0xef] sm:$0xfe] %vm1519, %v1466
        %1568 = vst.msk [vmem:[#allocation2 + $0xf7] sm:$0xff] %vm1521, %v1468
        %1569 = vst.msk [vmem:[#allocation2 + $0xff] sm:$0x1] %vm1523, %v1470
        %1570 = vrot.lane.b32.xlu0 %v202, 32
        %v1571 = vpop.permute.xlu0 %1570
        %1572 = vrot.lane.b32.xlu0 %v203, 32
        %v1573 = vpop.permute.xlu0 %1572
        %1574 = vrot.lane.b32.xlu0 %v204, 32
        %v1575 = vpop.permute.xlu0 %1574
        %1576 = vrot.lane.b32.xlu0 %v205, 32
        %v1577 = vpop.permute.xlu0 %1576
        %1578 = vrot.lane.b32.xlu0 %v206, 32
        %v1579 = vpop.permute.xlu0 %1578
        %1580 = vrot.lane.b32.xlu0 %v207, 32
        %v1581 = vpop.permute.xlu0 %1580
        %1582 = vrot.lane.b32.xlu0 %v208, 32
        %v1583 = vpop.permute.xlu0 %1582
        %1584 = vrot.lane.b32.xlu0 %v209, 32
        %v1585 = vpop.permute.xlu0 %1584
        %1586 = vrot.lane.b32.xlu0 %v210, 32
        %v1587 = vpop.permute.xlu0 %1586
        %1588 = vrot.lane.b32.xlu0 %v211, 32
        %v1589 = vpop.permute.xlu0 %1588
        %1590 = vrot.lane.b32.xlu0 %v212, 32
        %v1591 = vpop.permute.xlu0 %1590
        %1592 = vrot.lane.b32.xlu0 %v213, 32
        %v1593 = vpop.permute.xlu0 %1592
        %1594 = vrot.lane.b32.xlu0 %v214, 32
        %v1595 = vpop.permute.xlu0 %1594
        %1596 = vrot.lane.b32.xlu0 %v215, 32
        %v1597 = vpop.permute.xlu0 %1596
        %1598 = vrot.lane.b32.xlu0 %v216, 32
        %v1599 = vpop.permute.xlu0 %1598
        %1600 = vrot.lane.b32.xlu0 %v217, 32
        %v1601 = vpop.permute.xlu0 %1600
        %1602 = vrot.lane.b32.xlu0 %v218, 32
        %v1603 = vpop.permute.xlu0 %1602
        %1604 = vrot.lane.b32.xlu0 %v219, 32
        %v1605 = vpop.permute.xlu0 %1604
        %1606 = vrot.lane.b32.xlu0 %v220, 32
        %v1607 = vpop.permute.xlu0 %1606
        %1608 = vrot.lane.b32.xlu0 %v221, 32
        %v1609 = vpop.permute.xlu0 %1608
        %1610 = vrot.lane.b32.xlu0 %v222, 32
        %v1611 = vpop.permute.xlu0 %1610
        %1612 = vrot.lane.b32.xlu0 %v223, 32
        %v1613 = vpop.permute.xlu0 %1612
        %1614 = vrot.lane.b32.xlu0 %v224, 32
        %v1615 = vpop.permute.xlu0 %1614
        %1616 = vrot.lane.b32.xlu0 %v225, 32
        %v1617 = vpop.permute.xlu0 %1616
        %1618 = vrot.lane.b32.xlu0 %v226, 32
        %v1619 = vpop.permute.xlu0 %1618
        %1620 = vrot.lane.b32.xlu0 %v227, 32
        %v1621 = vpop.permute.xlu0 %1620
        %1622 = vrot.lane.b32.xlu0 %v228, 32
        %v1623 = vpop.permute.xlu0 %1622
        %1624 = vrot.lane.b32.xlu0 %v229, 32
        %v1625 = vpop.permute.xlu0 %1624
        %1626 = vrot.lane.b32.xlu0 %v230, 32
        %v1627 = vpop.permute.xlu0 %1626
        %1628 = vrot.lane.b32.xlu0 %v231, 32
        %v1629 = vpop.permute.xlu0 %1628
        %1630 = vrot.lane.b32.xlu0 %v232, 32
        %v1631 = vpop.permute.xlu0 %1630
        %1632 = vrot.lane.b32.xlu0 %v233, 32
        %v1633 = vpop.permute.xlu0 %1632
        %1634 = vrot.lane.b32.xlu0 %v234, 32
        %v1635 = vpop.permute.xlu0 %1634
        %1636 = vrot.lane.b32.xlu0 %v235, 32
        %v1637 = vpop.permute.xlu0 %1636
        %1638 = vrot.lane.b32.xlu0 %v236, 32
        %v1639 = vpop.permute.xlu0 %1638
        %1640 = vrot.lane.b32.xlu0 %v237, 32
        %v1641 = vpop.permute.xlu0 %1640
        %1642 = vrot.lane.b32.xlu0 %v238, 32
        %v1643 = vpop.permute.xlu0 %1642
        %1644 = vrot.lane.b32.xlu0 %v239, 32
        %v1645 = vpop.permute.xlu0 %1644
        %1646 = vrot.lane.b32.xlu0 %v240, 32
        %v1647 = vpop.permute.xlu0 %1646
        %1648 = vrot.lane.b32.xlu0 %v241, 32
        %v1649 = vpop.permute.xlu0 %1648
        %1650 = vrot.lane.b32.xlu0 %v242, 32
        %v1651 = vpop.permute.xlu0 %1650
        %1652 = vrot.lane.b32.xlu0 %v243, 32
        %v1653 = vpop.permute.xlu0 %1652
        %1654 = vrot.lane.b32.xlu0 %v244, 32
        %v1655 = vpop.permute.xlu0 %1654
        %1656 = vrot.lane.b32.xlu0 %v245, 32
        %v1657 = vpop.permute.xlu0 %1656
        %1658 = vrot.lane.b32.xlu0 %v246, 32
        %v1659 = vpop.permute.xlu0 %1658
        %1660 = vrot.lane.b32.xlu0 %v247, 32
        %v1661 = vpop.permute.xlu0 %1660
        %1662 = vrot.lane.b32.xlu0 %v248, 32
        %v1663 = vpop.permute.xlu0 %1662
        %1664 = vrot.lane.b32.xlu0 %v249, 32
        %v1665 = vpop.permute.xlu0 %1664
        %vm1714 = vcmask 294146
        %1715 = vst.msk [vmem:[#allocation2 - $0x2] sm:$0xfc] %vm1714, %v1571
        %vm1716 = vcmask 294144
        %1717 = vst.msk [vmem:[#allocation2 + $0x6] sm:$0xff] %vm1716, %v1573
        %vm1718 = vcmask 288000
        %1719 = vst.msk [vmem:[#allocation2 + $0xe] sm:$0x3] %vm1718, %v1575
        %1720 = vst.msk [vmem:[#allocation2 + $0xe] sm:$0xfc] %vm1714, %v1577
        %1721 = vst.msk [vmem:[#allocation2 + $0x16] sm:$0xff] %vm1716, %v1579
        %1722 = vst.msk [vmem:[#allocation2 + $0x1e] sm:$0x3] %vm1718, %v1581
        %1723 = vst.msk [vmem:[#allocation2 + $0x1e] sm:$0xfc] %vm1714, %v1583
        %1724 = vst.msk [vmem:[#allocation2 + $0x26] sm:$0xff] %vm1716, %v1585
        %1725 = vst.msk [vmem:[#allocation2 + $0x2e] sm:$0x3] %vm1718, %v1587
        %1726 = vst.msk [vmem:[#allocation2 + $0x2e] sm:$0xfc] %vm1714, %v1589
        %1727 = vst.msk [vmem:[#allocation2 + $0x36] sm:$0xff] %vm1716, %v1591
        %1728 = vst.msk [vmem:[#allocation2 + $0x3e] sm:$0x3] %vm1718, %v1593
        %1729 = vst.msk [vmem:[#allocation2 + $0x3e] sm:$0xfc] %vm1714, %v1595
        %1730 = vst.msk [vmem:[#allocation2 + $0x46] sm:$0xff] %vm1716, %v1597
        %1731 = vst.msk [vmem:[#allocation2 + $0x4e] sm:$0x3] %vm1718, %v1599
        %1732 = vst.msk [vmem:[#allocation2 + $0x4e] sm:$0xfc] %vm1714, %v1601
        %1733 = vst.msk [vmem:[#allocation2 + $0x56] sm:$0xff] %vm1716, %v1603
        %1734 = vst.msk [vmem:[#allocation2 + $0x5e] sm:$0x3] %vm1718, %v1605
        %1735 = vst.msk [vmem:[#allocation2 + $0x5e] sm:$0xfc] %vm1714, %v1607
        %1736 = vst.msk [vmem:[#allocation2 + $0x66] sm:$0xff] %vm1716, %v1609
        %1737 = vst.msk [vmem:[#allocation2 + $0x6e] sm:$0x3] %vm1718, %v1611
        %1738 = vst.msk [vmem:[#allocation2 + $0x6e] sm:$0xfc] %vm1714, %v1613
        %1739 = vst.msk [vmem:[#allocation2 + $0x76] sm:$0xff] %vm1716, %v1615
        %1740 = vst.msk [vmem:[#allocation2 + $0x7e] sm:$0x3] %vm1718, %v1617
        %1741 = vst.msk [vmem:[#allocation2 + $0x7e] sm:$0xfc] %vm1714, %v1619
        %1742 = vst.msk [vmem:[#allocation2 + $0x86] sm:$0xff] %vm1716, %v1621
        %1743 = vst.msk [vmem:[#allocation2 + $0x8e] sm:$0x3] %vm1718, %v1623
        %1744 = vst.msk [vmem:[#allocation2 + $0x8e] sm:$0xfc] %vm1714, %v1625
        %1745 = vst.msk [vmem:[#allocation2 + $0x96] sm:$0xff] %vm1716, %v1627
        %1746 = vst.msk [vmem:[#allocation2 + $0x9e] sm:$0x3] %vm1718, %v1629
        %1747 = vst.msk [vmem:[#allocation2 + $0x9e] sm:$0xfc] %vm1714, %v1631
        %1748 = vst.msk [vmem:[#allocation2 + $0xa6] sm:$0xff] %vm1716, %v1633
        %1749 = vst.msk [vmem:[#allocation2 + $0xae] sm:$0x3] %vm1718, %v1635
        %1750 = vst.msk [vmem:[#allocation2 + $0xae] sm:$0xfc] %vm1714, %v1637
        %1751 = vst.msk [vmem:[#allocation2 + $0xb6] sm:$0xff] %vm1716, %v1639
        %1752 = vst.msk [vmem:[#allocation2 + $0xbe] sm:$0x3] %vm1718, %v1641
        %1753 = vst.msk [vmem:[#allocation2 + $0xbe] sm:$0xfc] %vm1714, %v1643
        %1754 = vst.msk [vmem:[#allocation2 + $0xc6] sm:$0xff] %vm1716, %v1645
        %1755 = vst.msk [vmem:[#allocation2 + $0xce] sm:$0x3] %vm1718, %v1647
        %1756 = vst.msk [vmem:[#allocation2 + $0xce] sm:$0xfc] %vm1714, %v1649
        %1757 = vst.msk [vmem:[#allocation2 + $0xd6] sm:$0xff] %vm1716, %v1651
        %1758 = vst.msk [vmem:[#allocation2 + $0xde] sm:$0x3] %vm1718, %v1653
        %1759 = vst.msk [vmem:[#allocation2 + $0xde] sm:$0xfc] %vm1714, %v1655
        %1760 = vst.msk [vmem:[#allocation2 + $0xe6] sm:$0xff] %vm1716, %v1657
        %1761 = vst.msk [vmem:[#allocation2 + $0xee] sm:$0x3] %vm1718, %v1659
        %1762 = vst.msk [vmem:[#allocation2 + $0xee] sm:$0xfc] %vm1714, %v1661
        %1763 = vst.msk [vmem:[#allocation2 + $0xf6] sm:$0xff] %vm1716, %v1663
        %1764 = vst.msk [vmem:[#allocation2 + $0xfe] sm:$0x3] %vm1718, %v1665
        %v1765 = vld [vmem:[#allocation2] sm:$0xff]
        %v1766 = vld [vmem:[#allocation2 + $0x8] sm:$0xff]
        %v1767 = vld [vmem:[#allocation2 + $0x10] sm:$0xff]
        %v1768 = vld [vmem:[#allocation2 + $0x18] sm:$0xff]
        %v1769 = vld [vmem:[#allocation2 + $0x20] sm:$0xff]
        %v1770 = vld [vmem:[#allocation2 + $0x28] sm:$0xff]
        %v1771 = vld [vmem:[#allocation2 + $0x30] sm:$0xff]
        %v1772 = vld [vmem:[#allocation2 + $0x38] sm:$0xff]
        %v1773 = vld [vmem:[#allocation2 + $0x40] sm:$0xff]
        %v1774 = vld [vmem:[#allocation2 + $0x48] sm:$0xff]
        %v1775 = vld [vmem:[#allocation2 + $0x50] sm:$0xff]
        %v1776 = vld [vmem:[#allocation2 + $0x58] sm:$0xff]
        %v1777 = vld [vmem:[#allocation2 + $0x60] sm:$0xff]
        %v1778 = vld [vmem:[#allocation2 + $0x68] sm:$0xff]
        %v1779 = vld [vmem:[#allocation2 + $0x70] sm:$0xff]
        %v1780 = vld [vmem:[#allocation2 + $0x78] sm:$0xff]
        %v1781 = vld [vmem:[#allocation2 + $0x80] sm:$0xff]
        %v1782 = vld [vmem:[#allocation2 + $0x88] sm:$0xff]
        %v1783 = vld [vmem:[#allocation2 + $0x90] sm:$0xff]
        %v1784 = vld [vmem:[#allocation2 + $0x98] sm:$0xff]
        %v1785 = vld [vmem:[#allocation2 + $0xa0] sm:$0xff]
        %v1786 = vld [vmem:[#allocation2 + $0xa8] sm:$0xff]
        %v1787 = vld [vmem:[#allocation2 + $0xb0] sm:$0xff]
        %v1788 = vld [vmem:[#allocation2 + $0xb8] sm:$0xff]
        %v1789 = vld [vmem:[#allocation2 + $0xc0] sm:$0xff]
        %v1790 = vld [vmem:[#allocation2 + $0xc8] sm:$0xff]
        %v1791 = vld [vmem:[#allocation2 + $0xd0] sm:$0xff]
        %v1792 = vld [vmem:[#allocation2 + $0xd8] sm:$0xff]
        %v1793 = vld [vmem:[#allocation2 + $0xe0] sm:$0xff]
        %v1794 = vld [vmem:[#allocation2 + $0xe8] sm:$0xff]
        %v1795 = vld [vmem:[#allocation2 + $0xf0] sm:$0xff]
        %v1796 = vld [vmem:[#allocation2 + $0xf8] sm:$0xff]
        %v1797 = vld [vmem:[%s1] sm:$0xff]
        %v1798 = vld [vmem:[%s1 + $0x8] sm:$0xff]
        %v1799 = vld [vmem:[%s1 + $0x10] sm:$0xff]
        %v1800 = vld [vmem:[%s1 + $0x18] sm:$0xff]
        %v1801 = vld [vmem:[%s1 + $0x20] sm:$0xf]
        %vm1802 = vcmask 293888
        %v1804 = vsel %vm1802, %v1765, 0
        %v1807 = vsel %vm1802, %v1766, 0
        %v1810 = vsel %vm1802, %v1767, 0
        %v1813 = vsel %vm1802, %v1768, 0
        %v1816 = vsel %vm1802, %v1769, 0
        %v1819 = vsel %vm1802, %v1770, 0
        %v1822 = vsel %vm1802, %v1771, 0
        %v1825 = vsel %vm1802, %v1772, 0
        %v1828 = vsel %vm1802, %v1773, 0
        %v1831 = vsel %vm1802, %v1774, 0
        %v1834 = vsel %vm1802, %v1775, 0
        %v1837 = vsel %vm1802, %v1776, 0
        %v1840 = vsel %vm1802, %v1777, 0
        %v1843 = vsel %vm1802, %v1778, 0
        %v1846 = vsel %vm1802, %v1779, 0
        %v1849 = vsel %vm1802, %v1780, 0
        %v1852 = vsel %vm1802, %v1781, 0
        %v1855 = vsel %vm1802, %v1782, 0
        %v1858 = vsel %vm1802, %v1783, 0
        %v1861 = vsel %vm1802, %v1784, 0
        %v1864 = vsel %vm1802, %v1785, 0
        %v1867 = vsel %vm1802, %v1786, 0
        %v1870 = vsel %vm1802, %v1787, 0
        %v1873 = vsel %vm1802, %v1788, 0
        %v1876 = vsel %vm1802, %v1789, 0
        %v1879 = vsel %vm1802, %v1790, 0
        %v1882 = vsel %vm1802, %v1791, 0
        %v1885 = vsel %vm1802, %v1792, 0
        %v1888 = vsel %vm1802, %v1793, 0
        %v1891 = vsel %vm1802, %v1794, 0
        %v1894 = vsel %vm1802, %v1795, 0
        %v1897 = vsel %vm1802, %v1796, 0
        %vm1899 = vcmask 1043456
        %v1901 = vsel %vm1899, %v1801, 0
        %1903 = vmatpush.msra.mxu0 0.0
        %1904 = vmatpush.msra.mxu0 0.0
        %1905 = vmatpush.msra.mxu0 0.0
        %1906 = vmatpush.msra.mxu0 0.0
        %1907 = vmatpush.msra.mxu0 0.0
        %1908 = vmatpush.msra.mxu0 0.0
        %1909 = vmatpush.msra.mxu0 0.0
        %1910 = vmatpush.msra.mxu0 0.0
        %1911 = vmatpush.msra.mxu0 0.0
        %1912 = vmatpush.msra.mxu0 0.0
        %1913 = vmatpush.msra.mxu0 0.0
        %1914 = vmatpush.msra.mxu0 %v1901
        %1915 = vmatpush.msra.mxu0 %v1800
        %1916 = vmatpush.msra.mxu0 %v1799
        %1917 = vmatpush.msra.mxu0 %v1798
        %1918 = vmatpush.msra.mxu0 %v1797
        %1919 = vmatmul.f32.gmra.mxu0 %v1804
        %v1920 = vpop.f32.mrf.mxu0
        %v1921 = vadd.f32 0.0, %v1920
        %1922 = vmatmul.f32.gmra.mxu0 %v1807
        %v1923 = vpop.f32.mrf.mxu0
        %v1924 = vadd.f32 0.0, %v1923
        %1925 = vmatmul.f32.gmra.mxu0 %v1810
        %v1926 = vpop.f32.mrf.mxu0
        %v1927 = vadd.f32 0.0, %v1926
        %1928 = vmatmul.f32.gmra.mxu0 %v1813
        %v1929 = vpop.f32.mrf.mxu0
        %v1930 = vadd.f32 0.0, %v1929
        %1931 = vmatmul.f32.gmra.mxu0 %v1816
        %v1932 = vpop.f32.mrf.mxu0
        %v1933 = vadd.f32 0.0, %v1932
        %1934 = vmatmul.f32.gmra.mxu0 %v1819
        %v1935 = vpop.f32.mrf.mxu0
        %v1936 = vadd.f32 0.0, %v1935
        %1937 = vmatmul.f32.gmra.mxu0 %v1822
        %v1938 = vpop.f32.mrf.mxu0
        %v1939 = vadd.f32 0.0, %v1938
        %1940 = vmatmul.f32.gmra.mxu0 %v1825
        %v1941 = vpop.f32.mrf.mxu0
        %v1942 = vadd.f32 0.0, %v1941
        %1943 = vmatmul.f32.gmra.mxu0 %v1828
        %v1944 = vpop.f32.mrf.mxu0
        %v1945 = vadd.f32 0.0, %v1944
        %1946 = vmatmul.f32.gmra.mxu0 %v1831
        %v1947 = vpop.f32.mrf.mxu0
        %v1948 = vadd.f32 0.0, %v1947
        %1949 = vmatmul.f32.gmra.mxu0 %v1834
        %v1950 = vpop.f32.mrf.mxu0
        %v1951 = vadd.f32 0.0, %v1950
        %1952 = vmatmul.f32.gmra.mxu0 %v1837
        %v1953 = vpop.f32.mrf.mxu0
        %v1954 = vadd.f32 0.0, %v1953
        %1955 = vmatmul.f32.gmra.mxu0 %v1840
        %v1956 = vpop.f32.mrf.mxu0
        %v1957 = vadd.f32 0.0, %v1956
        %1958 = vmatmul.f32.gmra.mxu0 %v1843
        %v1959 = vpop.f32.mrf.mxu0
        %v1960 = vadd.f32 0.0, %v1959
        %1961 = vmatmul.f32.gmra.mxu0 %v1846
        %v1962 = vpop.f32.mrf.mxu0
        %v1963 = vadd.f32 0.0, %v1962
        %1964 = vmatmul.f32.gmra.mxu0 %v1849
        %v1965 = vpop.f32.mrf.mxu0
        %v1966 = vadd.f32 0.0, %v1965
        %1967 = vmatmul.f32.gmra.mxu0 %v1852
        %v1968 = vpop.f32.mrf.mxu0
        %v1969 = vadd.f32 0.0, %v1968
        %1970 = vmatmul.f32.gmra.mxu0 %v1855
        %v1971 = vpop.f32.mrf.mxu0
        %v1972 = vadd.f32 0.0, %v1971
        %1973 = vmatmul.f32.gmra.mxu0 %v1858
        %v1974 = vpop.f32.mrf.mxu0
        %v1975 = vadd.f32 0.0, %v1974
        %1976 = vmatmul.f32.gmra.mxu0 %v1861
        %v1977 = vpop.f32.mrf.mxu0
        %v1978 = vadd.f32 0.0, %v1977
        %1979 = vmatmul.f32.gmra.mxu0 %v1864
        %v1980 = vpop.f32.mrf.mxu0
        %v1981 = vadd.f32 0.0, %v1980
        %1982 = vmatmul.f32.gmra.mxu0 %v1867
        %v1983 = vpop.f32.mrf.mxu0
        %v1984 = vadd.f32 0.0, %v1983
        %1985 = vmatmul.f32.gmra.mxu0 %v1870
        %v1986 = vpop.f32.mrf.mxu0
        %v1987 = vadd.f32 0.0, %v1986
        %1988 = vmatmul.f32.gmra.mxu0 %v1873
        %v1989 = vpop.f32.mrf.mxu0
        %v1990 = vadd.f32 0.0, %v1989
        %1991 = vmatmul.f32.gmra.mxu0 %v1876
        %v1992 = vpop.f32.mrf.mxu0
        %v1993 = vadd.f32 0.0, %v1992
        %1994 = vmatmul.f32.gmra.mxu0 %v1879
        %v1995 = vpop.f32.mrf.mxu0
        %v1996 = vadd.f32 0.0, %v1995
        %1997 = vmatmul.f32.gmra.mxu0 %v1882
        %v1998 = vpop.f32.mrf.mxu0
        %v1999 = vadd.f32 0.0, %v1998
        %2000 = vmatmul.f32.gmra.mxu0 %v1885
        %v2001 = vpop.f32.mrf.mxu0
        %v2002 = vadd.f32 0.0, %v2001
        %2003 = vmatmul.f32.gmra.mxu0 %v1888
        %v2004 = vpop.f32.mrf.mxu0
        %v2005 = vadd.f32 0.0, %v2004
        %2006 = vmatmul.f32.gmra.mxu0 %v1891
        %v2007 = vpop.f32.mrf.mxu0
        %v2008 = vadd.f32 0.0, %v2007
        %2009 = vmatmul.f32.gmra.mxu0 %v1894
        %v2010 = vpop.f32.mrf.mxu0
        %v2011 = vadd.f32 0.0, %v2010
        %2012 = vmatmul.f32.gmra.mxu0 %v1897
        %v2013 = vpop.f32.mrf.mxu0
        %v2014 = vadd.f32 0.0, %v2013
        %2015 = vdwg.mxu0
        %vm2016 = vcmask 64512
        %v2017 = vsel %vm2016, %v1921, 0.0
        %v2018 = vsel %vm2016, %v1924, 0.0
        %v2019 = vadd.f32 %v2017, %v2018
        %v2020 = vsel %vm2016, %v1927, 0.0
        %v2021 = vadd.f32 %v2019, %v2020
        %v2022 = vsel %vm2016, %v1930, 0.0
        %v2023 = vadd.f32 %v2021, %v2022
        %v2024 = vsel %vm2016, %v1933, 0.0
        %v2025 = vadd.f32 %v2023, %v2024
        %v2026 = vsel %vm2016, %v1936, 0.0
        %v2027 = vadd.f32 %v2025, %v2026
        %v2028 = vsel %vm2016, %v1939, 0.0
        %v2029 = vadd.f32 %v2027, %v2028
        %v2030 = vsel %vm2016, %v1942, 0.0
        %v2031 = vadd.f32 %v2029, %v2030
        %v2032 = vsel %vm2016, %v1945, 0.0
        %v2033 = vadd.f32 %v2031, %v2032
        %v2034 = vsel %vm2016, %v1948, 0.0
        %v2035 = vadd.f32 %v2033, %v2034
        %v2036 = vsel %vm2016, %v1951, 0.0
        %v2037 = vadd.f32 %v2035, %v2036
        %v2038 = vsel %vm2016, %v1954, 0.0
        %v2039 = vadd.f32 %v2037, %v2038
        %v2040 = vsel %vm2016, %v1957, 0.0
        %v2041 = vadd.f32 %v2039, %v2040
        %v2042 = vsel %vm2016, %v1960, 0.0
        %v2043 = vadd.f32 %v2041, %v2042
        %v2044 = vsel %vm2016, %v1963, 0.0
        %v2045 = vadd.f32 %v2043, %v2044
        %v2046 = vsel %vm2016, %v1966, 0.0
        %v2047 = vadd.f32 %v2045, %v2046
        %v2048 = vsel %vm2016, %v1969, 0.0
        %v2049 = vadd.f32 %v2047, %v2048
        %v2050 = vsel %vm2016, %v1972, 0.0
        %v2051 = vadd.f32 %v2049, %v2050
        %v2052 = vsel %vm2016, %v1975, 0.0
        %v2053 = vadd.f32 %v2051, %v2052
        %v2054 = vsel %vm2016, %v1978, 0.0
        %v2055 = vadd.f32 %v2053, %v2054
        %v2056 = vsel %vm2016, %v1981, 0.0
        %v2057 = vadd.f32 %v2055, %v2056
        %v2058 = vsel %vm2016, %v1984, 0.0
        %v2059 = vadd.f32 %v2057, %v2058
        %v2060 = vsel %vm2016, %v1987, 0.0
        %v2061 = vadd.f32 %v2059, %v2060
        %v2062 = vsel %vm2016, %v1990, 0.0
        %v2063 = vadd.f32 %v2061, %v2062
        %v2064 = vsel %vm2016, %v1993, 0.0
        %v2065 = vadd.f32 %v2063, %v2064
        %v2066 = vsel %vm2016, %v1996, 0.0
        %v2067 = vadd.f32 %v2065, %v2066
        %v2068 = vsel %vm2016, %v1999, 0.0
        %v2069 = vadd.f32 %v2067, %v2068
        %v2070 = vsel %vm2016, %v2002, 0.0
        %v2071 = vadd.f32 %v2069, %v2070
        %v2072 = vsel %vm2016, %v2005, 0.0
        %v2073 = vadd.f32 %v2071, %v2072
        %v2074 = vsel %vm2016, %v2008, 0.0
        %v2075 = vadd.f32 %v2073, %v2074
        %v2076 = vsel %vm2016, %v2011, 0.0
        %v2077 = vadd.f32 %v2075, %v2076
        %v2078 = vsel %vm2016, %v2014, 0.0
        %v2079 = vadd.f32 %v2077, %v2078
        %v2080 = vrot.slane %v2079, 4
        %v2081 = vadd.f32 %v2079, %v2080
        %v2082 = vrot.slane %v2081, 2
        %v2083 = vadd.f32 %v2081, %v2082
        %v2084 = vrot.slane %v2083, 1
        %v2085 = vadd.f32 %v2083, %v2084
        %v2086 = vmul.f32 %v1921, %v1921
        %v2087 = vmul.f32 %v1924, %v1924
        %v2088 = vmul.f32 %v1927, %v1927
        %v2089 = vmul.f32 %v1930, %v1930
        %v2090 = vmul.f32 %v1933, %v1933
        %v2091 = vmul.f32 %v1936, %v1936
        %v2092 = vmul.f32 %v1939, %v1939
        %v2093 = vmul.f32 %v1942, %v1942
        %v2094 = vmul.f32 %v1945, %v1945
        %v2095 = vmul.f32 %v1948, %v1948
        %v2096 = vmul.f32 %v1951, %v1951
        %v2097 = vmul.f32 %v1954, %v1954
        %v2098 = vmul.f32 %v1957, %v1957
        %v2099 = vmul.f32 %v1960, %v1960
        %v2100 = vmul.f32 %v1963, %v1963
        %v2101 = vmul.f32 %v1966, %v1966
        %v2102 = vmul.f32 %v1969, %v1969
        %v2103 = vmul.f32 %v1972, %v1972
        %v2104 = vmul.f32 %v1975, %v1975
        %v2105 = vmul.f32 %v1978, %v1978
        %v2106 = vmul.f32 %v1981, %v1981
        %v2107 = vmul.f32 %v1984, %v1984
        %v2108 = vmul.f32 %v1987, %v1987
        %v2109 = vmul.f32 %v1990, %v1990
        %v2110 = vmul.f32 %v1993, %v1993
        %v2111 = vmul.f32 %v1996, %v1996
        %v2112 = vmul.f32 %v1999, %v1999
        %v2113 = vmul.f32 %v2002, %v2002
        %v2114 = vmul.f32 %v2005, %v2005
        %v2115 = vmul.f32 %v2008, %v2008
        %v2116 = vmul.f32 %v2011, %v2011
        %v2117 = vmul.f32 %v2014, %v2014
        %v2118 = vsel %vm2016, %v2086, 0.0
        %v2119 = vsel %vm2016, %v2087, 0.0
        %v2120 = vadd.f32 %v2118, %v2119
        %v2121 = vsel %vm2016, %v2088, 0.0
        %v2122 = vadd.f32 %v2120, %v2121
        %v2123 = vsel %vm2016, %v2089, 0.0
        %v2124 = vadd.f32 %v2122, %v2123
        %v2125 = vsel %vm2016, %v2090, 0.0
        %v2126 = vadd.f32 %v2124, %v2125
        %v2127 = vsel %vm2016, %v2091, 0.0
        %v2128 = vadd.f32 %v2126, %v2127
        %v2129 = vsel %vm2016, %v2092, 0.0
        %v2130 = vadd.f32 %v2128, %v2129
        %v2131 = vsel %vm2016, %v2093, 0.0
        %v2132 = vadd.f32 %v2130, %v2131
        %v2133 = vsel %vm2016, %v2094, 0.0
        %v2134 = vadd.f32 %v2132, %v2133
        %v2135 = vsel %vm2016, %v2095, 0.0
        %v2136 = vadd.f32 %v2134, %v2135
        %v2137 = vsel %vm2016, %v2096, 0.0
        %v2138 = vadd.f32 %v2136, %v2137
        %v2139 = vsel %vm2016, %v2097, 0.0
        %v2140 = vadd.f32 %v2138, %v2139
        %v2141 = vsel %vm2016, %v2098, 0.0
        %v2142 = vadd.f32 %v2140, %v2141
        %v2143 = vsel %vm2016, %v2099, 0.0
        %v2144 = vadd.f32 %v2142, %v2143
        %v2145 = vsel %vm2016, %v2100, 0.0
        %v2146 = vadd.f32 %v2144, %v2145
        %v2147 = vsel %vm2016, %v2101, 0.0
        %v2148 = vadd.f32 %v2146, %v2147
        %v2149 = vsel %vm2016, %v2102, 0.0
        %v2150 = vadd.f32 %v2148, %v2149
        %v2151 = vsel %vm2016, %v2103, 0.0
        %v2152 = vadd.f32 %v2150, %v2151
        %v2153 = vsel %vm2016, %v2104, 0.0
        %v2154 = vadd.f32 %v2152, %v2153
        %v2155 = vsel %vm2016, %v2105, 0.0
        %v2156 = vadd.f32 %v2154, %v2155
        %v2157 = vsel %vm2016, %v2106, 0.0
        %v2158 = vadd.f32 %v2156, %v2157
        %v2159 = vsel %vm2016, %v2107, 0.0
        %v2160 = vadd.f32 %v2158, %v2159
        %v2161 = vsel %vm2016, %v2108, 0.0
        %v2162 = vadd.f32 %v2160, %v2161
        %v2163 = vsel %vm2016, %v2109, 0.0
        %v2164 = vadd.f32 %v2162, %v2163
        %v2165 = vsel %vm2016, %v2110, 0.0
        %v2166 = vadd.f32 %v2164, %v2165
        %v2167 = vsel %vm2016, %v2111, 0.0
        %v2168 = vadd.f32 %v2166, %v2167
        %v2169 = vsel %vm2016, %v2112, 0.0
        %v2170 = vadd.f32 %v2168, %v2169
        %v2171 = vsel %vm2016, %v2113, 0.0
        %v2172 = vadd.f32 %v2170, %v2171
        %v2173 = vsel %vm2016, %v2114, 0.0
        %v2174 = vadd.f32 %v2172, %v2173
        %v2175 = vsel %vm2016, %v2115, 0.0
        %v2176 = vadd.f32 %v2174, %v2175
        %v2177 = vsel %vm2016, %v2116, 0.0
        %v2178 = vadd.f32 %v2176, %v2177
        %v2179 = vsel %vm2016, %v2117, 0.0
        %v2180 = vadd.f32 %v2178, %v2179
        %v2181 = vrot.slane %v2180, 4
        %v2182 = vadd.f32 %v2180, %v2181
        %v2183 = vrot.slane %v2182, 2
        %v2184 = vadd.f32 %v2182, %v2183
        %v2185 = vrot.slane %v2184, 1
        %v2186 = vadd.f32 %v2184, %v2185
        %v2187 = vmul.f32 %v2085, 0.00390625
        %v2188 = vmul.f32 %v2186, 0.00390625
        %v2189 = vmul.f32 %v2187, %v2187
        %v2190 = vsub.f32 %v2188, %v2189
        %v2191 = vsub.f32 %v1921, %v2187
        %v2192 = vsub.f32 %v1924, %v2187
        %v2193 = vsub.f32 %v1927, %v2187
        %v2194 = vsub.f32 %v1930, %v2187
        %v2195 = vsub.f32 %v1933, %v2187
        %v2196 = vsub.f32 %v1936, %v2187
        %v2197 = vsub.f32 %v1939, %v2187
        %v2198 = vsub.f32 %v1942, %v2187
        %v2199 = vsub.f32 %v1945, %v2187
        %v2200 = vsub.f32 %v1948, %v2187
        %v2201 = vsub.f32 %v1951, %v2187
        %v2202 = vsub.f32 %v1954, %v2187
        %v2203 = vsub.f32 %v1957, %v2187
        %v2204 = vsub.f32 %v1960, %v2187
        %v2205 = vsub.f32 %v1963, %v2187
        %v2206 = vsub.f32 %v1966, %v2187
        %v2207 = vsub.f32 %v1969, %v2187
        %v2208 = vsub.f32 %v1972, %v2187
        %v2209 = vsub.f32 %v1975, %v2187
        %v2210 = vsub.f32 %v1978, %v2187
        %v2211 = vsub.f32 %v1981, %v2187
        %v2212 = vsub.f32 %v1984, %v2187
        %v2213 = vsub.f32 %v1987, %v2187
        %v2214 = vsub.f32 %v1990, %v2187
        %v2215 = vsub.f32 %v1993, %v2187
        %v2216 = vsub.f32 %v1996, %v2187
        %v2217 = vsub.f32 %v1999, %v2187
        %v2218 = vsub.f32 %v2002, %v2187
        %v2219 = vsub.f32 %v2005, %v2187
        %v2220 = vsub.f32 %v2008, %v2187
        %v2221 = vsub.f32 %v2011, %v2187
        %v2222 = vsub.f32 %v2014, %v2187
        %v2223 = vadd.f32 %v2190, 1e-05
        %v2224 = vrsqrt.pop %v2223
        %v2225 = vmul.f32 %v2224, %v2223
        %v2226 = vmul.f32 %v2225, %v2224
        %v2227 = vmul.f32 0.5, %v2226
        %v2228 = vsub.f32 1.5, %v2227
        %v2229 = vmul.f32 %v2224, %v2228
        %vm2230 = vweird.f32 %v2223
        %vm2231 = vweird.f32 %v2224
        %vm2232 = vmor %vm2230, %vm2231
        %v2233 = vsel %vm2232, %v2224, %v2229
        %v2234 = vmul.f32 %v2191, %v2233
        %v2235 = vmul.f32 %v2192, %v2233
        %v2236 = vmul.f32 %v2193, %v2233
        %v2237 = vmul.f32 %v2194, %v2233
        %v2238 = vmul.f32 %v2195, %v2233
        %v2239 = vmul.f32 %v2196, %v2233
        %v2240 = vmul.f32 %v2197, %v2233
        %v2241 = vmul.f32 %v2198, %v2233
        %v2242 = vmul.f32 %v2199, %v2233
        %v2243 = vmul.f32 %v2200, %v2233
        %v2244 = vmul.f32 %v2201, %v2233
        %v2245 = vmul.f32 %v2202, %v2233
        %v2246 = vmul.f32 %v2203, %v2233
        %v2247 = vmul.f32 %v2204, %v2233
        %v2248 = vmul.f32 %v2205, %v2233
        %v2249 = vmul.f32 %v2206, %v2233
        %v2250 = vmul.f32 %v2207, %v2233
        %v2251 = vmul.f32 %v2208, %v2233
        %v2252 = vmul.f32 %v2209, %v2233
        %v2253 = vmul.f32 %v2210, %v2233
        %v2254 = vmul.f32 %v2211, %v2233
        %v2255 = vmul.f32 %v2212, %v2233
        %v2256 = vmul.f32 %v2213, %v2233
        %v2257 = vmul.f32 %v2214, %v2233
        %v2258 = vmul.f32 %v2215, %v2233
        %v2259 = vmul.f32 %v2216, %v2233
        %v2260 = vmul.f32 %v2217, %v2233
        %v2261 = vmul.f32 %v2218, %v2233
        %v2262 = vmul.f32 %v2219, %v2233
        %v2263 = vmul.f32 %v2220, %v2233
        %v2264 = vmul.f32 %v2221, %v2233
        %v2265 = vmul.f32 %v2222, %v2233
        %vm2266 = vcmp.gt.f32.partialorder %v2234, 0.0
        %vm2267 = vcmp.gt.f32.partialorder %v2235, 0.0
        %vm2268 = vcmp.gt.f32.partialorder %v2236, 0.0
        %vm2269 = vcmp.gt.f32.partialorder %v2237, 0.0
        %vm2270 = vcmp.gt.f32.partialorder %v2238, 0.0
        %vm2271 = vcmp.gt.f32.partialorder %v2239, 0.0
        %vm2272 = vcmp.gt.f32.partialorder %v2240, 0.0
        %vm2273 = vcmp.gt.f32.partialorder %v2241, 0.0
        %vm2274 = vcmp.gt.f32.partialorder %v2242, 0.0
        %vm2275 = vcmp.gt.f32.partialorder %v2243, 0.0
        %vm2276 = vcmp.gt.f32.partialorder %v2244, 0.0
        %vm2277 = vcmp.gt.f32.partialorder %v2245, 0.0
        %vm2278 = vcmp.gt.f32.partialorder %v2246, 0.0
        %vm2279 = vcmp.gt.f32.partialorder %v2247, 0.0
        %vm2280 = vcmp.gt.f32.partialorder %v2248, 0.0
        %vm2281 = vcmp.gt.f32.partialorder %v2249, 0.0
        %vm2282 = vcmp.gt.f32.partialorder %v2250, 0.0
        %vm2283 = vcmp.gt.f32.partialorder %v2251, 0.0
        %vm2284 = vcmp.gt.f32.partialorder %v2252, 0.0
        %vm2285 = vcmp.gt.f32.partialorder %v2253, 0.0
        %vm2286 = vcmp.gt.f32.partialorder %v2254, 0.0
        %vm2287 = vcmp.gt.f32.partialorder %v2255, 0.0
        %vm2288 = vcmp.gt.f32.partialorder %v2256, 0.0
        %vm2289 = vcmp.gt.f32.partialorder %v2257, 0.0
        %vm2290 = vcmp.gt.f32.partialorder %v2258, 0.0
        %vm2291 = vcmp.gt.f32.partialorder %v2259, 0.0
        %vm2292 = vcmp.gt.f32.partialorder %v2260, 0.0
        %vm2293 = vcmp.gt.f32.partialorder %v2261, 0.0
        %vm2294 = vcmp.gt.f32.partialorder %v2262, 0.0
        %vm2295 = vcmp.gt.f32.partialorder %v2263, 0.0
        %vm2296 = vcmp.gt.f32.partialorder %v2264, 0.0
        %vm2297 = vcmp.gt.f32.partialorder %v2265, 0.0
        %v2298 = vmul.f32 %v2234, 0.01
        %v2299 = vmul.f32 %v2235, 0.01
        %v2300 = vmul.f32 %v2236, 0.01
        %v2301 = vmul.f32 %v2237, 0.01
        %v2302 = vmul.f32 %v2238, 0.01
        %v2303 = vmul.f32 %v2239, 0.01
        %v2304 = vmul.f32 %v2240, 0.01
        %v2305 = vmul.f32 %v2241, 0.01
        %v2306 = vmul.f32 %v2242, 0.01
        %v2307 = vmul.f32 %v2243, 0.01
        %v2308 = vmul.f32 %v2244, 0.01
        %v2309 = vmul.f32 %v2245, 0.01
        %v2310 = vmul.f32 %v2246, 0.01
        %v2311 = vmul.f32 %v2247, 0.01
        %v2312 = vmul.f32 %v2248, 0.01
        %v2313 = vmul.f32 %v2249, 0.01
        %v2314 = vmul.f32 %v2250, 0.01
        %v2315 = vmul.f32 %v2251, 0.01
        %v2316 = vmul.f32 %v2252, 0.01
        %v2317 = vmul.f32 %v2253, 0.01
        %v2318 = vmul.f32 %v2254, 0.01
        %v2319 = vmul.f32 %v2255, 0.01
        %v2320 = vmul.f32 %v2256, 0.01
        %v2321 = vmul.f32 %v2257, 0.01
        %v2322 = vmul.f32 %v2258, 0.01
        %v2323 = vmul.f32 %v2259, 0.01
        %v2324 = vmul.f32 %v2260, 0.01
        %v2325 = vmul.f32 %v2261, 0.01
        %v2326 = vmul.f32 %v2262, 0.01
        %v2327 = vmul.f32 %v2263, 0.01
        %v2328 = vmul.f32 %v2264, 0.01
        %v2329 = vmul.f32 %v2265, 0.01
        %v2330 = vsel %vm2266, %v2234, %v2298
        %v2331 = vsel %vm2267, %v2235, %v2299
        %v2332 = vsel %vm2268, %v2236, %v2300
        %v2333 = vsel %vm2269, %v2237, %v2301
        %v2334 = vsel %vm2270, %v2238, %v2302
        %v2335 = vsel %vm2271, %v2239, %v2303
        %v2336 = vsel %vm2272, %v2240, %v2304
        %v2337 = vsel %vm2273, %v2241, %v2305
        %v2338 = vsel %vm2274, %v2242, %v2306
        %v2339 = vsel %vm2275, %v2243, %v2307
        %v2340 = vsel %vm2276, %v2244, %v2308
        %v2341 = vsel %vm2277, %v2245, %v2309
        %v2342 = vsel %vm2278, %v2246, %v2310
        %v2343 = vsel %vm2279, %v2247, %v2311
        %v2344 = vsel %vm2280, %v2248, %v2312
        %v2345 = vsel %vm2281, %v2249, %v2313
        %v2346 = vsel %vm2282, %v2250, %v2314
        %v2347 = vsel %vm2283, %v2251, %v2315
        %v2348 = vsel %vm2284, %v2252, %v2316
        %v2349 = vsel %vm2285, %v2253, %v2317
        %v2350 = vsel %vm2286, %v2254, %v2318
        %v2351 = vsel %vm2287, %v2255, %v2319
        %v2352 = vsel %vm2288, %v2256, %v2320
        %v2353 = vsel %vm2289, %v2257, %v2321
        %v2354 = vsel %vm2290, %v2258, %v2322
        %v2355 = vsel %vm2291, %v2259, %v2323
        %v2356 = vsel %vm2292, %v2260, %v2324
        %v2357 = vsel %vm2293, %v2261, %v2325
        %v2358 = vsel %vm2294, %v2262, %v2326
        %v2359 = vsel %vm2295, %v2263, %v2327
        %v2360 = vsel %vm2296, %v2264, %v2328
        %v2361 = vsel %vm2297, %v2265, %v2329
        %vm2362 = vcmask 588800
        %2363 = vst.msk [vmem:[#allocation3] sm:$0xff] %vm2362, 0.0
        %2364 = vst.msk [vmem:[#allocation3 + $0x8] sm:$0xff] %vm2362, 0.0
        %2365 = vst.msk [vmem:[#allocation3 + $0x10] sm:$0xff] %vm2362, 0.0
        %2366 = vst.msk [vmem:[#allocation3 + $0x18] sm:$0xff] %vm2362, 0.0
        %2367 = vst.msk [vmem:[#allocation3 + $0x20] sm:$0xff] %vm2362, 0.0
        %2368 = vst.msk [vmem:[#allocation3 + $0x28] sm:$0xff] %vm2362, 0.0
        %2369 = vst.msk [vmem:[#allocation3 + $0x30] sm:$0xff] %vm2362, 0.0
        %2370 = vst.msk [vmem:[#allocation3 + $0x38] sm:$0xff] %vm2362, 0.0
        %2371 = vst.msk [vmem:[#allocation3 + $0x40] sm:$0xff] %vm2362, 0.0
        %2372 = vst.msk [vmem:[#allocation3 + $0x48] sm:$0xff] %vm2362, 0.0
        %2373 = vst.msk [vmem:[#allocation3 + $0x50] sm:$0xff] %vm2362, 0.0
        %2374 = vst.msk [vmem:[#allocation3 + $0x58] sm:$0xff] %vm2362, 0.0
        %2375 = vst.msk [vmem:[#allocation3 + $0x60] sm:$0xff] %vm2362, 0.0
        %2376 = vst.msk [vmem:[#allocation3 + $0x68] sm:$0xff] %vm2362, 0.0
        %2377 = vst.msk [vmem:[#allocation3 + $0x70] sm:$0xff] %vm2362, 0.0
        %2378 = vst.msk [vmem:[#allocation3 + $0x78] sm:$0xff] %vm2362, 0.0
        %2379 = vst.msk [vmem:[#allocation3 + $0x80] sm:$0xff] %vm2362, 0.0
        %2380 = vst.msk [vmem:[#allocation3 + $0x88] sm:$0xff] %vm2362, 0.0
        %2381 = vst.msk [vmem:[#allocation3 + $0x90] sm:$0xff] %vm2362, 0.0
        %2382 = vst.msk [vmem:[#allocation3 + $0x98] sm:$0xff] %vm2362, 0.0
        %2383 = vst.msk [vmem:[#allocation3 + $0xa0] sm:$0xff] %vm2362, 0.0
        %2384 = vst.msk [vmem:[#allocation3 + $0xa8] sm:$0xff] %vm2362, 0.0
        %2385 = vst.msk [vmem:[#allocation3 + $0xb0] sm:$0xff] %vm2362, 0.0
        %2386 = vst.msk [vmem:[#allocation3 + $0xb8] sm:$0xff] %vm2362, 0.0
        %2387 = vst.msk [vmem:[#allocation3 + $0xc0] sm:$0xff] %vm2362, 0.0
        %2388 = vst.msk [vmem:[#allocation3 + $0xc8] sm:$0xff] %vm2362, 0.0
        %2389 = vst.msk [vmem:[#allocation3 + $0xd0] sm:$0xff] %vm2362, 0.0
        %2390 = vst.msk [vmem:[#allocation3 + $0xd8] sm:$0xff] %vm2362, 0.0
        %2391 = vst.msk [vmem:[#allocation3 + $0xe0] sm:$0xff] %vm2362, 0.0
        %2392 = vst.msk [vmem:[#allocation3 + $0xe8] sm:$0xff] %vm2362, 0.0
        %2393 = vst.msk [vmem:[#allocation3 + $0xf0] sm:$0xff] %vm2362, 0.0
        %2394 = vst.msk [vmem:[#allocation3 + $0xf8] sm:$0xff] %vm2362, 0.0
        %s2395 = scalar_lea.vmem [#allocation3], 16
        %2396 = vst.msk [vmem:[%s2395 + $0x1] sm:$0xff] %vm2016, %v2330
        %vm2397 = vcmask 63488
        %2398 = vst.msk [vmem:[%s2395 + $0x9] sm:$0x7f] %vm2397, %v2331
        %2399 = vst.msk [vmem:[%s2395 + $0x11] sm:$0xff] %vm2016, %v2332
        %2400 = vst.msk [vmem:[%s2395 + $0x19] sm:$0x7f] %vm2397, %v2333
        %2401 = vst.msk [vmem:[%s2395 + $0x21] sm:$0xff] %vm2016, %v2334
        %2402 = vst.msk [vmem:[%s2395 + $0x29] sm:$0x7f] %vm2397, %v2335
        %2403 = vst.msk [vmem:[%s2395 + $0x31] sm:$0xff] %vm2016, %v2336
        %2404 = vst.msk [vmem:[%s2395 + $0x39] sm:$0x7f] %vm2397, %v2337
        %2405 = vst.msk [vmem:[%s2395 + $0x41] sm:$0xff] %vm2016, %v2338
        %2406 = vst.msk [vmem:[%s2395 + $0x49] sm:$0x7f] %vm2397, %v2339
        %2407 = vst.msk [vmem:[%s2395 + $0x51] sm:$0xff] %vm2016, %v2340
        %2408 = vst.msk [vmem:[%s2395 + $0x59] sm:$0x7f] %vm2397, %v2341
        %2409 = vst.msk [vmem:[%s2395 + $0x61] sm:$0xff] %vm2016, %v2342
        %2410 = vst.msk [vmem:[%s2395 + $0x69] sm:$0x7f] %vm2397, %v2343
        %2411 = vst.msk [vmem:[%s2395 + $0x71] sm:$0xff] %vm2016, %v2344
        %2412 = vst.msk [vmem:[%s2395 + $0x79] sm:$0x7f] %vm2397, %v2345
        %2413 = vst.msk [vmem:[%s2395 + $0x81] sm:$0xff] %vm2016, %v2346
        %2414 = vst.msk [vmem:[%s2395 + $0x89] sm:$0x7f] %vm2397, %v2347
        %2415 = vst.msk [vmem:[%s2395 + $0x91] sm:$0xff] %vm2016, %v2348
        %2416 = vst.msk [vmem:[%s2395 + $0x99] sm:$0x7f] %vm2397, %v2349
        %2417 = vst.msk [vmem:[%s2395 + $0xa1] sm:$0xff] %vm2016, %v2350
        %2418 = vst.msk [vmem:[%s2395 + $0xa9] sm:$0x7f] %vm2397, %v2351
        %2419 = vst.msk [vmem:[%s2395 + $0xb1] sm:$0xff] %vm2016, %v2352
        %2420 = vst.msk [vmem:[%s2395 + $0xb9] sm:$0x7f] %vm2397, %v2353
        %2421 = vst.msk [vmem:[%s2395 + $0xc1] sm:$0xff] %vm2016, %v2354
        %2422 = vst.msk [vmem:[%s2395 + $0xc9] sm:$0x7f] %vm2397, %v2355
        %2423 = vst.msk [vmem:[%s2395 + $0xd1] sm:$0xff] %vm2016, %v2356
        %2424 = vst.msk [vmem:[%s2395 + $0xd9] sm:$0x7f] %vm2397, %v2357
        %2425 = vst.msk [vmem:[%s2395 + $0xe1] sm:$0xff] %vm2016, %v2358
        %2426 = vst.msk [vmem:[%s2395 + $0xe9] sm:$0x7f] %vm2397, %v2359
        %2457 = vrot.lane.b32.xlu0 %v2330, 8
        %v2458 = vpop.permute.xlu0 %2457
        %2459 = vrot.lane.b32.xlu0 %v2331, 8
        %v2460 = vpop.permute.xlu0 %2459
        %2461 = vrot.lane.b32.xlu0 %v2332, 8
        %v2462 = vpop.permute.xlu0 %2461
        %2463 = vrot.lane.b32.xlu0 %v2333, 8
        %v2464 = vpop.permute.xlu0 %2463
        %2465 = vrot.lane.b32.xlu0 %v2334, 8
        %v2466 = vpop.permute.xlu0 %2465
        %2467 = vrot.lane.b32.xlu0 %v2335, 8
        %v2468 = vpop.permute.xlu0 %2467
        %2469 = vrot.lane.b32.xlu0 %v2336, 8
        %v2470 = vpop.permute.xlu0 %2469
        %2471 = vrot.lane.b32.xlu0 %v2337, 8
        %v2472 = vpop.permute.xlu0 %2471
        %2473 = vrot.lane.b32.xlu0 %v2338, 8
        %v2474 = vpop.permute.xlu0 %2473
        %2475 = vrot.lane.b32.xlu0 %v2339, 8
        %v2476 = vpop.permute.xlu0 %2475
        %2477 = vrot.lane.b32.xlu0 %v2340, 8
        %v2478 = vpop.permute.xlu0 %2477
        %2479 = vrot.lane.b32.xlu0 %v2341, 8
        %v2480 = vpop.permute.xlu0 %2479
        %2481 = vrot.lane.b32.xlu0 %v2342, 8
        %v2482 = vpop.permute.xlu0 %2481
        %2483 = vrot.lane.b32.xlu0 %v2343, 8
        %v2484 = vpop.permute.xlu0 %2483
        %2485 = vrot.lane.b32.xlu0 %v2344, 8
        %v2486 = vpop.permute.xlu0 %2485
        %2487 = vrot.lane.b32.xlu0 %v2345, 8
        %v2488 = vpop.permute.xlu0 %2487
        %2489 = vrot.lane.b32.xlu0 %v2346, 8
        %v2490 = vpop.permute.xlu0 %2489
        %2491 = vrot.lane.b32.xlu0 %v2347, 8
        %v2492 = vpop.permute.xlu0 %2491
        %2493 = vrot.lane.b32.xlu0 %v2348, 8
        %v2494 = vpop.permute.xlu0 %2493
        %2495 = vrot.lane.b32.xlu0 %v2349, 8
        %v2496 = vpop.permute.xlu0 %2495
        %2497 = vrot.lane.b32.xlu0 %v2350, 8
        %v2498 = vpop.permute.xlu0 %2497
        %2499 = vrot.lane.b32.xlu0 %v2351, 8
        %v2500 = vpop.permute.xlu0 %2499
        %2501 = vrot.lane.b32.xlu0 %v2352, 8
        %v2502 = vpop.permute.xlu0 %2501
        %2503 = vrot.lane.b32.xlu0 %v2353, 8
        %v2504 = vpop.permute.xlu0 %2503
        %2505 = vrot.lane.b32.xlu0 %v2354, 8
        %v2506 = vpop.permute.xlu0 %2505
        %2507 = vrot.lane.b32.xlu0 %v2355, 8
        %v2508 = vpop.permute.xlu0 %2507
        %2509 = vrot.lane.b32.xlu0 %v2356, 8
        %v2510 = vpop.permute.xlu0 %2509
        %2511 = vrot.lane.b32.xlu0 %v2357, 8
        %v2512 = vpop.permute.xlu0 %2511
        %2513 = vrot.lane.b32.xlu0 %v2358, 8
        %v2514 = vpop.permute.xlu0 %2513
        %2515 = vrot.lane.b32.xlu0 %v2359, 8
        %v2516 = vpop.permute.xlu0 %2515
        %vm2547 = vcmask 130112
        %2548 = vst.msk [vmem:[%s2395] sm:$0xff] %vm2547, %v2458
        %2549 = vst.msk [vmem:[%s2395 + $0x8] sm:$0xff] %vm2547, %v2460
        %2550 = vst.msk [vmem:[%s2395 + $0x10] sm:$0xff] %vm2547, %v2462
        %2551 = vst.msk [vmem:[%s2395 + $0x18] sm:$0xff] %vm2547, %v2464
        %2552 = vst.msk [vmem:[%s2395 + $0x20] sm:$0xff] %vm2547, %v2466
        %2553 = vst.msk [vmem:[%s2395 + $0x28] sm:$0xff] %vm2547, %v2468
        %2554 = vst.msk [vmem:[%s2395 + $0x30] sm:$0xff] %vm2547, %v2470
        %2555 = vst.msk [vmem:[%s2395 + $0x38] sm:$0xff] %vm2547, %v2472
        %2556 = vst.msk [vmem:[%s2395 + $0x40] sm:$0xff] %vm2547, %v2474
        %2557 = vst.msk [vmem:[%s2395 + $0x48] sm:$0xff] %vm2547, %v2476
        %2558 = vst.msk [vmem:[%s2395 + $0x50] sm:$0xff] %vm2547, %v2478
        %2559 = vst.msk [vmem:[%s2395 + $0x58] sm:$0xff] %vm2547, %v2480
        %2560 = vst.msk [vmem:[%s2395 + $0x60] sm:$0xff] %vm2547, %v2482
        %2561 = vst.msk [vmem:[%s2395 + $0x68] sm:$0xff] %vm2547, %v2484
        %2562 = vst.msk [vmem:[%s2395 + $0x70] sm:$0xff] %vm2547, %v2486
        %2563 = vst.msk [vmem:[%s2395 + $0x78] sm:$0xff] %vm2547, %v2488
        %2564 = vst.msk [vmem:[%s2395 + $0x80] sm:$0xff] %vm2547, %v2490
        %2565 = vst.msk [vmem:[%s2395 + $0x88] sm:$0xff] %vm2547, %v2492
        %2566 = vst.msk [vmem:[%s2395 + $0x90] sm:$0xff] %vm2547, %v2494
        %2567 = vst.msk [vmem:[%s2395 + $0x98] sm:$0xff] %vm2547, %v2496
        %2568 = vst.msk [vmem:[%s2395 + $0xa0] sm:$0xff] %vm2547, %v2498
        %2569 = vst.msk [vmem:[%s2395 + $0xa8] sm:$0xff] %vm2547, %v2500
        %2570 = vst.msk [vmem:[%s2395 + $0xb0] sm:$0xff] %vm2547, %v2502
        %2571 = vst.msk [vmem:[%s2395 + $0xb8] sm:$0xff] %vm2547, %v2504
        %2572 = vst.msk [vmem:[%s2395 + $0xc0] sm:$0xff] %vm2547, %v2506
        %2573 = vst.msk [vmem:[%s2395 + $0xc8] sm:$0xff] %vm2547, %v2508
        %2574 = vst.msk [vmem:[%s2395 + $0xd0] sm:$0xff] %vm2547, %v2510
        %2575 = vst.msk [vmem:[%s2395 + $0xd8] sm:$0xff] %vm2547, %v2512
        %2576 = vst.msk [vmem:[%s2395 + $0xe0] sm:$0xff] %vm2547, %v2514
        %2577 = vst.msk [vmem:[%s2395 + $0xe8] sm:$0xff] %vm2547, %v2516
        %2578 = vrot.lane.b32.xlu0 %v2330, 16
        %v2579 = vpop.permute.xlu0 %2578
        %2580 = vrot.lane.b32.xlu0 %v2331, 16
        %v2581 = vpop.permute.xlu0 %2580
        %2582 = vrot.lane.b32.xlu0 %v2332, 16
        %v2583 = vpop.permute.xlu0 %2582
        %2584 = vrot.lane.b32.xlu0 %v2333, 16
        %v2585 = vpop.permute.xlu0 %2584
        %2586 = vrot.lane.b32.xlu0 %v2334, 16
        %v2587 = vpop.permute.xlu0 %2586
        %2588 = vrot.lane.b32.xlu0 %v2335, 16
        %v2589 = vpop.permute.xlu0 %2588
        %2590 = vrot.lane.b32.xlu0 %v2336, 16
        %v2591 = vpop.permute.xlu0 %2590
        %2592 = vrot.lane.b32.xlu0 %v2337, 16
        %v2593 = vpop.permute.xlu0 %2592
        %2594 = vrot.lane.b32.xlu0 %v2338, 16
        %v2595 = vpop.permute.xlu0 %2594
        %2596 = vrot.lane.b32.xlu0 %v2339, 16
        %v2597 = vpop.permute.xlu0 %2596
        %2598 = vrot.lane.b32.xlu0 %v2340, 16
        %v2599 = vpop.permute.xlu0 %2598
        %2600 = vrot.lane.b32.xlu0 %v2341, 16
        %v2601 = vpop.permute.xlu0 %2600
        %2602 = vrot.lane.b32.xlu0 %v2342, 16
        %v2603 = vpop.permute.xlu0 %2602
        %2604 = vrot.lane.b32.xlu0 %v2343, 16
        %v2605 = vpop.permute.xlu0 %2604
        %2606 = vrot.lane.b32.xlu0 %v2344, 16
        %v2607 = vpop.permute.xlu0 %2606
        %2608 = vrot.lane.b32.xlu0 %v2345, 16
        %v2609 = vpop.permute.xlu0 %2608
        %2610 = vrot.lane.b32.xlu0 %v2346, 16
        %v2611 = vpop.permute.xlu0 %2610
        %2612 = vrot.lane.b32.xlu0 %v2347, 16
        %v2613 = vpop.permute.xlu0 %2612
        %2614 = vrot.lane.b32.xlu0 %v2348, 16
        %v2615 = vpop.permute.xlu0 %2614
        %2616 = vrot.lane.b32.xlu0 %v2349, 16
        %v2617 = vpop.permute.xlu0 %2616
        %2618 = vrot.lane.b32.xlu0 %v2350, 16
        %v2619 = vpop.permute.xlu0 %2618
        %2620 = vrot.lane.b32.xlu0 %v2351, 16
        %v2621 = vpop.permute.xlu0 %2620
        %2622 = vrot.lane.b32.xlu0 %v2352, 16
        %v2623 = vpop.permute.xlu0 %2622
        %2624 = vrot.lane.b32.xlu0 %v2353, 16
        %v2625 = vpop.permute.xlu0 %2624
        %2626 = vrot.lane.b32.xlu0 %v2354, 16
        %v2627 = vpop.permute.xlu0 %2626
        %2628 = vrot.lane.b32.xlu0 %v2355, 16
        %v2629 = vpop.permute.xlu0 %2628
        %2630 = vrot.lane.b32.xlu0 %v2356, 16
        %v2631 = vpop.permute.xlu0 %2630
        %2632 = vrot.lane.b32.xlu0 %v2357, 16
        %v2633 = vpop.permute.xlu0 %2632
        %2634 = vrot.lane.b32.xlu0 %v2358, 16
        %v2635 = vpop.permute.xlu0 %2634
        %2636 = vrot.lane.b32.xlu0 %v2359, 16
        %v2637 = vpop.permute.xlu0 %2636
        %vm2668 = vcmask 195713
        %2669 = vst.msk [vmem:[%s2395 - $0x1] sm:$0xfe] %vm2668, %v2579
        %vm2670 = vcmask 195712
        %2671 = vst.msk [vmem:[%s2395 + $0x7] sm:$0xff] %vm2670, %v2581
        %2672 = vst.msk [vmem:[%s2395 + $0xf] sm:$0xfe] %vm2668, %v2583
        %2673 = vst.msk [vmem:[%s2395 + $0x17] sm:$0xff] %vm2670, %v2585
        %2674 = vst.msk [vmem:[%s2395 + $0x1f] sm:$0xfe] %vm2668, %v2587
        %2675 = vst.msk [vmem:[%s2395 + $0x27] sm:$0xff] %vm2670, %v2589
        %2676 = vst.msk [vmem:[%s2395 + $0x2f] sm:$0xfe] %vm2668, %v2591
        %2677 = vst.msk [vmem:[%s2395 + $0x37] sm:$0xff] %vm2670, %v2593
        %2678 = vst.msk [vmem:[%s2395 + $0x3f] sm:$0xfe] %vm2668, %v2595
        %2679 = vst.msk [vmem:[%s2395 + $0x47] sm:$0xff] %vm2670, %v2597
        %2680 = vst.msk [vmem:[%s2395 + $0x4f] sm:$0xfe] %vm2668, %v2599
        %2681 = vst.msk [vmem:[%s2395 + $0x57] sm:$0xff] %vm2670, %v2601
        %2682 = vst.msk [vmem:[%s2395 + $0x5f] sm:$0xfe] %vm2668, %v2603
        %2683 = vst.msk [vmem:[%s2395 + $0x67] sm:$0xff] %vm2670, %v2605
        %2684 = vst.msk [vmem:[%s2395 + $0x6f] sm:$0xfe] %vm2668, %v2607
        %2685 = vst.msk [vmem:[%s2395 + $0x77] sm:$0xff] %vm2670, %v2609
        %2686 = vst.msk [vmem:[%s2395 + $0x7f] sm:$0xfe] %vm2668, %v2611
        %2687 = vst.msk [vmem:[%s2395 + $0x87] sm:$0xff] %vm2670, %v2613
        %2688 = vst.msk [vmem:[%s2395 + $0x8f] sm:$0xfe] %vm2668, %v2615
        %2689 = vst.msk [vmem:[%s2395 + $0x97] sm:$0xff] %vm2670, %v2617
        %2690 = vst.msk [vmem:[%s2395 + $0x9f] sm:$0xfe] %vm2668, %v2619
        %2691 = vst.msk [vmem:[%s2395 + $0xa7] sm:$0xff] %vm2670, %v2621
        %2692 = vst.msk [vmem:[%s2395 + $0xaf] sm:$0xfe] %vm2668, %v2623
        %2693 = vst.msk [vmem:[%s2395 + $0xb7] sm:$0xff] %vm2670, %v2625
        %2694 = vst.msk [vmem:[%s2395 + $0xbf] sm:$0xfe] %vm2668, %v2627
        %2695 = vst.msk [vmem:[%s2395 + $0xc7] sm:$0xff] %vm2670, %v2629
        %2696 = vst.msk [vmem:[%s2395 + $0xcf] sm:$0xfe] %vm2668, %v2631
        %2697 = vst.msk [vmem:[%s2395 + $0xd7] sm:$0xff] %vm2670, %v2633
        %2698 = vst.msk [vmem:[%s2395 + $0xdf] sm:$0xfe] %vm2668, %v2635
        %2699 = vst.msk [vmem:[%s2395 + $0xe7] sm:$0xff] %vm2670, %v2637
        %2702 = vrot.lane.b32.xlu0 %v2330, 24
        %v2703 = vpop.permute.xlu0 %2702
        %2704 = vrot.lane.b32.xlu0 %v2331, 24
        %v2705 = vpop.permute.xlu0 %2704
        %2706 = vrot.lane.b32.xlu0 %v2332, 24
        %v2707 = vpop.permute.xlu0 %2706
        %2708 = vrot.lane.b32.xlu0 %v2333, 24
        %v2709 = vpop.permute.xlu0 %2708
        %2710 = vrot.lane.b32.xlu0 %v2334, 24
        %v2711 = vpop.permute.xlu0 %2710
        %2712 = vrot.lane.b32.xlu0 %v2335, 24
        %v2713 = vpop.permute.xlu0 %2712
        %2714 = vrot.lane.b32.xlu0 %v2336, 24
        %v2715 = vpop.permute.xlu0 %2714
        %2716 = vrot.lane.b32.xlu0 %v2337, 24
        %v2717 = vpop.permute.xlu0 %2716
        %2718 = vrot.lane.b32.xlu0 %v2338, 24
        %v2719 = vpop.permute.xlu0 %2718
        %2720 = vrot.lane.b32.xlu0 %v2339, 24
        %v2721 = vpop.permute.xlu0 %2720
        %2722 = vrot.lane.b32.xlu0 %v2340, 24
        %v2723 = vpop.permute.xlu0 %2722
        %2724 = vrot.lane.b32.xlu0 %v2341, 24
        %v2725 = vpop.permute.xlu0 %2724
        %2726 = vrot.lane.b32.xlu0 %v2342, 24
        %v2727 = vpop.permute.xlu0 %2726
        %2728 = vrot.lane.b32.xlu0 %v2343, 24
        %v2729 = vpop.permute.xlu0 %2728
        %2730 = vrot.lane.b32.xlu0 %v2344, 24
        %v2731 = vpop.permute.xlu0 %2730
        %2732 = vrot.lane.b32.xlu0 %v2345, 24
        %v2733 = vpop.permute.xlu0 %2732
        %2734 = vrot.lane.b32.xlu0 %v2346, 24
        %v2735 = vpop.permute.xlu0 %2734
        %2736 = vrot.lane.b32.xlu0 %v2347, 24
        %v2737 = vpop.permute.xlu0 %2736
        %2738 = vrot.lane.b32.xlu0 %v2348, 24
        %v2739 = vpop.permute.xlu0 %2738
        %2740 = vrot.lane.b32.xlu0 %v2349, 24
        %v2741 = vpop.permute.xlu0 %2740
        %2742 = vrot.lane.b32.xlu0 %v2350, 24
        %v2743 = vpop.permute.xlu0 %2742
        %2744 = vrot.lane.b32.xlu0 %v2351, 24
        %v2745 = vpop.permute.xlu0 %2744
        %2746 = vrot.lane.b32.xlu0 %v2352, 24
        %v2747 = vpop.permute.xlu0 %2746
        %2748 = vrot.lane.b32.xlu0 %v2353, 24
        %v2749 = vpop.permute.xlu0 %2748
        %2750 = vrot.lane.b32.xlu0 %v2354, 24
        %v2751 = vpop.permute.xlu0 %2750
        %2752 = vrot.lane.b32.xlu0 %v2355, 24
        %v2753 = vpop.permute.xlu0 %2752
        %2754 = vrot.lane.b32.xlu0 %v2356, 24
        %v2755 = vpop.permute.xlu0 %2754
        %2756 = vrot.lane.b32.xlu0 %v2357, 24
        %v2757 = vpop.permute.xlu0 %2756
        %2758 = vrot.lane.b32.xlu0 %v2358, 24
        %v2759 = vpop.permute.xlu0 %2758
        %2760 = vrot.lane.b32.xlu0 %v2359, 24
        %v2761 = vpop.permute.xlu0 %2760
        %2762 = vrot.lane.b32.xlu0 %v2360, 24
        %v2763 = vpop.permute.xlu0 %2762
        %2764 = vrot.lane.b32.xlu0 %v2361, 24
        %v2765 = vpop.permute.xlu0 %2764
        %vm2798 = vcmask 261312
        %2799 = vst.msk [vmem:[#allocation3 + $0x1] sm:$0xff] %vm2798, %v2703
        %vm2800 = vcmask 260288
        %2801 = vst.msk [vmem:[#allocation3 + $0x9] sm:$0x7f] %vm2800, %v2705
        %2802 = vst.msk [vmem:[#allocation3 + $0x11] sm:$0xff] %vm2798, %v2707
        %2803 = vst.msk [vmem:[#allocation3 + $0x19] sm:$0x7f] %vm2800, %v2709
        %2804 = vst.msk [vmem:[#allocation3 + $0x21] sm:$0xff] %vm2798, %v2711
        %2805 = vst.msk [vmem:[#allocation3 + $0x29] sm:$0x7f] %vm2800, %v2713
        %2806 = vst.msk [vmem:[#allocation3 + $0x31] sm:$0xff] %vm2798, %v2715
        %2807 = vst.msk [vmem:[#allocation3 + $0x39] sm:$0x7f] %vm2800, %v2717
        %2808 = vst.msk [vmem:[#allocation3 + $0x41] sm:$0xff] %vm2798, %v2719
        %2809 = vst.msk [vmem:[#allocation3 + $0x49] sm:$0x7f] %vm2800, %v2721
        %2810 = vst.msk [vmem:[#allocation3 + $0x51] sm:$0xff] %vm2798, %v2723
        %2811 = vst.msk [vmem:[#allocation3 + $0x59] sm:$0x7f] %vm2800, %v2725
        %2812 = vst.msk [vmem:[#allocation3 + $0x61] sm:$0xff] %vm2798, %v2727
        %2813 = vst.msk [vmem:[#allocation3 + $0x69] sm:$0x7f] %vm2800, %v2729
        %2814 = vst.msk [vmem:[#allocation3 + $0x71] sm:$0xff] %vm2798, %v2731
        %2815 = vst.msk [vmem:[#allocation3 + $0x79] sm:$0x7f] %vm2800, %v2733
        %2816 = vst.msk [vmem:[#allocation3 + $0x81] sm:$0xff] %vm2798, %v2735
        %2817 = vst.msk [vmem:[#allocation3 + $0x89] sm:$0x7f] %vm2800, %v2737
        %2818 = vst.msk [vmem:[#allocation3 + $0x91] sm:$0xff] %vm2798, %v2739
        %2819 = vst.msk [vmem:[#allocation3 + $0x99] sm:$0x7f] %vm2800, %v2741
        %2820 = vst.msk [vmem:[#allocation3 + $0xa1] sm:$0xff] %vm2798, %v2743
        %2821 = vst.msk [vmem:[#allocation3 + $0xa9] sm:$0x7f] %vm2800, %v2745
        %2822 = vst.msk [vmem:[#allocation3 + $0xb1] sm:$0xff] %vm2798, %v2747
        %2823 = vst.msk [vmem:[#allocation3 + $0xb9] sm:$0x7f] %vm2800, %v2749
        %2824 = vst.msk [vmem:[#allocation3 + $0xc1] sm:$0xff] %vm2798, %v2751
        %2825 = vst.msk [vmem:[#allocation3 + $0xc9] sm:$0x7f] %vm2800, %v2753
        %2826 = vst.msk [vmem:[#allocation3 + $0xd1] sm:$0xff] %vm2798, %v2755
        %2827 = vst.msk [vmem:[#allocation3 + $0xd9] sm:$0x7f] %vm2800, %v2757
        %2828 = vst.msk [vmem:[#allocation3 + $0xe1] sm:$0xff] %vm2798, %v2759
        %2829 = vst.msk [vmem:[#allocation3 + $0xe9] sm:$0x7f] %vm2800, %v2761
        %2830 = vst.msk [vmem:[#allocation3 + $0xf1] sm:$0xff] %vm2798, %v2763
        %2831 = vst.msk [vmem:[#allocation3 + $0xf9] sm:$0x7f] %vm2800, %v2765
        %2832 = vrot.lane.b32.xlu0 %v2330, 32
        %v2833 = vpop.permute.xlu0 %2832
        %2834 = vrot.lane.b32.xlu0 %v2331, 32
        %v2835 = vpop.permute.xlu0 %2834
        %2836 = vrot.lane.b32.xlu0 %v2332, 32
        %v2837 = vpop.permute.xlu0 %2836
        %2838 = vrot.lane.b32.xlu0 %v2333, 32
        %v2839 = vpop.permute.xlu0 %2838
        %2840 = vrot.lane.b32.xlu0 %v2334, 32
        %v2841 = vpop.permute.xlu0 %2840
        %2842 = vrot.lane.b32.xlu0 %v2335, 32
        %v2843 = vpop.permute.xlu0 %2842
        %2844 = vrot.lane.b32.xlu0 %v2336, 32
        %v2845 = vpop.permute.xlu0 %2844
        %2846 = vrot.lane.b32.xlu0 %v2337, 32
        %v2847 = vpop.permute.xlu0 %2846
        %2848 = vrot.lane.b32.xlu0 %v2338, 32
        %v2849 = vpop.permute.xlu0 %2848
        %2850 = vrot.lane.b32.xlu0 %v2339, 32
        %v2851 = vpop.permute.xlu0 %2850
        %2852 = vrot.lane.b32.xlu0 %v2340, 32
        %v2853 = vpop.permute.xlu0 %2852
        %2854 = vrot.lane.b32.xlu0 %v2341, 32
        %v2855 = vpop.permute.xlu0 %2854
        %2856 = vrot.lane.b32.xlu0 %v2342, 32
        %v2857 = vpop.permute.xlu0 %2856
        %2858 = vrot.lane.b32.xlu0 %v2343, 32
        %v2859 = vpop.permute.xlu0 %2858
        %2860 = vrot.lane.b32.xlu0 %v2344, 32
        %v2861 = vpop.permute.xlu0 %2860
        %2862 = vrot.lane.b32.xlu0 %v2345, 32
        %v2863 = vpop.permute.xlu0 %2862
        %2864 = vrot.lane.b32.xlu0 %v2346, 32
        %v2865 = vpop.permute.xlu0 %2864
        %2866 = vrot.lane.b32.xlu0 %v2347, 32
        %v2867 = vpop.permute.xlu0 %2866
        %2868 = vrot.lane.b32.xlu0 %v2348, 32
        %v2869 = vpop.permute.xlu0 %2868
        %2870 = vrot.lane.b32.xlu0 %v2349, 32
        %v2871 = vpop.permute.xlu0 %2870
        %2872 = vrot.lane.b32.xlu0 %v2350, 32
        %v2873 = vpop.permute.xlu0 %2872
        %2874 = vrot.lane.b32.xlu0 %v2351, 32
        %v2875 = vpop.permute.xlu0 %2874
        %2876 = vrot.lane.b32.xlu0 %v2352, 32
        %v2877 = vpop.permute.xlu0 %2876
        %2878 = vrot.lane.b32.xlu0 %v2353, 32
        %v2879 = vpop.permute.xlu0 %2878
        %2880 = vrot.lane.b32.xlu0 %v2354, 32
        %v2881 = vpop.permute.xlu0 %2880
        %2882 = vrot.lane.b32.xlu0 %v2355, 32
        %v2883 = vpop.permute.xlu0 %2882
        %2884 = vrot.lane.b32.xlu0 %v2356, 32
        %v2885 = vpop.permute.xlu0 %2884
        %2886 = vrot.lane.b32.xlu0 %v2357, 32
        %v2887 = vpop.permute.xlu0 %2886
        %2888 = vrot.lane.b32.xlu0 %v2358, 32
        %v2889 = vpop.permute.xlu0 %2888
        %2890 = vrot.lane.b32.xlu0 %v2359, 32
        %v2891 = vpop.permute.xlu0 %2890
        %2892 = vrot.lane.b32.xlu0 %v2360, 32
        %v2893 = vpop.permute.xlu0 %2892
        %2894 = vrot.lane.b32.xlu0 %v2361, 32
        %v2895 = vpop.permute.xlu0 %2894
        %vm2928 = vcmask 326912
        %2929 = vst.msk [vmem:[#allocation3] sm:$0xff] %vm2928, %v2833
        %2930 = vst.msk [vmem:[#allocation3 + $0x8] sm:$0xff] %vm2928, %v2835
        %2931 = vst.msk [vmem:[#allocation3 + $0x10] sm:$0xff] %vm2928, %v2837
        %2932 = vst.msk [vmem:[#allocation3 + $0x18] sm:$0xff] %vm2928, %v2839
        %2933 = vst.msk [vmem:[#allocation3 + $0x20] sm:$0xff] %vm2928, %v2841
        %2934 = vst.msk [vmem:[#allocation3 + $0x28] sm:$0xff] %vm2928, %v2843
        %2935 = vst.msk [vmem:[#allocation3 + $0x30] sm:$0xff] %vm2928, %v2845
        %2936 = vst.msk [vmem:[#allocation3 + $0x38] sm:$0xff] %vm2928, %v2847
        %2937 = vst.msk [vmem:[#allocation3 + $0x40] sm:$0xff] %vm2928, %v2849
        %2938 = vst.msk [vmem:[#allocation3 + $0x48] sm:$0xff] %vm2928, %v2851
        %2939 = vst.msk [vmem:[#allocation3 + $0x50] sm:$0xff] %vm2928, %v2853
        %2940 = vst.msk [vmem:[#allocation3 + $0x58] sm:$0xff] %vm2928, %v2855
        %2941 = vst.msk [vmem:[#allocation3 + $0x60] sm:$0xff] %vm2928, %v2857
        %2942 = vst.msk [vmem:[#allocation3 + $0x68] sm:$0xff] %vm2928, %v2859
        %2943 = vst.msk [vmem:[#allocation3 + $0x70] sm:$0xff] %vm2928, %v2861
        %2944 = vst.msk [vmem:[#allocation3 + $0x78] sm:$0xff] %vm2928, %v2863
        %2945 = vst.msk [vmem:[#allocation3 + $0x80] sm:$0xff] %vm2928, %v2865
        %2946 = vst.msk [vmem:[#allocation3 + $0x88] sm:$0xff] %vm2928, %v2867
        %2947 = vst.msk [vmem:[#allocation3 + $0x90] sm:$0xff] %vm2928, %v2869
        %2948 = vst.msk [vmem:[#allocation3 + $0x98] sm:$0xff] %vm2928, %v2871
        %2949 = vst.msk [vmem:[#allocation3 + $0xa0] sm:$0xff] %vm2928, %v2873
        %2950 = vst.msk [vmem:[#allocation3 + $0xa8] sm:$0xff] %vm2928, %v2875
        %2951 = vst.msk [vmem:[#allocation3 + $0xb0] sm:$0xff] %vm2928, %v2877
        %2952 = vst.msk [vmem:[#allocation3 + $0xb8] sm:$0xff] %vm2928, %v2879
        %2953 = vst.msk [vmem:[#allocation3 + $0xc0] sm:$0xff] %vm2928, %v2881
        %2954 = vst.msk [vmem:[#allocation3 + $0xc8] sm:$0xff] %vm2928, %v2883
        %2955 = vst.msk [vmem:[#allocation3 + $0xd0] sm:$0xff] %vm2928, %v2885
        %2956 = vst.msk [vmem:[#allocation3 + $0xd8] sm:$0xff] %vm2928, %v2887
        %2957 = vst.msk [vmem:[#allocation3 + $0xe0] sm:$0xff] %vm2928, %v2889
        %2958 = vst.msk [vmem:[#allocation3 + $0xe8] sm:$0xff] %vm2928, %v2891
        %2959 = vst.msk [vmem:[#allocation3 + $0xf0] sm:$0xff] %vm2928, %v2893
        %2960 = vst.msk [vmem:[#allocation3 + $0xf8] sm:$0xff] %vm2928, %v2895
        %2961 = vrot.lane.b32.xlu0 %v2330, 40
        %v2962 = vpop.permute.xlu0 %2961
        %2963 = vrot.lane.b32.xlu0 %v2331, 40
        %v2964 = vpop.permute.xlu0 %2963
        %2965 = vrot.lane.b32.xlu0 %v2332, 40
        %v2966 = vpop.permute.xlu0 %2965
        %2967 = vrot.lane.b32.xlu0 %v2333, 40
        %v2968 = vpop.permute.xlu0 %2967
        %2969 = vrot.lane.b32.xlu0 %v2334, 40
        %v2970 = vpop.permute.xlu0 %2969
        %2971 = vrot.lane.b32.xlu0 %v2335, 40
        %v2972 = vpop.permute.xlu0 %2971
        %2973 = vrot.lane.b32.xlu0 %v2336, 40
        %v2974 = vpop.permute.xlu0 %2973
        %2975 = vrot.lane.b32.xlu0 %v2337, 40
        %v2976 = vpop.permute.xlu0 %2975
        %2977 = vrot.lane.b32.xlu0 %v2338, 40
        %v2978 = vpop.permute.xlu0 %2977
        %2979 = vrot.lane.b32.xlu0 %v2339, 40
        %v2980 = vpop.permute.xlu0 %2979
        %2981 = vrot.lane.b32.xlu0 %v2340, 40
        %v2982 = vpop.permute.xlu0 %2981
        %2983 = vrot.lane.b32.xlu0 %v2341, 40
        %v2984 = vpop.permute.xlu0 %2983
        %2985 = vrot.lane.b32.xlu0 %v2342, 40
        %v2986 = vpop.permute.xlu0 %2985
        %2987 = vrot.lane.b32.xlu0 %v2343, 40
        %v2988 = vpop.permute.xlu0 %2987
        %2989 = vrot.lane.b32.xlu0 %v2344, 40
        %v2990 = vpop.permute.xlu0 %2989
        %2991 = vrot.lane.b32.xlu0 %v2345, 40
        %v2992 = vpop.permute.xlu0 %2991
        %2993 = vrot.lane.b32.xlu0 %v2346, 40
        %v2994 = vpop.permute.xlu0 %2993
        %2995 = vrot.lane.b32.xlu0 %v2347, 40
        %v2996 = vpop.permute.xlu0 %2995
        %2997 = vrot.lane.b32.xlu0 %v2348, 40
        %v2998 = vpop.permute.xlu0 %2997
        %2999 = vrot.lane.b32.xlu0 %v2349, 40
        %v3000 = vpop.permute.xlu0 %2999
        %3001 = vrot.lane.b32.xlu0 %v2350, 40
        %v3002 = vpop.permute.xlu0 %3001
        %3003 = vrot.lane.b32.xlu0 %v2351, 40
        %v3004 = vpop.permute.xlu0 %3003
        %3005 = vrot.lane.b32.xlu0 %v2352, 40
        %v3006 = vpop.permute.xlu0 %3005
        %3007 = vrot.lane.b32.xlu0 %v2353, 40
        %v3008 = vpop.permute.xlu0 %3007
        %3009 = vrot.lane.b32.xlu0 %v2354, 40
        %v3010 = vpop.permute.xlu0 %3009
        %3011 = vrot.lane.b32.xlu0 %v2355, 40
        %v3012 = vpop.permute.xlu0 %3011
        %3013 = vrot.lane.b32.xlu0 %v2356, 40
        %v3014 = vpop.permute.xlu0 %3013
        %3015 = vrot.lane.b32.xlu0 %v2357, 40
        %v3016 = vpop.permute.xlu0 %3015
        %3017 = vrot.lane.b32.xlu0 %v2358, 40
        %v3018 = vpop.permute.xlu0 %3017
        %3019 = vrot.lane.b32.xlu0 %v2359, 40
        %v3020 = vpop.permute.xlu0 %3019
        %3021 = vrot.lane.b32.xlu0 %v2360, 40
        %v3022 = vpop.permute.xlu0 %3021
        %3023 = vrot.lane.b32.xlu0 %v2361, 40
        %v3024 = vpop.permute.xlu0 %3023
        %vm3057 = vcmask 392513
        %3058 = vst.msk [vmem:[#allocation3 - $0x1] sm:$0xfe] %vm3057, %v2962
        %vm3059 = vcmask 392512
        %3060 = vst.msk [vmem:[#allocation3 + $0x7] sm:$0xff] %vm3059, %v2964
        %3061 = vst.msk [vmem:[#allocation3 + $0xf] sm:$0xfe] %vm3057, %v2966
        %3062 = vst.msk [vmem:[#allocation3 + $0x17] sm:$0xff] %vm3059, %v2968
        %3063 = vst.msk [vmem:[#allocation3 + $0x1f] sm:$0xfe] %vm3057, %v2970
        %3064 = vst.msk [vmem:[#allocation3 + $0x27] sm:$0xff] %vm3059, %v2972
        %3065 = vst.msk [vmem:[#allocation3 + $0x2f] sm:$0xfe] %vm3057, %v2974
        %3066 = vst.msk [vmem:[#allocation3 + $0x37] sm:$0xff] %vm3059, %v2976
        %3067 = vst.msk [vmem:[#allocation3 + $0x3f] sm:$0xfe] %vm3057, %v2978
        %3068 = vst.msk [vmem:[#allocation3 + $0x47] sm:$0xff] %vm3059, %v2980
        %3069 = vst.msk [vmem:[#allocation3 + $0x4f] sm:$0xfe] %vm3057, %v2982
        %3070 = vst.msk [vmem:[#allocation3 + $0x57] sm:$0xff] %vm3059, %v2984
        %3071 = vst.msk [vmem:[#allocation3 + $0x5f] sm:$0xfe] %vm3057, %v2986
        %3072 = vst.msk [vmem:[#allocation3 + $0x67] sm:$0xff] %vm3059, %v2988
        %3073 = vst.msk [vmem:[#allocation3 + $0x6f] sm:$0xfe] %vm3057, %v2990
        %3074 = vst.msk [vmem:[#allocation3 + $0x77] sm:$0xff] %vm3059, %v2992
        %3075 = vst.msk [vmem:[#allocation3 + $0x7f] sm:$0xfe] %vm3057, %v2994
        %3076 = vst.msk [vmem:[#allocation3 + $0x87] sm:$0xff] %vm3059, %v2996
        %3077 = vst.msk [vmem:[#allocation3 + $0x8f] sm:$0xfe] %vm3057, %v2998
        %3078 = vst.msk [vmem:[#allocation3 + $0x97] sm:$0xff] %vm3059, %v3000
        %3079 = vst.msk [vmem:[#allocation3 + $0x9f] sm:$0xfe] %vm3057, %v3002
        %3080 = vst.msk [vmem:[#allocation3 + $0xa7] sm:$0xff] %vm3059, %v3004
        %3081 = vst.msk [vmem:[#allocation3 + $0xaf] sm:$0xfe] %vm3057, %v3006
        %3082 = vst.msk [vmem:[#allocation3 + $0xb7] sm:$0xff] %vm3059, %v3008
        %3083 = vst.msk [vmem:[#allocation3 + $0xbf] sm:$0xfe] %vm3057, %v3010
        %3084 = vst.msk [vmem:[#allocation3 + $0xc7] sm:$0xff] %vm3059, %v3012
        %3085 = vst.msk [vmem:[#allocation3 + $0xcf] sm:$0xfe] %vm3057, %v3014
        %3086 = vst.msk [vmem:[#allocation3 + $0xd7] sm:$0xff] %vm3059, %v3016
        %3087 = vst.msk [vmem:[#allocation3 + $0xdf] sm:$0xfe] %vm3057, %v3018
        %3088 = vst.msk [vmem:[#allocation3 + $0xe7] sm:$0xff] %vm3059, %v3020
        %3089 = vst.msk [vmem:[#allocation3 + $0xef] sm:$0xfe] %vm3057, %v3022
        %3090 = vst.msk [vmem:[#allocation3 + $0xf7] sm:$0xff] %vm3059, %v3024
        %3091 = vrot.lane.b32.xlu0 %v2332, 48
        %v3092 = vpop.permute.xlu0 %3091
        %3093 = vrot.lane.b32.xlu0 %v2333, 48
        %v3094 = vpop.permute.xlu0 %3093
        %3095 = vrot.lane.b32.xlu0 %v2334, 48
        %v3096 = vpop.permute.xlu0 %3095
        %3097 = vrot.lane.b32.xlu0 %v2335, 48
        %v3098 = vpop.permute.xlu0 %3097
        %3099 = vrot.lane.b32.xlu0 %v2336, 48
        %v3100 = vpop.permute.xlu0 %3099
        %3101 = vrot.lane.b32.xlu0 %v2337, 48
        %v3102 = vpop.permute.xlu0 %3101
        %3103 = vrot.lane.b32.xlu0 %v2338, 48
        %v3104 = vpop.permute.xlu0 %3103
        %3105 = vrot.lane.b32.xlu0 %v2339, 48
        %v3106 = vpop.permute.xlu0 %3105
        %3107 = vrot.lane.b32.xlu0 %v2340, 48
        %v3108 = vpop.permute.xlu0 %3107
        %3109 = vrot.lane.b32.xlu0 %v2341, 48
        %v3110 = vpop.permute.xlu0 %3109
        %3111 = vrot.lane.b32.xlu0 %v2342, 48
        %v3112 = vpop.permute.xlu0 %3111
        %3113 = vrot.lane.b32.xlu0 %v2343, 48
        %v3114 = vpop.permute.xlu0 %3113
        %3115 = vrot.lane.b32.xlu0 %v2344, 48
        %v3116 = vpop.permute.xlu0 %3115
        %3117 = vrot.lane.b32.xlu0 %v2345, 48
        %v3118 = vpop.permute.xlu0 %3117
        %3119 = vrot.lane.b32.xlu0 %v2346, 48
        %v3120 = vpop.permute.xlu0 %3119
        %3121 = vrot.lane.b32.xlu0 %v2347, 48
        %v3122 = vpop.permute.xlu0 %3121
        %3123 = vrot.lane.b32.xlu0 %v2348, 48
        %v3124 = vpop.permute.xlu0 %3123
        %3125 = vrot.lane.b32.xlu0 %v2349, 48
        %v3126 = vpop.permute.xlu0 %3125
        %3127 = vrot.lane.b32.xlu0 %v2350, 48
        %v3128 = vpop.permute.xlu0 %3127
        %3129 = vrot.lane.b32.xlu0 %v2351, 48
        %v3130 = vpop.permute.xlu0 %3129
        %3131 = vrot.lane.b32.xlu0 %v2352, 48
        %v3132 = vpop.permute.xlu0 %3131
        %3133 = vrot.lane.b32.xlu0 %v2353, 48
        %v3134 = vpop.permute.xlu0 %3133
        %3135 = vrot.lane.b32.xlu0 %v2354, 48
        %v3136 = vpop.permute.xlu0 %3135
        %3137 = vrot.lane.b32.xlu0 %v2355, 48
        %v3138 = vpop.permute.xlu0 %3137
        %3139 = vrot.lane.b32.xlu0 %v2356, 48
        %v3140 = vpop.permute.xlu0 %3139
        %3141 = vrot.lane.b32.xlu0 %v2357, 48
        %v3142 = vpop.permute.xlu0 %3141
        %3143 = vrot.lane.b32.xlu0 %v2358, 48
        %v3144 = vpop.permute.xlu0 %3143
        %3145 = vrot.lane.b32.xlu0 %v2359, 48
        %v3146 = vpop.permute.xlu0 %3145
        %3147 = vrot.lane.b32.xlu0 %v2360, 48
        %v3148 = vpop.permute.xlu0 %3147
        %3149 = vrot.lane.b32.xlu0 %v2361, 48
        %v3150 = vpop.permute.xlu0 %3149
        %vm3181 = vcmask 458112
        %3182 = vst.msk [vmem:[#allocation3 + $0x1] sm:$0xff] %vm3181, %v3092
        %vm3183 = vcmask 457088
        %3184 = vst.msk [vmem:[#allocation3 + $0x9] sm:$0x7f] %vm3183, %v3094
        %3185 = vst.msk [vmem:[#allocation3 + $0x11] sm:$0xff] %vm3181, %v3096
        %3186 = vst.msk [vmem:[#allocation3 + $0x19] sm:$0x7f] %vm3183, %v3098
        %3187 = vst.msk [vmem:[#allocation3 + $0x21] sm:$0xff] %vm3181, %v3100
        %3188 = vst.msk [vmem:[#allocation3 + $0x29] sm:$0x7f] %vm3183, %v3102
        %3189 = vst.msk [vmem:[#allocation3 + $0x31] sm:$0xff] %vm3181, %v3104
        %3190 = vst.msk [vmem:[#allocation3 + $0x39] sm:$0x7f] %vm3183, %v3106
        %3191 = vst.msk [vmem:[#allocation3 + $0x41] sm:$0xff] %vm3181, %v3108
        %3192 = vst.msk [vmem:[#allocation3 + $0x49] sm:$0x7f] %vm3183, %v3110
        %3193 = vst.msk [vmem:[#allocation3 + $0x51] sm:$0xff] %vm3181, %v3112
        %3194 = vst.msk [vmem:[#allocation3 + $0x59] sm:$0x7f] %vm3183, %v3114
        %3195 = vst.msk [vmem:[#allocation3 + $0x61] sm:$0xff] %vm3181, %v3116
        %3196 = vst.msk [vmem:[#allocation3 + $0x69] sm:$0x7f] %vm3183, %v3118
        %3197 = vst.msk [vmem:[#allocation3 + $0x71] sm:$0xff] %vm3181, %v3120
        %3198 = vst.msk [vmem:[#allocation3 + $0x79] sm:$0x7f] %vm3183, %v3122
        %3199 = vst.msk [vmem:[#allocation3 + $0x81] sm:$0xff] %vm3181, %v3124
        %3200 = vst.msk [vmem:[#allocation3 + $0x89] sm:$0x7f] %vm3183, %v3126
        %3201 = vst.msk [vmem:[#allocation3 + $0x91] sm:$0xff] %vm3181, %v3128
        %3202 = vst.msk [vmem:[#allocation3 + $0x99] sm:$0x7f] %vm3183, %v3130
        %3203 = vst.msk [vmem:[#allocation3 + $0xa1] sm:$0xff] %vm3181, %v3132
        %3204 = vst.msk [vmem:[#allocation3 + $0xa9] sm:$0x7f] %vm3183, %v3134
        %3205 = vst.msk [vmem:[#allocation3 + $0xb1] sm:$0xff] %vm3181, %v3136
        %3206 = vst.msk [vmem:[#allocation3 + $0xb9] sm:$0x7f] %vm3183, %v3138
        %3207 = vst.msk [vmem:[#allocation3 + $0xc1] sm:$0xff] %vm3181, %v3140
        %3208 = vst.msk [vmem:[#allocation3 + $0xc9] sm:$0x7f] %vm3183, %v3142
        %3209 = vst.msk [vmem:[#allocation3 + $0xd1] sm:$0xff] %vm3181, %v3144
        %3210 = vst.msk [vmem:[#allocation3 + $0xd9] sm:$0x7f] %vm3183, %v3146
        %3211 = vst.msk [vmem:[#allocation3 + $0xe1] sm:$0xff] %vm3181, %v3148
        %3212 = vst.msk [vmem:[#allocation3 + $0xe9] sm:$0x7f] %vm3183, %v3150
        %3213 = vrot.lane.b32.xlu0 %v2332, 56
        %v3214 = vpop.permute.xlu0 %3213
        %3215 = vrot.lane.b32.xlu0 %v2333, 56
        %v3216 = vpop.permute.xlu0 %3215
        %3217 = vrot.lane.b32.xlu0 %v2334, 56
        %v3218 = vpop.permute.xlu0 %3217
        %3219 = vrot.lane.b32.xlu0 %v2335, 56
        %v3220 = vpop.permute.xlu0 %3219
        %3221 = vrot.lane.b32.xlu0 %v2336, 56
        %v3222 = vpop.permute.xlu0 %3221
        %3223 = vrot.lane.b32.xlu0 %v2337, 56
        %v3224 = vpop.permute.xlu0 %3223
        %3225 = vrot.lane.b32.xlu0 %v2338, 56
        %v3226 = vpop.permute.xlu0 %3225
        %3227 = vrot.lane.b32.xlu0 %v2339, 56
        %v3228 = vpop.permute.xlu0 %3227
        %3229 = vrot.lane.b32.xlu0 %v2340, 56
        %v3230 = vpop.permute.xlu0 %3229
        %3231 = vrot.lane.b32.xlu0 %v2341, 56
        %v3232 = vpop.permute.xlu0 %3231
        %3233 = vrot.lane.b32.xlu0 %v2342, 56
        %v3234 = vpop.permute.xlu0 %3233
        %3235 = vrot.lane.b32.xlu0 %v2343, 56
        %v3236 = vpop.permute.xlu0 %3235
        %3237 = vrot.lane.b32.xlu0 %v2344, 56
        %v3238 = vpop.permute.xlu0 %3237
        %3239 = vrot.lane.b32.xlu0 %v2345, 56
        %v3240 = vpop.permute.xlu0 %3239
        %3241 = vrot.lane.b32.xlu0 %v2346, 56
        %v3242 = vpop.permute.xlu0 %3241
        %3243 = vrot.lane.b32.xlu0 %v2347, 56
        %v3244 = vpop.permute.xlu0 %3243
        %3245 = vrot.lane.b32.xlu0 %v2348, 56
        %v3246 = vpop.permute.xlu0 %3245
        %3247 = vrot.lane.b32.xlu0 %v2349, 56
        %v3248 = vpop.permute.xlu0 %3247
        %3249 = vrot.lane.b32.xlu0 %v2350, 56
        %v3250 = vpop.permute.xlu0 %3249
        %3251 = vrot.lane.b32.xlu0 %v2351, 56
        %v3252 = vpop.permute.xlu0 %3251
        %3253 = vrot.lane.b32.xlu0 %v2352, 56
        %v3254 = vpop.permute.xlu0 %3253
        %3255 = vrot.lane.b32.xlu0 %v2353, 56
        %v3256 = vpop.permute.xlu0 %3255
        %3257 = vrot.lane.b32.xlu0 %v2354, 56
        %v3258 = vpop.permute.xlu0 %3257
        %3259 = vrot.lane.b32.xlu0 %v2355, 56
        %v3260 = vpop.permute.xlu0 %3259
        %3261 = vrot.lane.b32.xlu0 %v2356, 56
        %v3262 = vpop.permute.xlu0 %3261
        %3263 = vrot.lane.b32.xlu0 %v2357, 56
        %v3264 = vpop.permute.xlu0 %3263
        %3265 = vrot.lane.b32.xlu0 %v2358, 56
        %v3266 = vpop.permute.xlu0 %3265
        %3267 = vrot.lane.b32.xlu0 %v2359, 56
        %v3268 = vpop.permute.xlu0 %3267
        %3269 = vrot.lane.b32.xlu0 %v2360, 56
        %v3270 = vpop.permute.xlu0 %3269
        %3271 = vrot.lane.b32.xlu0 %v2361, 56
        %v3272 = vpop.permute.xlu0 %3271
        %vm3303 = vcmask 523712
        %3304 = vst.msk [vmem:[#allocation3] sm:$0xff] %vm3303, %v3214
        %3305 = vst.msk [vmem:[#allocation3 + $0x8] sm:$0xff] %vm3303, %v3216
        %3306 = vst.msk [vmem:[#allocation3 + $0x10] sm:$0xff] %vm3303, %v3218
        %3307 = vst.msk [vmem:[#allocation3 + $0x18] sm:$0xff] %vm3303, %v3220
        %3308 = vst.msk [vmem:[#allocation3 + $0x20] sm:$0xff] %vm3303, %v3222
        %3309 = vst.msk [vmem:[#allocation3 + $0x28] sm:$0xff] %vm3303, %v3224
        %3310 = vst.msk [vmem:[#allocation3 + $0x30] sm:$0xff] %vm3303, %v3226
        %3311 = vst.msk [vmem:[#allocation3 + $0x38] sm:$0xff] %vm3303, %v3228
        %3312 = vst.msk [vmem:[#allocation3 + $0x40] sm:$0xff] %vm3303, %v3230
        %3313 = vst.msk [vmem:[#allocation3 + $0x48] sm:$0xff] %vm3303, %v3232
        %3314 = vst.msk [vmem:[#allocation3 + $0x50] sm:$0xff] %vm3303, %v3234
        %3315 = vst.msk [vmem:[#allocation3 + $0x58] sm:$0xff] %vm3303, %v3236
        %3316 = vst.msk [vmem:[#allocation3 + $0x60] sm:$0xff] %vm3303, %v3238
        %3317 = vst.msk [vmem:[#allocation3 + $0x68] sm:$0xff] %vm3303, %v3240
        %3318 = vst.msk [vmem:[#allocation3 + $0x70] sm:$0xff] %vm3303, %v3242
        %3319 = vst.msk [vmem:[#allocation3 + $0x78] sm:$0xff] %vm3303, %v3244
        %3320 = vst.msk [vmem:[#allocation3 + $0x80] sm:$0xff] %vm3303, %v3246
        %3321 = vst.msk [vmem:[#allocation3 + $0x88] sm:$0xff] %vm3303, %v3248
        %3322 = vst.msk [vmem:[#allocation3 + $0x90] sm:$0xff] %vm3303, %v3250
        %3323 = vst.msk [vmem:[#allocation3 + $0x98] sm:$0xff] %vm3303, %v3252
        %3324 = vst.msk [vmem:[#allocation3 + $0xa0] sm:$0xff] %vm3303, %v3254
        %3325 = vst.msk [vmem:[#allocation3 + $0xa8] sm:$0xff] %vm3303, %v3256
        %3326 = vst.msk [vmem:[#allocation3 + $0xb0] sm:$0xff] %vm3303, %v3258
        %3327 = vst.msk [vmem:[#allocation3 + $0xb8] sm:$0xff] %vm3303, %v3260
        %3328 = vst.msk [vmem:[#allocation3 + $0xc0] sm:$0xff] %vm3303, %v3262
        %3329 = vst.msk [vmem:[#allocation3 + $0xc8] sm:$0xff] %vm3303, %v3264
        %3330 = vst.msk [vmem:[#allocation3 + $0xd0] sm:$0xff] %vm3303, %v3266
        %3331 = vst.msk [vmem:[#allocation3 + $0xd8] sm:$0xff] %vm3303, %v3268
        %3332 = vst.msk [vmem:[#allocation3 + $0xe0] sm:$0xff] %vm3303, %v3270
        %3333 = vst.msk [vmem:[#allocation3 + $0xe8] sm:$0xff] %vm3303, %v3272
        %3334 = vrot.lane.b32.xlu0 %v2332, 64
        %v3335 = vpop.permute.xlu0 %3334
        %3336 = vrot.lane.b32.xlu0 %v2333, 64
        %v3337 = vpop.permute.xlu0 %3336
        %3338 = vrot.lane.b32.xlu0 %v2334, 64
        %v3339 = vpop.permute.xlu0 %3338
        %3340 = vrot.lane.b32.xlu0 %v2335, 64
        %v3341 = vpop.permute.xlu0 %3340
        %3342 = vrot.lane.b32.xlu0 %v2336, 64
        %v3343 = vpop.permute.xlu0 %3342
        %3344 = vrot.lane.b32.xlu0 %v2337, 64
        %v3345 = vpop.permute.xlu0 %3344
        %3346 = vrot.lane.b32.xlu0 %v2338, 64
        %v3347 = vpop.permute.xlu0 %3346
        %3348 = vrot.lane.b32.xlu0 %v2339, 64
        %v3349 = vpop.permute.xlu0 %3348
        %3350 = vrot.lane.b32.xlu0 %v2340, 64
        %v3351 = vpop.permute.xlu0 %3350
        %3352 = vrot.lane.b32.xlu0 %v2341, 64
        %v3353 = vpop.permute.xlu0 %3352
        %3354 = vrot.lane.b32.xlu0 %v2342, 64
        %v3355 = vpop.permute.xlu0 %3354
        %3356 = vrot.lane.b32.xlu0 %v2343, 64
        %v3357 = vpop.permute.xlu0 %3356
        %3358 = vrot.lane.b32.xlu0 %v2344, 64
        %v3359 = vpop.permute.xlu0 %3358
        %3360 = vrot.lane.b32.xlu0 %v2345, 64
        %v3361 = vpop.permute.xlu0 %3360
        %3362 = vrot.lane.b32.xlu0 %v2346, 64
        %v3363 = vpop.permute.xlu0 %3362
        %3364 = vrot.lane.b32.xlu0 %v2347, 64
        %v3365 = vpop.permute.xlu0 %3364
        %3366 = vrot.lane.b32.xlu0 %v2348, 64
        %v3367 = vpop.permute.xlu0 %3366
        %3368 = vrot.lane.b32.xlu0 %v2349, 64
        %v3369 = vpop.permute.xlu0 %3368
        %3370 = vrot.lane.b32.xlu0 %v2350, 64
        %v3371 = vpop.permute.xlu0 %3370
        %3372 = vrot.lane.b32.xlu0 %v2351, 64
        %v3373 = vpop.permute.xlu0 %3372
        %3374 = vrot.lane.b32.xlu0 %v2352, 64
        %v3375 = vpop.permute.xlu0 %3374
        %3376 = vrot.lane.b32.xlu0 %v2353, 64
        %v3377 = vpop.permute.xlu0 %3376
        %3378 = vrot.lane.b32.xlu0 %v2354, 64
        %v3379 = vpop.permute.xlu0 %3378
        %3380 = vrot.lane.b32.xlu0 %v2355, 64
        %v3381 = vpop.permute.xlu0 %3380
        %3382 = vrot.lane.b32.xlu0 %v2356, 64
        %v3383 = vpop.permute.xlu0 %3382
        %3384 = vrot.lane.b32.xlu0 %v2357, 64
        %v3385 = vpop.permute.xlu0 %3384
        %3386 = vrot.lane.b32.xlu0 %v2358, 64
        %v3387 = vpop.permute.xlu0 %3386
        %3388 = vrot.lane.b32.xlu0 %v2359, 64
        %v3389 = vpop.permute.xlu0 %3388
        %3390 = vrot.lane.b32.xlu0 %v2360, 64
        %v3391 = vpop.permute.xlu0 %3390
        %3392 = vrot.lane.b32.xlu0 %v2361, 64
        %v3393 = vpop.permute.xlu0 %3392
        %vm3424 = vcmask 589313
        %3425 = vst.msk [vmem:[#allocation3 - $0x1] sm:$0xfe] %vm3424, %v3335
        %vm3426 = vcmask 589312
        %3427 = vst.msk [vmem:[#allocation3 + $0x7] sm:$0xff] %vm3426, %v3337
        %3428 = vst.msk [vmem:[#allocation3 + $0xf] sm:$0xfe] %vm3424, %v3339
        %3429 = vst.msk [vmem:[#allocation3 + $0x17] sm:$0xff] %vm3426, %v3341
        %3430 = vst.msk [vmem:[#allocation3 + $0x1f] sm:$0xfe] %vm3424, %v3343
        %3431 = vst.msk [vmem:[#allocation3 + $0x27] sm:$0xff] %vm3426, %v3345
        %3432 = vst.msk [vmem:[#allocation3 + $0x2f] sm:$0xfe] %vm3424, %v3347
        %3433 = vst.msk [vmem:[#allocation3 + $0x37] sm:$0xff] %vm3426, %v3349
        %3434 = vst.msk [vmem:[#allocation3 + $0x3f] sm:$0xfe] %vm3424, %v3351
        %3435 = vst.msk [vmem:[#allocation3 + $0x47] sm:$0xff] %vm3426, %v3353
        %3436 = vst.msk [vmem:[#allocation3 + $0x4f] sm:$0xfe] %vm3424, %v3355
        %3437 = vst.msk [vmem:[#allocation3 + $0x57] sm:$0xff] %vm3426, %v3357
        %3438 = vst.msk [vmem:[#allocation3 + $0x5f] sm:$0xfe] %vm3424, %v3359
        %3439 = vst.msk [vmem:[#allocation3 + $0x67] sm:$0xff] %vm3426, %v3361
        %3440 = vst.msk [vmem:[#allocation3 + $0x6f] sm:$0xfe] %vm3424, %v3363
        %3441 = vst.msk [vmem:[#allocation3 + $0x77] sm:$0xff] %vm3426, %v3365
        %3442 = vst.msk [vmem:[#allocation3 + $0x7f] sm:$0xfe] %vm3424, %v3367
        %3443 = vst.msk [vmem:[#allocation3 + $0x87] sm:$0xff] %vm3426, %v3369
        %3444 = vst.msk [vmem:[#allocation3 + $0x8f] sm:$0xfe] %vm3424, %v3371
        %3445 = vst.msk [vmem:[#allocation3 + $0x97] sm:$0xff] %vm3426, %v3373
        %3446 = vst.msk [vmem:[#allocation3 + $0x9f] sm:$0xfe] %vm3424, %v3375
        %3447 = vst.msk [vmem:[#allocation3 + $0xa7] sm:$0xff] %vm3426, %v3377
        %3448 = vst.msk [vmem:[#allocation3 + $0xaf] sm:$0xfe] %vm3424, %v3379
        %3449 = vst.msk [vmem:[#allocation3 + $0xb7] sm:$0xff] %vm3426, %v3381
        %3450 = vst.msk [vmem:[#allocation3 + $0xbf] sm:$0xfe] %vm3424, %v3383
        %3451 = vst.msk [vmem:[#allocation3 + $0xc7] sm:$0xff] %vm3426, %v3385
        %3452 = vst.msk [vmem:[#allocation3 + $0xcf] sm:$0xfe] %vm3424, %v3387
        %3453 = vst.msk [vmem:[#allocation3 + $0xd7] sm:$0xff] %vm3426, %v3389
        %3454 = vst.msk [vmem:[#allocation3 + $0xdf] sm:$0xfe] %vm3424, %v3391
        %3455 = vst.msk [vmem:[#allocation3 + $0xe7] sm:$0xff] %vm3426, %v3393
        %v3456 = vld [vmem:[#allocation3] sm:$0xff]
        %v3457 = vld [vmem:[#allocation3 + $0x8] sm:$0xff]
        %v3458 = vld [vmem:[#allocation3 + $0x10] sm:$0xff]
        %v3459 = vld [vmem:[#allocation3 + $0x18] sm:$0xff]
        %v3460 = vld [vmem:[#allocation3 + $0x20] sm:$0xff]
        %v3461 = vld [vmem:[#allocation3 + $0x28] sm:$0xff]
        %v3462 = vld [vmem:[#allocation3 + $0x30] sm:$0xff]
        %v3463 = vld [vmem:[#allocation3 + $0x38] sm:$0xff]
        %v3464 = vld [vmem:[#allocation3 + $0x40] sm:$0xff]
        %v3465 = vld [vmem:[#allocation3 + $0x48] sm:$0xff]
        %v3466 = vld [vmem:[#allocation3 + $0x50] sm:$0xff]
        %v3467 = vld [vmem:[#allocation3 + $0x58] sm:$0xff]
        %v3468 = vld [vmem:[#allocation3 + $0x60] sm:$0xff]
        %v3469 = vld [vmem:[#allocation3 + $0x68] sm:$0xff]
        %v3470 = vld [vmem:[#allocation3 + $0x70] sm:$0xff]
        %v3471 = vld [vmem:[#allocation3 + $0x78] sm:$0xff]
        %v3472 = vld [vmem:[#allocation3 + $0x80] sm:$0xff]
        %v3473 = vld [vmem:[#allocation3 + $0x88] sm:$0xff]
        %v3474 = vld [vmem:[#allocation3 + $0x90] sm:$0xff]
        %v3475 = vld [vmem:[#allocation3 + $0x98] sm:$0xff]
        %v3476 = vld [vmem:[#allocation3 + $0xa0] sm:$0xff]
        %v3477 = vld [vmem:[#allocation3 + $0xa8] sm:$0xff]
        %v3478 = vld [vmem:[#allocation3 + $0xb0] sm:$0xff]
        %v3479 = vld [vmem:[#allocation3 + $0xb8] sm:$0xff]
        %v3480 = vld [vmem:[#allocation3 + $0xc0] sm:$0xff]
        %v3481 = vld [vmem:[#allocation3 + $0xc8] sm:$0xff]
        %v3482 = vld [vmem:[#allocation3 + $0xd0] sm:$0xff]
        %v3483 = vld [vmem:[#allocation3 + $0xd8] sm:$0xff]
        %v3484 = vld [vmem:[#allocation3 + $0xe0] sm:$0xff]
        %v3485 = vld [vmem:[#allocation3 + $0xe8] sm:$0xff]
        %v3486 = vld [vmem:[#allocation3 + $0xf0] sm:$0xff]
        %v3487 = vld [vmem:[#allocation3 + $0xf8] sm:$0xff]
        %v3488 = vld [vmem:[%s2] sm:$0xff]
        %v3489 = vld [vmem:[%s2 + $0x8] sm:$0xff]
        %v3490 = vld [vmem:[%s2 + $0x10] sm:$0xff]
        %v3491 = vld [vmem:[%s2 + $0x18] sm:$0xff]
        %v3492 = vld [vmem:[%s2 + $0x20] sm:$0xff]
        %v3493 = vld [vmem:[%s2 + $0x28] sm:$0xff]
        %v3494 = vld [vmem:[%s2 + $0x30] sm:$0xff]
        %v3495 = vld [vmem:[%s2 + $0x38] sm:$0xff]
        %v3496 = vld [vmem:[%s2 + $0x40] sm:$0xff]
        %v3498 = vsel %vm2362, %v3456, 0
        %v3501 = vsel %vm2362, %v3457, 0
        %v3504 = vsel %vm2362, %v3458, 0
        %v3507 = vsel %vm2362, %v3459, 0
        %v3510 = vsel %vm2362, %v3460, 0
        %v3513 = vsel %vm2362, %v3461, 0
        %v3516 = vsel %vm2362, %v3462, 0
        %v3519 = vsel %vm2362, %v3463, 0
        %v3522 = vsel %vm2362, %v3464, 0
        %v3525 = vsel %vm2362, %v3465, 0
        %v3528 = vsel %vm2362, %v3466, 0
        %v3531 = vsel %vm2362, %v3467, 0
        %v3534 = vsel %vm2362, %v3468, 0
        %v3537 = vsel %vm2362, %v3469, 0
        %v3540 = vsel %vm2362, %v3470, 0
        %v3543 = vsel %vm2362, %v3471, 0
        %v3546 = vsel %vm2362, %v3472, 0
        %v3549 = vsel %vm2362, %v3473, 0
        %v3552 = vsel %vm2362, %v3474, 0
        %v3555 = vsel %vm2362, %v3475, 0
        %v3558 = vsel %vm2362, %v3476, 0
        %v3561 = vsel %vm2362, %v3477, 0
        %v3564 = vsel %vm2362, %v3478, 0
        %v3567 = vsel %vm2362, %v3479, 0
        %v3570 = vsel %vm2362, %v3480, 0
        %v3573 = vsel %vm2362, %v3481, 0
        %v3576 = vsel %vm2362, %v3482, 0
        %v3579 = vsel %vm2362, %v3483, 0
        %v3582 = vsel %vm2362, %v3484, 0
        %v3585 = vsel %vm2362, %v3485, 0
        %v3588 = vsel %vm2362, %v3486, 0
        %v3591 = vsel %vm2362, %v3487, 0
        %3593 = vmatpush.msra.mxu0 0.0
        %3594 = vmatpush.msra.mxu0 0.0
        %3595 = vmatpush.msra.mxu0 0.0
        %3596 = vmatpush.msra.mxu0 0.0
        %3597 = vmatpush.msra.mxu0 0.0
        %3598 = vmatpush.msra.mxu0 0.0
        %3599 = vmatpush.msra.mxu0 0.0
        %3600 = vmatpush.msra.mxu0 %v3496
        %3601 = vmatpush.msra.mxu0 %v3495
        %3602 = vmatpush.msra.mxu0 %v3494
        %3603 = vmatpush.msra.mxu0 %v3493
        %3604 = vmatpush.msra.mxu0 %v3492
        %3605 = vmatpush.msra.mxu0 %v3491
        %3606 = vmatpush.msra.mxu0 %v3490
        %3607 = vmatpush.msra.mxu0 %v3489
        %3608 = vmatpush.msra.mxu0 %v3488
        %3609 = vmatmul.f32.gmra.mxu0 %v3498
        %v3610 = vpop.f32.mrf.mxu0
        %v3611 = vadd.f32 0.0, %v3610
        %3612 = vmatmul.f32.gmra.mxu0 %v3501
        %v3613 = vpop.f32.mrf.mxu0
        %v3614 = vadd.f32 0.0, %v3613
        %3615 = vmatmul.f32.gmra.mxu0 %v3504
        %v3616 = vpop.f32.mrf.mxu0
        %v3617 = vadd.f32 0.0, %v3616
        %3618 = vmatmul.f32.gmra.mxu0 %v3507
        %v3619 = vpop.f32.mrf.mxu0
        %v3620 = vadd.f32 0.0, %v3619
        %3621 = vmatmul.f32.gmra.mxu0 %v3510
        %v3622 = vpop.f32.mrf.mxu0
        %v3623 = vadd.f32 0.0, %v3622
        %3624 = vmatmul.f32.gmra.mxu0 %v3513
        %v3625 = vpop.f32.mrf.mxu0
        %v3626 = vadd.f32 0.0, %v3625
        %3627 = vmatmul.f32.gmra.mxu0 %v3516
        %v3628 = vpop.f32.mrf.mxu0
        %v3629 = vadd.f32 0.0, %v3628
        %3630 = vmatmul.f32.gmra.mxu0 %v3519
        %v3631 = vpop.f32.mrf.mxu0
        %v3632 = vadd.f32 0.0, %v3631
        %3633 = vmatmul.f32.gmra.mxu0 %v3522
        %v3634 = vpop.f32.mrf.mxu0
        %v3635 = vadd.f32 0.0, %v3634
        %3636 = vmatmul.f32.gmra.mxu0 %v3525
        %v3637 = vpop.f32.mrf.mxu0
        %v3638 = vadd.f32 0.0, %v3637
        %3639 = vmatmul.f32.gmra.mxu0 %v3528
        %v3640 = vpop.f32.mrf.mxu0
        %v3641 = vadd.f32 0.0, %v3640
        %3642 = vmatmul.f32.gmra.mxu0 %v3531
        %v3643 = vpop.f32.mrf.mxu0
        %v3644 = vadd.f32 0.0, %v3643
        %3645 = vmatmul.f32.gmra.mxu0 %v3534
        %v3646 = vpop.f32.mrf.mxu0
        %v3647 = vadd.f32 0.0, %v3646
        %3648 = vmatmul.f32.gmra.mxu0 %v3537
        %v3649 = vpop.f32.mrf.mxu0
        %v3650 = vadd.f32 0.0, %v3649
        %3651 = vmatmul.f32.gmra.mxu0 %v3540
        %v3652 = vpop.f32.mrf.mxu0
        %v3653 = vadd.f32 0.0, %v3652
        %3654 = vmatmul.f32.gmra.mxu0 %v3543
        %v3655 = vpop.f32.mrf.mxu0
        %v3656 = vadd.f32 0.0, %v3655
        %3657 = vmatmul.f32.gmra.mxu0 %v3546
        %v3658 = vpop.f32.mrf.mxu0
        %v3659 = vadd.f32 0.0, %v3658
        %3660 = vmatmul.f32.gmra.mxu0 %v3549
        %v3661 = vpop.f32.mrf.mxu0
        %v3662 = vadd.f32 0.0, %v3661
        %3663 = vmatmul.f32.gmra.mxu0 %v3552
        %v3664 = vpop.f32.mrf.mxu0
        %v3665 = vadd.f32 0.0, %v3664
        %3666 = vmatmul.f32.gmra.mxu0 %v3555
        %v3667 = vpop.f32.mrf.mxu0
        %v3668 = vadd.f32 0.0, %v3667
        %3669 = vmatmul.f32.gmra.mxu0 %v3558
        %v3670 = vpop.f32.mrf.mxu0
        %v3671 = vadd.f32 0.0, %v3670
        %3672 = vmatmul.f32.gmra.mxu0 %v3561
        %v3673 = vpop.f32.mrf.mxu0
        %v3674 = vadd.f32 0.0, %v3673
        %3675 = vmatmul.f32.gmra.mxu0 %v3564
        %v3676 = vpop.f32.mrf.mxu0
        %v3677 = vadd.f32 0.0, %v3676
        %3678 = vmatmul.f32.gmra.mxu0 %v3567
        %v3679 = vpop.f32.mrf.mxu0
        %v3680 = vadd.f32 0.0, %v3679
        %3681 = vmatmul.f32.gmra.mxu0 %v3570
        %v3682 = vpop.f32.mrf.mxu0
        %v3683 = vadd.f32 0.0, %v3682
        %3684 = vmatmul.f32.gmra.mxu0 %v3573
        %v3685 = vpop.f32.mrf.mxu0
        %v3686 = vadd.f32 0.0, %v3685
        %3687 = vmatmul.f32.gmra.mxu0 %v3576
        %v3688 = vpop.f32.mrf.mxu0
        %v3689 = vadd.f32 0.0, %v3688
        %3690 = vmatmul.f32.gmra.mxu0 %v3579
        %v3691 = vpop.f32.mrf.mxu0
        %v3692 = vadd.f32 0.0, %v3691
        %3693 = vmatmul.f32.gmra.mxu0 %v3582
        %v3694 = vpop.f32.mrf.mxu0
        %v3695 = vadd.f32 0.0, %v3694
        %3696 = vmatmul.f32.gmra.mxu0 %v3585
        %v3697 = vpop.f32.mrf.mxu0
        %v3698 = vadd.f32 0.0, %v3697
        %3699 = vmatmul.f32.gmra.mxu0 %v3588
        %v3700 = vpop.f32.mrf.mxu0
        %v3701 = vadd.f32 0.0, %v3700
        %3702 = vmatmul.f32.gmra.mxu0 %v3591
        %v3703 = vpop.f32.mrf.mxu0
        %v3704 = vadd.f32 0.0, %v3703
        %3705 = vdwg.mxu0
        %v3706 = vadd.f32 %v3611, %v3614
        %v3707 = vadd.f32 %v3706, %v3617
        %v3708 = vadd.f32 %v3707, %v3620
        %v3709 = vadd.f32 %v3708, %v3623
        %v3710 = vadd.f32 %v3709, %v3626
        %v3711 = vadd.f32 %v3710, %v3629
        %v3712 = vadd.f32 %v3711, %v3632
        %v3713 = vadd.f32 %v3712, %v3635
        %v3714 = vadd.f32 %v3713, %v3638
        %v3715 = vadd.f32 %v3714, %v3641
        %v3716 = vadd.f32 %v3715, %v3644
        %v3717 = vadd.f32 %v3716, %v3647
        %v3718 = vadd.f32 %v3717, %v3650
        %v3719 = vadd.f32 %v3718, %v3653
        %v3720 = vadd.f32 %v3719, %v3656
        %v3721 = vadd.f32 %v3720, %v3659
        %v3722 = vadd.f32 %v3721, %v3662
        %v3723 = vadd.f32 %v3722, %v3665
        %v3724 = vadd.f32 %v3723, %v3668
        %v3725 = vadd.f32 %v3724, %v3671
        %v3726 = vadd.f32 %v3725, %v3674
        %v3727 = vadd.f32 %v3726, %v3677
        %v3728 = vadd.f32 %v3727, %v3680
        %v3729 = vadd.f32 %v3728, %v3683
        %v3730 = vadd.f32 %v3729, %v3686
        %v3731 = vadd.f32 %v3730, %v3689
        %v3732 = vadd.f32 %v3731, %v3692
        %v3733 = vadd.f32 %v3732, %v3695
        %v3734 = vadd.f32 %v3733, %v3698
        %v3735 = vadd.f32 %v3734, %v3701
        %v3736 = vadd.f32 %v3735, %v3704
        %v3737 = vrot.slane %v3736, 4
        %v3738 = vadd.f32 %v3736, %v3737
        %v3739 = vrot.slane %v3738, 2
        %v3740 = vadd.f32 %v3738, %v3739
        %v3741 = vrot.slane %v3740, 1
        %v3742 = vadd.f32 %v3740, %v3741
        %v3743 = vmul.f32 %v3611, %v3611
        %v3744 = vmul.f32 %v3614, %v3614
        %v3745 = vmul.f32 %v3617, %v3617
        %v3746 = vmul.f32 %v3620, %v3620
        %v3747 = vmul.f32 %v3623, %v3623
        %v3748 = vmul.f32 %v3626, %v3626
        %v3749 = vmul.f32 %v3629, %v3629
        %v3750 = vmul.f32 %v3632, %v3632
        %v3751 = vmul.f32 %v3635, %v3635
        %v3752 = vmul.f32 %v3638, %v3638
        %v3753 = vmul.f32 %v3641, %v3641
        %v3754 = vmul.f32 %v3644, %v3644
        %v3755 = vmul.f32 %v3647, %v3647
        %v3756 = vmul.f32 %v3650, %v3650
        %v3757 = vmul.f32 %v3653, %v3653
        %v3758 = vmul.f32 %v3656, %v3656
        %v3759 = vmul.f32 %v3659, %v3659
        %v3760 = vmul.f32 %v3662, %v3662
        %v3761 = vmul.f32 %v3665, %v3665
        %v3762 = vmul.f32 %v3668, %v3668
        %v3763 = vmul.f32 %v3671, %v3671
        %v3764 = vmul.f32 %v3674, %v3674
        %v3765 = vmul.f32 %v3677, %v3677
        %v3766 = vmul.f32 %v3680, %v3680
        %v3767 = vmul.f32 %v3683, %v3683
        %v3768 = vmul.f32 %v3686, %v3686
        %v3769 = vmul.f32 %v3689, %v3689
        %v3770 = vmul.f32 %v3692, %v3692
        %v3771 = vmul.f32 %v3695, %v3695
        %v3772 = vmul.f32 %v3698, %v3698
        %v3773 = vmul.f32 %v3701, %v3701
        %v3774 = vmul.f32 %v3704, %v3704
        %v3775 = vadd.f32 %v3743, %v3744
        %v3776 = vadd.f32 %v3775, %v3745
        %v3777 = vadd.f32 %v3776, %v3746
        %v3778 = vadd.f32 %v3777, %v3747
        %v3779 = vadd.f32 %v3778, %v3748
        %v3780 = vadd.f32 %v3779, %v3749
        %v3781 = vadd.f32 %v3780, %v3750
        %v3782 = vadd.f32 %v3781, %v3751
        %v3783 = vadd.f32 %v3782, %v3752
        %v3784 = vadd.f32 %v3783, %v3753
        %v3785 = vadd.f32 %v3784, %v3754
        %v3786 = vadd.f32 %v3785, %v3755
        %v3787 = vadd.f32 %v3786, %v3756
        %v3788 = vadd.f32 %v3787, %v3757
        %v3789 = vadd.f32 %v3788, %v3758
        %v3790 = vadd.f32 %v3789, %v3759
        %v3791 = vadd.f32 %v3790, %v3760
        %v3792 = vadd.f32 %v3791, %v3761
        %v3793 = vadd.f32 %v3792, %v3762
        %v3794 = vadd.f32 %v3793, %v3763
        %v3795 = vadd.f32 %v3794, %v3764
        %v3796 = vadd.f32 %v3795, %v3765
        %v3797 = vadd.f32 %v3796, %v3766
        %v3798 = vadd.f32 %v3797, %v3767
        %v3799 = vadd.f32 %v3798, %v3768
        %v3800 = vadd.f32 %v3799, %v3769
        %v3801 = vadd.f32 %v3800, %v3770
        %v3802 = vadd.f32 %v3801, %v3771
        %v3803 = vadd.f32 %v3802, %v3772
        %v3804 = vadd.f32 %v3803, %v3773
        %v3805 = vadd.f32 %v3804, %v3774
        %v3806 = vrot.slane %v3805, 4
        %v3807 = vadd.f32 %v3805, %v3806
        %v3808 = vrot.slane %v3807, 2
        %v3809 = vadd.f32 %v3807, %v3808
        %v3810 = vrot.slane %v3809, 1
        %v3811 = vadd.f32 %v3809, %v3810
        %v3812 = vmul.f32 %v3742, 0.00390625
        %v3813 = vmul.f32 %v3811, 0.00390625
        %v3814 = vmul.f32 %v3812, %v3812
        %v3815 = vsub.f32 %v3813, %v3814
        %v3816 = vsub.f32 %v3611, %v3812
        %v3817 = vsub.f32 %v3614, %v3812
        %v3818 = vsub.f32 %v3617, %v3812
        %v3819 = vsub.f32 %v3620, %v3812
        %v3820 = vsub.f32 %v3623, %v3812
        %v3821 = vsub.f32 %v3626, %v3812
        %v3822 = vsub.f32 %v3629, %v3812
        %v3823 = vsub.f32 %v3632, %v3812
        %v3824 = vsub.f32 %v3635, %v3812
        %v3825 = vsub.f32 %v3638, %v3812
        %v3826 = vsub.f32 %v3641, %v3812
        %v3827 = vsub.f32 %v3644, %v3812
        %v3828 = vsub.f32 %v3647, %v3812
        %v3829 = vsub.f32 %v3650, %v3812
        %v3830 = vsub.f32 %v3653, %v3812
        %v3831 = vsub.f32 %v3656, %v3812
        %v3832 = vsub.f32 %v3659, %v3812
        %v3833 = vsub.f32 %v3662, %v3812
        %v3834 = vsub.f32 %v3665, %v3812
        %v3835 = vsub.f32 %v3668, %v3812
        %v3836 = vsub.f32 %v3671, %v3812
        %v3837 = vsub.f32 %v3674, %v3812
        %v3838 = vsub.f32 %v3677, %v3812
        %v3839 = vsub.f32 %v3680, %v3812
        %v3840 = vsub.f32 %v3683, %v3812
        %v3841 = vsub.f32 %v3686, %v3812
        %v3842 = vsub.f32 %v3689, %v3812
        %v3843 = vsub.f32 %v3692, %v3812
        %v3844 = vsub.f32 %v3695, %v3812
        %v3845 = vsub.f32 %v3698, %v3812
        %v3846 = vsub.f32 %v3701, %v3812
        %v3847 = vsub.f32 %v3704, %v3812
        %v3848 = vadd.f32 %v3815, 1e-05
        %v3849 = vrsqrt.pop %v3848
        %v3850 = vmul.f32 %v3849, %v3848
        %v3851 = vmul.f32 %v3850, %v3849
        %v3852 = vmul.f32 0.5, %v3851
        %v3853 = vsub.f32 1.5, %v3852
        %v3854 = vmul.f32 %v3849, %v3853
        %vm3855 = vweird.f32 %v3848
        %vm3856 = vweird.f32 %v3849
        %vm3857 = vmor %vm3855, %vm3856
        %v3858 = vsel %vm3857, %v3849, %v3854
        %v3859 = vmul.f32 %v3816, %v3858
        %v3860 = vmul.f32 %v3817, %v3858
        %v3861 = vmul.f32 %v3818, %v3858
        %v3862 = vmul.f32 %v3819, %v3858
        %v3863 = vmul.f32 %v3820, %v3858
        %v3864 = vmul.f32 %v3821, %v3858
        %v3865 = vmul.f32 %v3822, %v3858
        %v3866 = vmul.f32 %v3823, %v3858
        %v3867 = vmul.f32 %v3824, %v3858
        %v3868 = vmul.f32 %v3825, %v3858
        %v3869 = vmul.f32 %v3826, %v3858
        %v3870 = vmul.f32 %v3827, %v3858
        %v3871 = vmul.f32 %v3828, %v3858
        %v3872 = vmul.f32 %v3829, %v3858
        %v3873 = vmul.f32 %v3830, %v3858
        %v3874 = vmul.f32 %v3831, %v3858
        %v3875 = vmul.f32 %v3832, %v3858
        %v3876 = vmul.f32 %v3833, %v3858
        %v3877 = vmul.f32 %v3834, %v3858
        %v3878 = vmul.f32 %v3835, %v3858
        %v3879 = vmul.f32 %v3836, %v3858
        %v3880 = vmul.f32 %v3837, %v3858
        %v3881 = vmul.f32 %v3838, %v3858
        %v3882 = vmul.f32 %v3839, %v3858
        %v3883 = vmul.f32 %v3840, %v3858
        %v3884 = vmul.f32 %v3841, %v3858
        %v3885 = vmul.f32 %v3842, %v3858
        %v3886 = vmul.f32 %v3843, %v3858
        %v3887 = vmul.f32 %v3844, %v3858
        %v3888 = vmul.f32 %v3845, %v3858
        %v3889 = vmul.f32 %v3846, %v3858
        %v3890 = vmul.f32 %v3847, %v3858
        %vm3891 = vcmask 1046528
        %v3892 = vrot.slane %v199, 1
        %v3893 = vrot.slane %v200, 1
        %v3894 = vsel %vm3891, %v3892, %v3893
        %v3895 = vrot.slane %v201, 1
        %v3896 = vsel %vm3891, %v3893, %v3895
        %v3897 = vrot.slane %v202, 1
        %v3898 = vrot.slane %v203, 1
        %v3899 = vsel %vm3891, %v3897, %v3898
        %v3900 = vrot.slane %v204, 1
        %v3901 = vsel %vm3891, %v3898, %v3900
        %v3902 = vrot.slane %v205, 1
        %v3903 = vrot.slane %v206, 1
        %v3904 = vsel %vm3891, %v3902, %v3903
        %v3905 = vrot.slane %v207, 1
        %v3906 = vsel %vm3891, %v3903, %v3905
        %v3907 = vrot.slane %v208, 1
        %v3908 = vrot.slane %v209, 1
        %v3909 = vsel %vm3891, %v3907, %v3908
        %v3910 = vrot.slane %v210, 1
        %v3911 = vsel %vm3891, %v3908, %v3910
        %v3912 = vrot.slane %v211, 1
        %v3913 = vrot.slane %v212, 1
        %v3914 = vsel %vm3891, %v3912, %v3913
        %v3915 = vrot.slane %v213, 1
        %v3916 = vsel %vm3891, %v3913, %v3915
        %v3917 = vrot.slane %v214, 1
        %v3918 = vrot.slane %v215, 1
        %v3919 = vsel %vm3891, %v3917, %v3918
        %v3920 = vrot.slane %v216, 1
        %v3921 = vsel %vm3891, %v3918, %v3920
        %v3922 = vrot.slane %v217, 1
        %v3923 = vrot.slane %v218, 1
        %v3924 = vsel %vm3891, %v3922, %v3923
        %v3925 = vrot.slane %v219, 1
        %v3926 = vsel %vm3891, %v3923, %v3925
        %v3927 = vrot.slane %v220, 1
        %v3928 = vrot.slane %v221, 1
        %v3929 = vsel %vm3891, %v3927, %v3928
        %v3930 = vrot.slane %v222, 1
        %v3931 = vsel %vm3891, %v3928, %v3930
        %v3932 = vrot.slane %v223, 1
        %v3933 = vrot.slane %v224, 1
        %v3934 = vsel %vm3891, %v3932, %v3933
        %v3935 = vrot.slane %v225, 1
        %v3936 = vsel %vm3891, %v3933, %v3935
        %v3937 = vrot.slane %v226, 1
        %v3938 = vrot.slane %v227, 1
        %v3939 = vsel %vm3891, %v3937, %v3938
        %v3940 = vrot.slane %v228, 1
        %v3941 = vsel %vm3891, %v3938, %v3940
        %v3942 = vrot.slane %v229, 1
        %v3943 = vrot.slane %v230, 1
        %v3944 = vsel %vm3891, %v3942, %v3943
        %v3945 = vrot.slane %v231, 1
        %v3946 = vsel %vm3891, %v3943, %v3945
        %v3947 = vrot.slane %v232, 1
        %v3948 = vrot.slane %v233, 1
        %v3949 = vsel %vm3891, %v3947, %v3948
        %v3950 = vrot.slane %v234, 1
        %v3951 = vsel %vm3891, %v3948, %v3950
        %v3952 = vrot.slane %v235, 1
        %v3953 = vrot.slane %v236, 1
        %v3954 = vsel %vm3891, %v3952, %v3953
        %v3955 = vrot.slane %v237, 1
        %v3956 = vsel %vm3891, %v3953, %v3955
        %v3957 = vrot.slane %v238, 1
        %v3958 = vrot.slane %v239, 1
        %v3959 = vsel %vm3891, %v3957, %v3958
        %v3960 = vrot.slane %v240, 1
        %v3961 = vsel %vm3891, %v3958, %v3960
        %v3962 = vrot.slane %v241, 1
        %v3963 = vrot.slane %v242, 1
        %v3964 = vsel %vm3891, %v3962, %v3963
        %v3965 = vrot.slane %v243, 1
        %v3966 = vsel %vm3891, %v3963, %v3965
        %v3967 = vrot.slane %v244, 1
        %v3968 = vrot.slane %v245, 1
        %v3969 = vsel %vm3891, %v3967, %v3968
        %v3970 = vrot.slane %v246, 1
        %v3971 = vsel %vm3891, %v3968, %v3970
        %v3972 = vld [vmem:[%s3] sm:$0xf]
        %v3973 = vsel %vm250, %v3894, 0
        %v3975 = vsel %vm250, %v3896, 0
        %v3977 = vsel %vm250, %v3899, 0
        %v3979 = vsel %vm250, %v3901, 0
        %v3981 = vsel %vm250, %v3904, 0
        %v3983 = vsel %vm250, %v3906, 0
        %v3985 = vsel %vm250, %v3909, 0
        %v3987 = vsel %vm250, %v3911, 0
        %v3989 = vsel %vm250, %v3914, 0
        %v3991 = vsel %vm250, %v3916, 0
        %v3993 = vsel %vm250, %v3919, 0
        %v3995 = vsel %vm250, %v3921, 0
        %v3997 = vsel %vm250, %v3924, 0
        %v3999 = vsel %vm250, %v3926, 0
        %v4001 = vsel %vm250, %v3929, 0
        %v4003 = vsel %vm250, %v3931, 0
        %v4005 = vsel %vm250, %v3934, 0
        %v4007 = vsel %vm250, %v3936, 0
        %v4009 = vsel %vm250, %v3939, 0
        %v4011 = vsel %vm250, %v3941, 0
        %v4013 = vsel %vm250, %v3944, 0
        %v4015 = vsel %vm250, %v3946, 0
        %v4017 = vsel %vm250, %v3949, 0
        %v4019 = vsel %vm250, %v3951, 0
        %v4021 = vsel %vm250, %v3954, 0
        %v4023 = vsel %vm250, %v3956, 0
        %v4025 = vsel %vm250, %v3959, 0
        %v4027 = vsel %vm250, %v3961, 0
        %v4029 = vsel %vm250, %v3964, 0
        %v4031 = vsel %vm250, %v3966, 0
        %v4033 = vsel %vm250, %v3969, 0
        %v4035 = vsel %vm250, %v3971, 0
        %v4038 = vsel %vm1899, %v3972, 0
        %4040 = vmatpush.msra.mxu0 0.0
        %4041 = vmatpush.msra.mxu0 0.0
        %4042 = vmatpush.msra.mxu0 0.0
        %4043 = vmatpush.msra.mxu0 0.0
        %4044 = vmatpush.msra.mxu0 0.0
        %4045 = vmatpush.msra.mxu0 0.0
        %4046 = vmatpush.msra.mxu0 0.0
        %4047 = vmatpush.msra.mxu0 0.0
        %4048 = vmatpush.msra.mxu0 0.0
        %4049 = vmatpush.msra.mxu0 0.0
        %4050 = vmatpush.msra.mxu0 0.0
        %4051 = vmatpush.msra.mxu0 0.0
        %4052 = vmatpush.msra.mxu0 0.0
        %4053 = vmatpush.msra.mxu0 0.0
        %4054 = vmatpush.msra.mxu0 0.0
        %4055 = vmatpush.msra.mxu0 %v4038
        %4056 = vmatmul.f32.gmra.mxu0 %v3973
        %v4057 = vpop.f32.mrf.mxu0
        %v4058 = vadd.f32 0.0, %v4057
        %4059 = vmatmul.f32.gmra.mxu0 %v3975
        %v4060 = vpop.f32.mrf.mxu0
        %v4061 = vadd.f32 0.0, %v4060
        %4062 = vmatmul.f32.gmra.mxu0 %v3977
        %v4063 = vpop.f32.mrf.mxu0
        %v4064 = vadd.f32 0.0, %v4063
        %4065 = vmatmul.f32.gmra.mxu0 %v3979
        %v4066 = vpop.f32.mrf.mxu0
        %v4067 = vadd.f32 0.0, %v4066
        %4068 = vmatmul.f32.gmra.mxu0 %v3981
        %v4069 = vpop.f32.mrf.mxu0
        %v4070 = vadd.f32 0.0, %v4069
        %4071 = vmatmul.f32.gmra.mxu0 %v3983
        %v4072 = vpop.f32.mrf.mxu0
        %v4073 = vadd.f32 0.0, %v4072
        %4074 = vmatmul.f32.gmra.mxu0 %v3985
        %v4075 = vpop.f32.mrf.mxu0
        %v4076 = vadd.f32 0.0, %v4075
        %4077 = vmatmul.f32.gmra.mxu0 %v3987
        %v4078 = vpop.f32.mrf.mxu0
        %v4079 = vadd.f32 0.0, %v4078
        %4080 = vmatmul.f32.gmra.mxu0 %v3989
        %v4081 = vpop.f32.mrf.mxu0
        %v4082 = vadd.f32 0.0, %v4081
        %4083 = vmatmul.f32.gmra.mxu0 %v3991
        %v4084 = vpop.f32.mrf.mxu0
        %v4085 = vadd.f32 0.0, %v4084
        %4086 = vmatmul.f32.gmra.mxu0 %v3993
        %v4087 = vpop.f32.mrf.mxu0
        %v4088 = vadd.f32 0.0, %v4087
        %4089 = vmatmul.f32.gmra.mxu0 %v3995
        %v4090 = vpop.f32.mrf.mxu0
        %v4091 = vadd.f32 0.0, %v4090
        %4092 = vmatmul.f32.gmra.mxu0 %v3997
        %v4093 = vpop.f32.mrf.mxu0
        %v4094 = vadd.f32 0.0, %v4093
        %4095 = vmatmul.f32.gmra.mxu0 %v3999
        %v4096 = vpop.f32.mrf.mxu0
        %v4097 = vadd.f32 0.0, %v4096
        %4098 = vmatmul.f32.gmra.mxu0 %v4001
        %v4099 = vpop.f32.mrf.mxu0
        %v4100 = vadd.f32 0.0, %v4099
        %4101 = vmatmul.f32.gmra.mxu0 %v4003
        %v4102 = vpop.f32.mrf.mxu0
        %v4103 = vadd.f32 0.0, %v4102
        %4104 = vmatmul.f32.gmra.mxu0 %v4005
        %v4105 = vpop.f32.mrf.mxu0
        %v4106 = vadd.f32 0.0, %v4105
        %4107 = vmatmul.f32.gmra.mxu0 %v4007
        %v4108 = vpop.f32.mrf.mxu0
        %v4109 = vadd.f32 0.0, %v4108
        %4110 = vmatmul.f32.gmra.mxu0 %v4009
        %v4111 = vpop.f32.mrf.mxu0
        %v4112 = vadd.f32 0.0, %v4111
        %4113 = vmatmul.f32.gmra.mxu0 %v4011
        %v4114 = vpop.f32.mrf.mxu0
        %v4115 = vadd.f32 0.0, %v4114
        %4116 = vmatmul.f32.gmra.mxu0 %v4013
        %v4117 = vpop.f32.mrf.mxu0
        %v4118 = vadd.f32 0.0, %v4117
        %4119 = vmatmul.f32.gmra.mxu0 %v4015
        %v4120 = vpop.f32.mrf.mxu0
        %v4121 = vadd.f32 0.0, %v4120
        %4122 = vmatmul.f32.gmra.mxu0 %v4017
        %v4123 = vpop.f32.mrf.mxu0
        %v4124 = vadd.f32 0.0, %v4123
        %4125 = vmatmul.f32.gmra.mxu0 %v4019
        %v4126 = vpop.f32.mrf.mxu0
        %v4127 = vadd.f32 0.0, %v4126
        %4128 = vmatmul.f32.gmra.mxu0 %v4021
        %v4129 = vpop.f32.mrf.mxu0
        %v4130 = vadd.f32 0.0, %v4129
        %4131 = vmatmul.f32.gmra.mxu0 %v4023
        %v4132 = vpop.f32.mrf.mxu0
        %v4133 = vadd.f32 0.0, %v4132
        %4134 = vmatmul.f32.gmra.mxu0 %v4025
        %v4135 = vpop.f32.mrf.mxu0
        %v4136 = vadd.f32 0.0, %v4135
        %4137 = vmatmul.f32.gmra.mxu0 %v4027
        %v4138 = vpop.f32.mrf.mxu0
        %v4139 = vadd.f32 0.0, %v4138
        %4140 = vmatmul.f32.gmra.mxu0 %v4029
        %v4141 = vpop.f32.mrf.mxu0
        %v4142 = vadd.f32 0.0, %v4141
        %4143 = vmatmul.f32.gmra.mxu0 %v4031
        %v4144 = vpop.f32.mrf.mxu0
        %v4145 = vadd.f32 0.0, %v4144
        %4146 = vmatmul.f32.gmra.mxu0 %v4033
        %v4147 = vpop.f32.mrf.mxu0
        %v4148 = vadd.f32 0.0, %v4147
        %4149 = vmatmul.f32.gmra.mxu0 %v4035
        %v4150 = vpop.f32.mrf.mxu0
        %v4151 = vadd.f32 0.0, %v4150
        %4152 = vdwg.mxu0
        %v4153 = vadd.f32 %v4058, %v4061
        %v4154 = vadd.f32 %v4153, %v4064
        %v4155 = vadd.f32 %v4154, %v4067
        %v4156 = vadd.f32 %v4155, %v4070
        %v4157 = vadd.f32 %v4156, %v4073
        %v4158 = vadd.f32 %v4157, %v4076
        %v4159 = vadd.f32 %v4158, %v4079
        %v4160 = vadd.f32 %v4159, %v4082
        %v4161 = vadd.f32 %v4160, %v4085
        %v4162 = vadd.f32 %v4161, %v4088
        %v4163 = vadd.f32 %v4162, %v4091
        %v4164 = vadd.f32 %v4163, %v4094
        %v4165 = vadd.f32 %v4164, %v4097
        %v4166 = vadd.f32 %v4165, %v4100
        %v4167 = vadd.f32 %v4166, %v4103
        %v4168 = vadd.f32 %v4167, %v4106
        %v4169 = vadd.f32 %v4168, %v4109
        %v4170 = vadd.f32 %v4169, %v4112
        %v4171 = vadd.f32 %v4170, %v4115
        %v4172 = vadd.f32 %v4171, %v4118
        %v4173 = vadd.f32 %v4172, %v4121
        %v4174 = vadd.f32 %v4173, %v4124
        %v4175 = vadd.f32 %v4174, %v4127
        %v4176 = vadd.f32 %v4175, %v4130
        %v4177 = vadd.f32 %v4176, %v4133
        %v4178 = vadd.f32 %v4177, %v4136
        %v4179 = vadd.f32 %v4178, %v4139
        %v4180 = vadd.f32 %v4179, %v4142
        %v4181 = vadd.f32 %v4180, %v4145
        %v4182 = vadd.f32 %v4181, %v4148
        %v4183 = vadd.f32 %v4182, %v4151
        %v4184 = vrot.slane %v4183, 4
        %v4185 = vadd.f32 %v4183, %v4184
        %v4186 = vrot.slane %v4185, 2
        %v4187 = vadd.f32 %v4185, %v4186
        %v4188 = vrot.slane %v4187, 1
        %v4189 = vadd.f32 %v4187, %v4188
        %v4190 = vmul.f32 %v4058, %v4058
        %v4191 = vmul.f32 %v4061, %v4061
        %v4192 = vmul.f32 %v4064, %v4064
        %v4193 = vmul.f32 %v4067, %v4067
        %v4194 = vmul.f32 %v4070, %v4070
        %v4195 = vmul.f32 %v4073, %v4073
        %v4196 = vmul.f32 %v4076, %v4076
        %v4197 = vmul.f32 %v4079, %v4079
        %v4198 = vmul.f32 %v4082, %v4082
        %v4199 = vmul.f32 %v4085, %v4085
        %v4200 = vmul.f32 %v4088, %v4088
        %v4201 = vmul.f32 %v4091, %v4091
        %v4202 = vmul.f32 %v4094, %v4094
        %v4203 = vmul.f32 %v4097, %v4097
        %v4204 = vmul.f32 %v4100, %v4100
        %v4205 = vmul.f32 %v4103, %v4103
        %v4206 = vmul.f32 %v4106, %v4106
        %v4207 = vmul.f32 %v4109, %v4109
        %v4208 = vmul.f32 %v4112, %v4112
        %v4209 = vmul.f32 %v4115, %v4115
        %v4210 = vmul.f32 %v4118, %v4118
        %v4211 = vmul.f32 %v4121, %v4121
        %v4212 = vmul.f32 %v4124, %v4124
        %v4213 = vmul.f32 %v4127, %v4127
        %v4214 = vmul.f32 %v4130, %v4130
        %v4215 = vmul.f32 %v4133, %v4133
        %v4216 = vmul.f32 %v4136, %v4136
        %v4217 = vmul.f32 %v4139, %v4139
        %v4218 = vmul.f32 %v4142, %v4142
        %v4219 = vmul.f32 %v4145, %v4145
        %v4220 = vmul.f32 %v4148, %v4148
        %v4221 = vmul.f32 %v4151, %v4151
        %v4222 = vadd.f32 %v4190, %v4191
        %v4223 = vadd.f32 %v4222, %v4192
        %v4224 = vadd.f32 %v4223, %v4193
        %v4225 = vadd.f32 %v4224, %v4194
        %v4226 = vadd.f32 %v4225, %v4195
        %v4227 = vadd.f32 %v4226, %v4196
        %v4228 = vadd.f32 %v4227, %v4197
        %v4229 = vadd.f32 %v4228, %v4198
        %v4230 = vadd.f32 %v4229, %v4199
        %v4231 = vadd.f32 %v4230, %v4200
        %v4232 = vadd.f32 %v4231, %v4201
        %v4233 = vadd.f32 %v4232, %v4202
        %v4234 = vadd.f32 %v4233, %v4203
        %v4235 = vadd.f32 %v4234, %v4204
        %v4236 = vadd.f32 %v4235, %v4205
        %v4237 = vadd.f32 %v4236, %v4206
        %v4238 = vadd.f32 %v4237, %v4207
        %v4239 = vadd.f32 %v4238, %v4208
        %v4240 = vadd.f32 %v4239, %v4209
        %v4241 = vadd.f32 %v4240, %v4210
        %v4242 = vadd.f32 %v4241, %v4211
        %v4243 = vadd.f32 %v4242, %v4212
        %v4244 = vadd.f32 %v4243, %v4213
        %v4245 = vadd.f32 %v4244, %v4214
        %v4246 = vadd.f32 %v4245, %v4215
        %v4247 = vadd.f32 %v4246, %v4216
        %v4248 = vadd.f32 %v4247, %v4217
        %v4249 = vadd.f32 %v4248, %v4218
        %v4250 = vadd.f32 %v4249, %v4219
        %v4251 = vadd.f32 %v4250, %v4220
        %v4252 = vadd.f32 %v4251, %v4221
        %v4253 = vrot.slane %v4252, 4
        %v4254 = vadd.f32 %v4252, %v4253
        %v4255 = vrot.slane %v4254, 2
        %v4256 = vadd.f32 %v4254, %v4255
        %v4257 = vrot.slane %v4256, 1
        %v4258 = vadd.f32 %v4256, %v4257
        %v4259 = vmul.f32 %v4189, 0.00390625
        %v4260 = vmul.f32 %v4258, 0.00390625
        %v4261 = vmul.f32 %v4259, %v4259
        %v4262 = vsub.f32 %v4260, %v4261
        %v4263 = vsub.f32 %v4058, %v4259
        %v4264 = vsub.f32 %v4061, %v4259
        %v4265 = vsub.f32 %v4064, %v4259
        %v4266 = vsub.f32 %v4067, %v4259
        %v4267 = vsub.f32 %v4070, %v4259
        %v4268 = vsub.f32 %v4073, %v4259
        %v4269 = vsub.f32 %v4076, %v4259
        %v4270 = vsub.f32 %v4079, %v4259
        %v4271 = vsub.f32 %v4082, %v4259
        %v4272 = vsub.f32 %v4085, %v4259
        %v4273 = vsub.f32 %v4088, %v4259
        %v4274 = vsub.f32 %v4091, %v4259
        %v4275 = vsub.f32 %v4094, %v4259
        %v4276 = vsub.f32 %v4097, %v4259
        %v4277 = vsub.f32 %v4100, %v4259
        %v4278 = vsub.f32 %v4103, %v4259
        %v4279 = vsub.f32 %v4106, %v4259
        %v4280 = vsub.f32 %v4109, %v4259
        %v4281 = vsub.f32 %v4112, %v4259
        %v4282 = vsub.f32 %v4115, %v4259
        %v4283 = vsub.f32 %v4118, %v4259
        %v4284 = vsub.f32 %v4121, %v4259
        %v4285 = vsub.f32 %v4124, %v4259
        %v4286 = vsub.f32 %v4127, %v4259
        %v4287 = vsub.f32 %v4130, %v4259
        %v4288 = vsub.f32 %v4133, %v4259
        %v4289 = vsub.f32 %v4136, %v4259
        %v4290 = vsub.f32 %v4139, %v4259
        %v4291 = vsub.f32 %v4142, %v4259
        %v4292 = vsub.f32 %v4145, %v4259
        %v4293 = vsub.f32 %v4148, %v4259
        %v4294 = vsub.f32 %v4151, %v4259
        %v4295 = vadd.f32 %v4262, 1e-05
        %v4296 = vrsqrt.pop %v4295
        %v4297 = vmul.f32 %v4296, %v4295
        %v4298 = vmul.f32 %v4297, %v4296
        %v4299 = vmul.f32 0.5, %v4298
        %v4300 = vsub.f32 1.5, %v4299
        %v4301 = vmul.f32 %v4296, %v4300
        %vm4302 = vweird.f32 %v4295
        %vm4303 = vweird.f32 %v4296
        %vm4304 = vmor %vm4302, %vm4303
        %v4305 = vsel %vm4304, %v4296, %v4301
        %v4306 = vmul.f32 %v4263, %v4305
        %v4307 = vmul.f32 %v4264, %v4305
        %v4308 = vmul.f32 %v4265, %v4305
        %v4309 = vmul.f32 %v4266, %v4305
        %v4310 = vmul.f32 %v4267, %v4305
        %v4311 = vmul.f32 %v4268, %v4305
        %v4312 = vmul.f32 %v4269, %v4305
        %v4313 = vmul.f32 %v4270, %v4305
        %v4314 = vmul.f32 %v4271, %v4305
        %v4315 = vmul.f32 %v4272, %v4305
        %v4316 = vmul.f32 %v4273, %v4305
        %v4317 = vmul.f32 %v4274, %v4305
        %v4318 = vmul.f32 %v4275, %v4305
        %v4319 = vmul.f32 %v4276, %v4305
        %v4320 = vmul.f32 %v4277, %v4305
        %v4321 = vmul.f32 %v4278, %v4305
        %v4322 = vmul.f32 %v4279, %v4305
        %v4323 = vmul.f32 %v4280, %v4305
        %v4324 = vmul.f32 %v4281, %v4305
        %v4325 = vmul.f32 %v4282, %v4305
        %v4326 = vmul.f32 %v4283, %v4305
        %v4327 = vmul.f32 %v4284, %v4305
        %v4328 = vmul.f32 %v4285, %v4305
        %v4329 = vmul.f32 %v4286, %v4305
        %v4330 = vmul.f32 %v4287, %v4305
        %v4331 = vmul.f32 %v4288, %v4305
        %v4332 = vmul.f32 %v4289, %v4305
        %v4333 = vmul.f32 %v4290, %v4305
        %v4334 = vmul.f32 %v4291, %v4305
        %v4335 = vmul.f32 %v4292, %v4305
        %v4336 = vmul.f32 %v4293, %v4305
        %v4337 = vmul.f32 %v4294, %v4305
        %v4338 = vadd.f32 %v3859, %v4306
        %v4339 = vadd.f32 %v3860, %v4307
        %v4340 = vadd.f32 %v3861, %v4308
        %v4341 = vadd.f32 %v3862, %v4309
        %v4342 = vadd.f32 %v3863, %v4310
        %v4343 = vadd.f32 %v3864, %v4311
        %v4344 = vadd.f32 %v3865, %v4312
        %v4345 = vadd.f32 %v3866, %v4313
        %v4346 = vadd.f32 %v3867, %v4314
        %v4347 = vadd.f32 %v3868, %v4315
        %v4348 = vadd.f32 %v3869, %v4316
        %v4349 = vadd.f32 %v3870, %v4317
        %v4350 = vadd.f32 %v3871, %v4318
        %v4351 = vadd.f32 %v3872, %v4319
        %v4352 = vadd.f32 %v3873, %v4320
        %v4353 = vadd.f32 %v3874, %v4321
        %v4354 = vadd.f32 %v3875, %v4322
        %v4355 = vadd.f32 %v3876, %v4323
        %v4356 = vadd.f32 %v3877, %v4324
        %v4357 = vadd.f32 %v3878, %v4325
        %v4358 = vadd.f32 %v3879, %v4326
        %v4359 = vadd.f32 %v3880, %v4327
        %v4360 = vadd.f32 %v3881, %v4328
        %v4361 = vadd.f32 %v3882, %v4329
        %v4362 = vadd.f32 %v3883, %v4330
        %v4363 = vadd.f32 %v3884, %v4331
        %v4364 = vadd.f32 %v3885, %v4332
        %v4365 = vadd.f32 %v3886, %v4333
        %v4366 = vadd.f32 %v3887, %v4334
        %v4367 = vadd.f32 %v3888, %v4335
        %v4368 = vadd.f32 %v3889, %v4336
        %v4369 = vadd.f32 %v3890, %v4337
        %vm4370 = vcmp.gt.f32.partialorder %v4338, 0.0
        %vm4371 = vcmp.gt.f32.partialorder %v4339, 0.0
        %vm4372 = vcmp.gt.f32.partialorder %v4340, 0.0
        %vm4373 = vcmp.gt.f32.partialorder %v4341, 0.0
        %vm4374 = vcmp.gt.f32.partialorder %v4342, 0.0
        %vm4375 = vcmp.gt.f32.partialorder %v4343, 0.0
        %vm4376 = vcmp.gt.f32.partialorder %v4344, 0.0
        %vm4377 = vcmp.gt.f32.partialorder %v4345, 0.0
        %vm4378 = vcmp.gt.f32.partialorder %v4346, 0.0
        %vm4379 = vcmp.gt.f32.partialorder %v4347, 0.0
        %vm4380 = vcmp.gt.f32.partialorder %v4348, 0.0
        %vm4381 = vcmp.gt.f32.partialorder %v4349, 0.0
        %vm4382 = vcmp.gt.f32.partialorder %v4350, 0.0
        %vm4383 = vcmp.gt.f32.partialorder %v4351, 0.0
        %vm4384 = vcmp.gt.f32.partialorder %v4352, 0.0
        %vm4385 = vcmp.gt.f32.partialorder %v4353, 0.0
        %vm4386 = vcmp.gt.f32.partialorder %v4354, 0.0
        %vm4387 = vcmp.gt.f32.partialorder %v4355, 0.0
        %vm4388 = vcmp.gt.f32.partialorder %v4356, 0.0
        %vm4389 = vcmp.gt.f32.partialorder %v4357, 0.0
        %vm4390 = vcmp.gt.f32.partialorder %v4358, 0.0
        %vm4391 = vcmp.gt.f32.partialorder %v4359, 0.0
        %vm4392 = vcmp.gt.f32.partialorder %v4360, 0.0
        %vm4393 = vcmp.gt.f32.partialorder %v4361, 0.0
        %vm4394 = vcmp.gt.f32.partialorder %v4362, 0.0
        %vm4395 = vcmp.gt.f32.partialorder %v4363, 0.0
        %vm4396 = vcmp.gt.f32.partialorder %v4364, 0.0
        %vm4397 = vcmp.gt.f32.partialorder %v4365, 0.0
        %vm4398 = vcmp.gt.f32.partialorder %v4366, 0.0
        %vm4399 = vcmp.gt.f32.partialorder %v4367, 0.0
        %vm4400 = vcmp.gt.f32.partialorder %v4368, 0.0
        %vm4401 = vcmp.gt.f32.partialorder %v4369, 0.0
        %v4402 = vmul.f32 %v4338, 0.01
        %v4403 = vmul.f32 %v4339, 0.01
        %v4404 = vmul.f32 %v4340, 0.01
        %v4405 = vmul.f32 %v4341, 0.01
        %v4406 = vmul.f32 %v4342, 0.01
        %v4407 = vmul.f32 %v4343, 0.01
        %v4408 = vmul.f32 %v4344, 0.01
        %v4409 = vmul.f32 %v4345, 0.01
        %v4410 = vmul.f32 %v4346, 0.01
        %v4411 = vmul.f32 %v4347, 0.01
        %v4412 = vmul.f32 %v4348, 0.01
        %v4413 = vmul.f32 %v4349, 0.01
        %v4414 = vmul.f32 %v4350, 0.01
        %v4415 = vmul.f32 %v4351, 0.01
        %v4416 = vmul.f32 %v4352, 0.01
        %v4417 = vmul.f32 %v4353, 0.01
        %v4418 = vmul.f32 %v4354, 0.01
        %v4419 = vmul.f32 %v4355, 0.01
        %v4420 = vmul.f32 %v4356, 0.01
        %v4421 = vmul.f32 %v4357, 0.01
        %v4422 = vmul.f32 %v4358, 0.01
        %v4423 = vmul.f32 %v4359, 0.01
        %v4424 = vmul.f32 %v4360, 0.01
        %v4425 = vmul.f32 %v4361, 0.01
        %v4426 = vmul.f32 %v4362, 0.01
        %v4427 = vmul.f32 %v4363, 0.01
        %v4428 = vmul.f32 %v4364, 0.01
        %v4429 = vmul.f32 %v4365, 0.01
        %v4430 = vmul.f32 %v4366, 0.01
        %v4431 = vmul.f32 %v4367, 0.01
        %v4432 = vmul.f32 %v4368, 0.01
        %v4433 = vmul.f32 %v4369, 0.01
        %v4434 = vsel %vm4370, %v4338, %v4402
        %v4435 = vsel %vm4371, %v4339, %v4403
        %v4436 = vsel %vm4372, %v4340, %v4404
        %v4437 = vsel %vm4373, %v4341, %v4405
        %v4438 = vsel %vm4374, %v4342, %v4406
        %v4439 = vsel %vm4375, %v4343, %v4407
        %v4440 = vsel %vm4376, %v4344, %v4408
        %v4441 = vsel %vm4377, %v4345, %v4409
        %v4442 = vsel %vm4378, %v4346, %v4410
        %v4443 = vsel %vm4379, %v4347, %v4411
        %v4444 = vsel %vm4380, %v4348, %v4412
        %v4445 = vsel %vm4381, %v4349, %v4413
        %v4446 = vsel %vm4382, %v4350, %v4414
        %v4447 = vsel %vm4383, %v4351, %v4415
        %v4448 = vsel %vm4384, %v4352, %v4416
        %v4449 = vsel %vm4385, %v4353, %v4417
        %v4450 = vsel %vm4386, %v4354, %v4418
        %v4451 = vsel %vm4387, %v4355, %v4419
        %v4452 = vsel %vm4388, %v4356, %v4420
        %v4453 = vsel %vm4389, %v4357, %v4421
        %v4454 = vsel %vm4390, %v4358, %v4422
        %v4455 = vsel %vm4391, %v4359, %v4423
        %v4456 = vsel %vm4392, %v4360, %v4424
        %v4457 = vsel %vm4393, %v4361, %v4425
        %v4458 = vsel %vm4394, %v4362, %v4426
        %v4459 = vsel %vm4395, %v4363, %v4427
        %v4460 = vsel %vm4396, %v4364, %v4428
        %v4461 = vsel %vm4397, %v4365, %v4429
        %v4462 = vsel %vm4398, %v4366, %v4430
        %v4463 = vsel %vm4399, %v4367, %v4431
        %v4464 = vsel %vm4400, %v4368, %v4432
        %v4465 = vsel %vm4401, %v4369, %v4433
        %4466 = vxpose.xlu0.b32.start [1/16] %v4434, 128
        %4467 = vxpose.xlu0.b32.cont [2/16] %v4435, 128
        %4468 = vxpose.xlu0.b32.cont [3/16] %v4436, 128
        %4469 = vxpose.xlu0.b32.cont [4/16] %v4437, 128
        %4470 = vxpose.xlu0.b32.cont [5/16] %v4438, 128
        %4471 = vxpose.xlu0.b32.cont [6/16] %v4439, 128
        %4472 = vxpose.xlu0.b32.cont [7/16] %v4440, 128
        %4473 = vxpose.xlu0.b32.cont [8/16] %v4441, 128
        %4474 = vxpose.xlu0.b32.cont [9/16] %v4442, 128
        %4475 = vxpose.xlu0.b32.cont [10/16] %v4443, 128
        %4476 = vxpose.xlu0.b32.cont [11/16] %v4444, 128
        %4477 = vxpose.xlu0.b32.cont [12/16] %v4445, 128
        %4478 = vxpose.xlu0.b32.cont [13/16] %v4446, 128
        %4479 = vxpose.xlu0.b32.cont [14/16] %v4447, 128
        %4480 = vxpose.xlu0.b32.cont [15/16] %v4448, 128
        %4481 = vxpose.xlu0.b32.end [16/16] %v4449, 128
        %v4482 = vpop.trf.xlu0
        %v4483 = vpop.trf.xlu0
        %v4484 = vpop.trf.xlu0
        %v4485 = vpop.trf.xlu0
        %v4486 = vpop.trf.xlu0
        %v4487 = vpop.trf.xlu0
        %v4488 = vpop.trf.xlu0
        %v4489 = vpop.trf.xlu0
        %v4490 = vpop.trf.xlu0
        %v4491 = vpop.trf.xlu0
        %v4492 = vpop.trf.xlu0
        %v4493 = vpop.trf.xlu0
        %v4494 = vpop.trf.xlu0
        %v4495 = vpop.trf.xlu0
        %v4496 = vpop.trf.xlu0
        %v4497 = vpop.trf.xlu0
        %4498 = vxpose.xlu0.b32.start [1/16] %v4450, 128
        %4499 = vxpose.xlu0.b32.cont [2/16] %v4451, 128
        %4500 = vxpose.xlu0.b32.cont [3/16] %v4452, 128
        %4501 = vxpose.xlu0.b32.cont [4/16] %v4453, 128
        %4502 = vxpose.xlu0.b32.cont [5/16] %v4454, 128
        %4503 = vxpose.xlu0.b32.cont [6/16] %v4455, 128
        %4504 = vxpose.xlu0.b32.cont [7/16] %v4456, 128
        %4505 = vxpose.xlu0.b32.cont [8/16] %v4457, 128
        %4506 = vxpose.xlu0.b32.cont [9/16] %v4458, 128
        %4507 = vxpose.xlu0.b32.cont [10/16] %v4459, 128
        %4508 = vxpose.xlu0.b32.cont [11/16] %v4460, 128
        %4509 = vxpose.xlu0.b32.cont [12/16] %v4461, 128
        %4510 = vxpose.xlu0.b32.cont [13/16] %v4462, 128
        %4511 = vxpose.xlu0.b32.cont [14/16] %v4463, 128
        %4512 = vxpose.xlu0.b32.cont [15/16] %v4464, 128
        %4513 = vxpose.xlu0.b32.end [16/16] %v4465, 128
        %v4514 = vpop.trf.xlu0
        %v4515 = vpop.trf.xlu0
        %v4516 = vpop.trf.xlu0
        %v4517 = vpop.trf.xlu0
        %v4518 = vpop.trf.xlu0
        %v4519 = vpop.trf.xlu0
        %v4520 = vpop.trf.xlu0
        %v4521 = vpop.trf.xlu0
        %v4522 = vpop.trf.xlu0
        %v4523 = vpop.trf.xlu0
        %v4524 = vpop.trf.xlu0
        %v4525 = vpop.trf.xlu0
        %v4526 = vpop.trf.xlu0
        %v4527 = vpop.trf.xlu0
        %v4528 = vpop.trf.xlu0
        %v4529 = vpop.trf.xlu0
        %4530 = vst [vmem:[%s190] sm:$0xff] %v4482
        %4531 = vst [vmem:[%s190 + $0x8] sm:$0xff] %v4514
        %s4532 = sand.u32 %s115, 1
        %s4533 = scalar_lea.sflag [#allocation5], %s4532
        %s4534 = sand.u32 %s115, 1
        %s4535 = smul.addr %s4534, 16
        %s4536 = scalar_lea.vmem [#allocation4], %s4535
        // Predicated region
        $region37: #{tpu_custom_call.1} parent=35 // pred_check
          %p4537 = pneg %p125
        $region38: #{tpu_custom_call.1} parent=35 // pred_check_branch
          %4539 = sbr.rel (%p4537) target = $region40
        $region39: #{tpu_custom_call.1} parent=35 // pred_region
          %4541 = vsyncadd %s4533, 0
          %s4542 = smul.addr %s18, 2
          %s4543 = smul.addr %s4542, 8
          %s4544 = scalar_lea.hbm %s4, %s4543
          %s4546 = sshll.u32 %s4536, 4
          %s4547 = int_to_ptr.vmem [resolvable:$true] %s4546
          %s4548 = sshll.u32 %s4544, 4
          %s4549 = int_to_ptr.hbm [resolvable:$true] %s4548
          %4551 = dma.vmem_to_hbm [thread:$0]  %s4547, 256, %s4549, %s4533
        $region40: #{tpu_custom_call.1} parent=35 // pred_fallthru
          _
      $region36: #{tpu_custom_call.1} parent=5 // pred_fallthru
        _
      %p4552 = scmp.le.s32.totalorder 2, %s13
      // Predicated region
      $region41: #{tpu_custom_call.1} parent=5 // pred_check
        %p4553 = pneg %p4552
      $region42: #{tpu_custom_call.1} parent=5 // pred_check_branch
        %4555 = sbr.rel (%p4553) target = $region44
      $region43: #{tpu_custom_call.1} parent=5 // pred_region
        %s4556 = ssub.s32 %s13, 2
        // Predicated region
        $region45: #{tpu_custom_call.1} parent=43 // pred_check
          %p4557 = pneg %p131
        $region46: #{tpu_custom_call.1} parent=43 // pred_check_branch
          %4559 = sbr.rel (%p4557) target = $region48
        $region47: #{tpu_custom_call.1} parent=43 // pred_region
          %s4560 = sand.u32 %s116, 1
          %s4561 = scalar_lea.sflag [#allocation5], %s4560
          %s4562 = sand.u32 %s116, 1
          %s4563 = smul.addr %s4562, 16
          %s4564 = scalar_lea.vmem [#allocation4], %s4563
          %4566 = dma.done %s4561, 256
        $region48: #{tpu_custom_call.1} parent=43 // pred_fallthru
          _
      $region44: #{tpu_custom_call.1} parent=5 // pred_fallthru
        _
    $region6: #{tpu_custom_call.1} parent=1 // loop_footer
      %s17 = sadd.s32 1, %s13
    $region7: #{tpu_custom_call.1} parent=1 // loop_footer_branch
      %12 = sbr.rel target = $region3
    $region8: #{tpu_custom_call.1} parent=1 // loop_exit
      _
    %4567 = vsyncpa [#allocation5], 1
    %s4568 = scalar_lea.sflag [#allocation5], 1
    %4569 = vsyncpa %s4568, 1

</llo_original>
